<compile_context>
chip_gen: v6e
topology: v6e:2x2x1
jax: 0.10.0
libtpu: 0.0.40
codegen_flags: <defaults>
</compile_context>

<pallas_src>
import math
import functools

import jax
import jax.numpy as jnp
from jax import lax
from jax.experimental import pallas as pl
from jax.experimental.pallas import tpu as pltpu

_LANE = 128
_COMPUTE_DTYPE = jnp.bfloat16


def _round_up(x, m):
    return ((x + m - 1) // m) * m


def _mhsa_kernel(x_ref, wq_ref, wk_ref, wv_ref, wu_ref, bu_ref, o_ref,
                 k_scr, v_scr, *, heads, head_stride, q_block):
    qi = pl.program_id(1)

    # --- K / V: computed once per batch element, reused by every query tile. ---
    @pl.when(qi == 0)
    def _():
        x_all = x_ref[0]                                    # (S, Ep) bf16
        k_scr[...] = jnp.dot(x_all, wk_ref[...],
                             preferred_element_type=jnp.float32).astype(k_scr.dtype)
        v_scr[...] = jnp.dot(x_all, wv_ref[...],
                             preferred_element_type=jnp.float32).astype(v_scr.dtype)

    # --- Q: slice the query tile out of the resident full-sequence block. ---
    q_start = pl.multiple_of(qi * q_block, q_block)
    xq = x_ref[0, pl.ds(q_start, q_block), :]               # (Sq, Ep) bf16
    # 1/sqrt(head_dim) is folded into wq in the wrapper.
    q = jnp.dot(xq, wq_ref[...], preferred_element_type=jnp.float32)
    q = q.astype(_COMPUTE_DTYPE)                            # cast once; slice bf16 per head

    head_outs = []
    for h in range(heads):                                  # static, unrolled
        lo = h * head_stride                                # 128-lane-aligned offset
        qh = q[:, lo:lo + head_stride]                      # (Sq, hs) bf16
        kh = k_scr[:, lo:lo + head_stride]                  # (S,  hs) bf16
        vh = v_scr[:, lo:lo + head_stride]                  # (S,  hs) bf16

        # scores[s, t] = q_h[s, :] . k_h[t, :]   (zero-padded lanes contribute 0)
        s = lax.dot_general(qh, kh, dimension_numbers=(((1,), (1,)), ((), ())),
                            preferred_element_type=jnp.float32)    # (Sq, S) f32
        # TODO(synk): causal mask (module mask=True) not implemented; this kernel
        # computes the module's default mask=False path.
        m = jnp.max(s, axis=-1, keepdims=True)
        e = jnp.exp(s - m)                                  # f32 (v5e has no bf16 VPU/EUP)
        # TODO(synk): on v6e/v7x an EUP-bound long-S profile could use bf16 exp here.
        inv = pl.reciprocal(jnp.sum(e, axis=-1, keepdims=True), approx=True)   # EUP
        # Normalize after attn @ v so the multiply touches (Sq, hs), not (Sq, S).
        ho = jnp.dot(e.astype(_COMPUTE_DTYPE), vh,
                     preferred_element_type=jnp.float32) * inv      # (Sq, hs) f32
        head_outs.append(ho)

    # Every slab is head_stride (a multiple of 128) lanes wide -> lane-aligned concat.
    merged = jnp.concatenate(head_outs, axis=-1)             # (Sq, H*hs) f32
    y = jnp.dot(merged.astype(_COMPUTE_DTYPE), wu_ref[...],
                preferred_element_type=jnp.float32) + bu_ref[...]   # (Sq, Ep) f32
    o_ref[0] = y.astype(o_ref.dtype)


def _pick_q_block(seq_len):
    # Tiles >= 256 already reach ~85% pipeline efficiency; cap at 256 so per-step
    # (Sq, S) score tiles plus the full-seq K/V scratch fit v7x's 64 MiB VMEM.
    if seq_len <= 256:
        return seq_len
    for cand in (256, 128, 64, 32, 16, 8):
        if seq_len % cand == 0:
            return cand
    return seq_len


def _vmem_plan_bytes(S, Ep, M, q_block, out_itemsize):
    bf = 2
    x_blk = 2 * S * Ep * bf                        # full-seq x block, double-buffered
    weights = (3 * Ep * M + M * Ep) * bf           # single-copy unblocked VMEM inputs
    bias = Ep * 4
    kv_scratch = 2 * S * M * bf                    # persistent K / V scratch
    out_blk = 2 * q_block * Ep * out_itemsize
    temps = q_block * M * (4 + bf) + 2 * q_block * S * (4 + bf) + q_block * M * 4
    return x_blk + weights + bias + kv_scratch + out_blk + temps


def multi_head_self_attention(x, wq, wk, wv, wu, bu, heads, *, q_block=None,
                              out_dtype=None):
    """x: (B, S, E); wq/wk/wv/wu: (E, E) torch Linear weights (out, in); bu: (E,)."""
    B, S, E = x.shape
    assert E % heads == 0, "Embedding dimension must be divisible by the number of heads."
    Dh = E // heads
    scale = 1.0 / math.sqrt(Dh)
    out_dtype = x.dtype if out_dtype is None else out_dtype

    Ep = _round_up(E, _LANE)                                  # lane-padded embedding dim
    hs = Dh if Dh % _LANE == 0 else _round_up(Dh, _LANE)      # 128-aligned head stride
    M = heads * hs                                            # packed head-major width

    # TODO(synk): for hot-loop use, precompute the packed bf16 weights once outside
    # the call instead of on every call.
    def pack_qkv(w, s=1.0):   # (out,in) -> (Ep, H*hs) bf16; head h at lanes [h*hs, h*hs+Dh)
        wt = (w.astype(jnp.float32) * s).T.reshape(E, heads, Dh)
        wt = jnp.pad(wt, ((0, Ep - E), (0, 0), (0, hs - Dh)))
        return wt.reshape(Ep, M).astype(_COMPUTE_DTYPE)

    def pack_unify(w):        # (out,in) -> (H*hs, Ep) bf16; zero rows on padded lanes
        wt = w.astype(jnp.float32).T.reshape(heads, Dh, E)
        wt = jnp.pad(wt, ((0, 0), (0, hs - Dh), (0, Ep - E)))
        return wt.reshape(M, Ep).astype(_COMPUTE_DTYPE)

    x_p = jnp.pad(x, ((0, 0), (0, 0), (0, Ep - E))).astype(_COMPUTE_DTYPE)
    wq_p = pack_qkv(wq, scale)                                # softmax scale folded into Wq
    wk_p = pack_qkv(wk)
    wv_p = pack_qkv(wv)
    wu_p = pack_unify(wu)
    bu_p = jnp.pad(bu.astype(jnp.float32), (0, Ep - E)).reshape(1, Ep)

    if q_block is None:
        q_block = _pick_q_block(S)
    q_block = min(q_block, S)
    assert S % q_block == 0, "q_block must divide the sequence length"
    nq = S // q_block

    kernel = functools.partial(_mhsa_kernel, heads=heads, head_stride=hs, q_block=q_block)

    plan = _vmem_plan_bytes(S, Ep, M, q_block, jnp.dtype(out_dtype).itemsize)
    vmem_limit = int(min(max(plan * 3 // 2 + (4 << 20), 16 << 20), 56 << 20))

    # Weights / bias: constant across the grid -> whole array resident in VMEM once
    # (no per-step pipeline double buffer).
    vmem_full = pl.BlockSpec(memory_space=pltpu.MemorySpace.VMEM)

    out = pl.pallas_call(
        kernel,
        out_shape=jax.ShapeDtypeStruct((B, S, Ep), out_dtype),
        grid_spec=pltpu.PrefetchScalarGridSpec(
            num_scalar_prefetch=0,
            grid=(B, nq),
            in_specs=[
                pl.BlockSpec((1, S, Ep), lambda b, i: (b, 0, 0)),   # x: full seq, per batch
                vmem_full,                                          # Wq^T (scaled, packed)
                vmem_full,                                          # Wk^T (packed)
                vmem_full,                                          # Wv^T (packed)
                vmem_full,                                          # Wu^T (packed rows)
                vmem_full,                                          # unify bias (f32)
            ],
            out_specs=pl.BlockSpec((1, q_block, Ep), lambda b, i: (b, i, 0)),
            scratch_shapes=[
                pltpu.VMEM((S, M), _COMPUTE_DTYPE),   # K: persists across query tiles
                pltpu.VMEM((S, M), _COMPUTE_DTYPE),   # V
            ],
        ),
        compiler_params=pltpu.CompilerParams(
            dimension_semantics=("parallel", "arbitrary"),
            vmem_limit_bytes=vmem_limit,
        ),
    )(x_p, wq_p, wk_p, wv_p, wu_p, bu_p)

    return out[..., :E] if Ep > E else out


def _reference(x, wq, wk, wv, wu, bu, heads):
    B, S, E = x.shape
    Dh = E // heads
    hp = jax.lax.Precision.HIGHEST
    q = jnp.einsum("bse,oe->bso", x, wq, precision=hp).reshape(B, S, heads, Dh).transpose(0, 2, 1, 3)
    k = jnp.einsum("bse,oe->bso", x, wk, precision=hp).reshape(B, S, heads, Dh).transpose(0, 2, 1, 3)
    v = jnp.einsum("bse,oe->bso", x, wv, precision=hp).reshape(B, S, heads, Dh).transpose(0, 2, 1, 3)
    dot = jnp.einsum("bhsd,bhtd->bhst", q, k, precision=hp) / math.sqrt(Dh)
    attn = jax.nn.softmax(dot, axis=-1)
    out = jnp.einsum("bhst,bhtd->bhsd", attn, v, precision=hp)
    out = out.transpose(0, 2, 1, 3).reshape(B, S, E)
    return jnp.einsum("bse,oe->bso", out, wu, precision=hp) + bu


if __name__ == "__main__":
    B, S, E, H = 2, 8, 32, 8

    key = jax.random.PRNGKey(0)
    kx, kq, kk, kv, ku, kb = jax.random.split(key, 6)
    bound = 1.0 / math.sqrt(E)
    x = jax.random.normal(kx, (B, S, E), dtype=jnp.float32)
    wq = jax.random.uniform(kq, (E, E), jnp.float32, -bound, bound)
    wk = jax.random.uniform(kk, (E, E), jnp.float32, -bound, bound)
    wv = jax.random.uniform(kv, (E, E), jnp.float32, -bound, bound)
    wu = jax.random.uniform(ku, (E, E), jnp.float32, -bound, bound)
    bu = jax.random.uniform(kb, (E,), jnp.float32, -bound, bound)

    out = multi_head_self_attention(x, wq, wk, wv, wu, bu, H)
    out = jax.block_until_ready(out)

    ref = _reference(x, wq, wk, wv, wu, bu, H)
    assert out.shape == (B, S, E)
    # bf16 MXU operands (f32 accumulation / f32 softmax) -> slightly looser tolerance.
    assert jnp.allclose(out, ref, rtol=2e-2, atol=2e-2), "mismatch vs reference"

    print("KERNEL_OK")
</pallas_src>

<mosaic_0001>
module attributes {stable_mosaic.version = 11 : i64} {
  func.func @_mhsa_kernel(%arg0: i32, %arg1: i32, %arg2: memref<1x8x128xbf16, #tpu.memory_space<vmem>>, %arg3: memref<128x1024xbf16, #tpu.memory_space<vmem>>, %arg4: memref<128x1024xbf16, #tpu.memory_space<vmem>>, %arg5: memref<128x1024xbf16, #tpu.memory_space<vmem>>, %arg6: memref<1024x128xbf16, #tpu.memory_space<vmem>>, %arg7: memref<1x128xf32, #tpu.memory_space<vmem>>, %arg8: memref<1x8x128xf32, #tpu.memory_space<vmem>>, %arg9: memref<8x1024xbf16, #tpu.memory_space<vmem>>, %arg10: memref<8x1024xbf16, #tpu.memory_space<vmem>>) attributes {dimension_semantics = [#tpu.dimension_semantics<parallel>, #tpu.dimension_semantics<arbitrary>], iteration_bounds = array<i64: 2, 1>, scalar_prefetch = 0 : i64, scratch_operands = 2 : i64, tpu.core_type = #tpu.core_type<tc>, window_params = [{transform_indices = @transform_0, window_bounds = array<i64: 1, 8, 128>}, {pipeline_mode = #tpu.pipeline_mode<synchronous>, transform_indices = @transform_1, window_bounds = array<i64: 128, 1024>}, {pipeline_mode = #tpu.pipeline_mode<synchronous>, transform_indices = @transform_2, window_bounds = array<i64: 128, 1024>}, {pipeline_mode = #tpu.pipeline_mode<synchronous>, transform_indices = @transform_3, window_bounds = array<i64: 128, 1024>}, {pipeline_mode = #tpu.pipeline_mode<synchronous>, transform_indices = @transform_4, window_bounds = array<i64: 1024, 128>}, {pipeline_mode = #tpu.pipeline_mode<synchronous>, transform_indices = @transform_5, window_bounds = array<i64: 1, 128>}, {transform_indices = @transform_6, window_bounds = array<i64: 1, 8, 128>}]} {
    %c0_i32 = arith.constant 0 : i32
    %0 = arith.cmpi eq, %arg1, %c0_i32 : i32
    %1 = arith.extui %0 : i1 to i32
    %c0_i32_0 = arith.constant 0 : i32
    %2 = arith.cmpi ne, %1, %c0_i32_0 : i32
    scf.if %2 {
      %c0_69 = arith.constant 0 : index
      %c0_70 = arith.constant 0 : index
      %c0_71 = arith.constant 0 : index
      %149 = vector.load %arg2[%c0_69, %c0_70, %c0_71] : memref<1x8x128xbf16, #tpu.memory_space<vmem>>, vector<1x8x128xbf16>
      %150 = vector.shape_cast %149 : vector<1x8x128xbf16> to vector<8x128xbf16>
      %c0_72 = arith.constant 0 : index
      %c0_73 = arith.constant 0 : index
      %151 = vector.load %arg4[%c0_72, %c0_73] : memref<128x1024xbf16, #tpu.memory_space<vmem>>, vector<128x1024xbf16>
      %cst_74 = arith.constant dense<0.000000e+00> : vector<8x1024xf32>
      %152 = tpu.matmul %150, %151, %cst_74 {dimension_numbers = #tpu.dot_dimension_numbers<[1], [0], [0], [1], [0, 0, 1, 1], [], []>} : vector<8x128xbf16>, vector<128x1024xbf16>, vector<8x1024xf32> -> vector<8x1024xf32>
      %153 = arith.truncf %152 : vector<8x1024xf32> to vector<8x1024xbf16>
      %c0_75 = arith.constant 0 : index
      %c0_76 = arith.constant 0 : index
      %154 = vector.load %arg9[%c0_75, %c0_76] : memref<8x1024xbf16, #tpu.memory_space<vmem>>, vector<8x1024xbf16>
      tpu.vector_store %arg9[%c0_75, %c0_76], %153 {strides = array<i32>} : memref<8x1024xbf16, #tpu.memory_space<vmem>>, vector<8x1024xbf16>,
      %c0_77 = arith.constant 0 : index
      %c0_78 = arith.constant 0 : index
      %155 = vector.load %arg5[%c0_77, %c0_78] : memref<128x1024xbf16, #tpu.memory_space<vmem>>, vector<128x1024xbf16>
      %cst_79 = arith.constant dense<0.000000e+00> : vector<8x1024xf32>
      %156 = tpu.matmul %150, %155, %cst_79 {dimension_numbers = #tpu.dot_dimension_numbers<[1], [0], [0], [1], [0, 0, 1, 1], [], []>} : vector<8x128xbf16>, vector<128x1024xbf16>, vector<8x1024xf32> -> vector<8x1024xf32>
      %157 = arith.truncf %156 : vector<8x1024xf32> to vector<8x1024xbf16>
      %c0_80 = arith.constant 0 : index
      %c0_81 = arith.constant 0 : index
      %158 = vector.load %arg10[%c0_80, %c0_81] : memref<8x1024xbf16, #tpu.memory_space<vmem>>, vector<8x1024xbf16>
      tpu.vector_store %arg10[%c0_80, %c0_81], %157 {strides = array<i32>} : memref<8x1024xbf16, #tpu.memory_space<vmem>>, vector<8x1024xbf16>,
    } else {
    }
    %c8_i32 = arith.constant 8 : i32
    %3 = arith.muli %arg1, %c8_i32 : i32
    %4 = tpu.assume_multiple %3, 8 : i32
    %c0 = arith.constant 0 : index
    %5 = arith.index_cast %4 : i32 to index
    %c0_1 = arith.constant 0 : index
    %6 = vector.load %arg2[%c0, %5, %c0_1] : memref<1x8x128xbf16, #tpu.memory_space<vmem>>, vector<1x8x128xbf16>
    %7 = vector.shape_cast %6 : vector<1x8x128xbf16> to vector<8x128xbf16>
    %c0_2 = arith.constant 0 : index
    %c0_3 = arith.constant 0 : index
    %8 = vector.load %arg3[%c0_2, %c0_3] : memref<128x1024xbf16, #tpu.memory_space<vmem>>, vector<128x1024xbf16>
    %cst = arith.constant dense<0.000000e+00> : vector<8x1024xf32>
    %9 = tpu.matmul %7, %8, %cst {dimension_numbers = #tpu.dot_dimension_numbers<[1], [0], [0], [1], [0, 0, 1, 1], [], []>} : vector<8x128xbf16>, vector<128x1024xbf16>, vector<8x1024xf32> -> vector<8x1024xf32>
    %10 = arith.truncf %9 : vector<8x1024xf32> to vector<8x1024xbf16>
    %11 = vector.extract_strided_slice %10 {offsets = [0, 0], sizes = [8, 128], strides = [1, 1]} : vector<8x1024xbf16> to vector<8x128xbf16>
    %c0_4 = arith.constant 0 : index
    %c0_5 = arith.constant 0 : index
    %12 = vector.load %arg9[%c0_4, %c0_5] : memref<8x1024xbf16, #tpu.memory_space<vmem>>, vector<8x128xbf16>
    %c0_6 = arith.constant 0 : index
    %c0_7 = arith.constant 0 : index
    %13 = vector.load %arg10[%c0_6, %c0_7] : memref<8x1024xbf16, #tpu.memory_space<vmem>>, vector<8x128xbf16>
    %cst_8 = arith.constant dense<0.000000e+00> : vector<8x8xf32>
    %14 = tpu.matmul %11, %12, %cst_8 {dimension_numbers = #tpu.dot_dimension_numbers<[1], [1], [0], [0], [0, 0, 1, 0], [], []>} : vector<8x128xbf16>, vector<8x128xbf16>, vector<8x8xf32> -> vector<8x8xf32>
    %cst_9 = arith.constant dense<0xFF800000> : vector<8xf32>
    %15 = vector.multi_reduction <maximumf>, %14, %cst_9 [1] : vector<8x8xf32> to vector<8xf32>
    %16 = vector.shape_cast %15 : vector<8xf32> to vector<8x1xf32>
    %17 = vector.broadcast %16 : vector<8x1xf32> to vector<8x8xf32>
    %18 = arith.subf %14, %17 : vector<8x8xf32>
    %19 = math.exp %18 : vector<8x8xf32>
    %cst_10 = arith.constant dense<0.000000e+00> : vector<8xf32>
    %20 = vector.multi_reduction <add>, %19, %cst_10 [1] : vector<8x8xf32> to vector<8xf32>
    %21 = vector.shape_cast %20 : vector<8xf32> to vector<8x1xf32>
    %22 = tpu.reciprocal %21 {approx = true} : vector<8x1xf32> -> vector<8x1xf32>
    %23 = arith.truncf %19 : vector<8x8xf32> to vector<8x8xbf16>
    %cst_11 = arith.constant dense<0.000000e+00> : vector<8x128xf32>
    %24 = tpu.matmul %23, %13, %cst_11 {dimension_numbers = #tpu.dot_dimension_numbers<[1], [0], [0], [1], [0, 0, 1, 1], [], []>} : vector<8x8xbf16>, vector<8x128xbf16>, vector<8x128xf32> -> vector<8x128xf32>
    %25 = vector.broadcast %22 : vector<8x1xf32> to vector<8x128xf32>
    %26 = arith.mulf %24, %25 : vector<8x128xf32>
    %27 = vector.extract_strided_slice %10 {offsets = [0, 128], sizes = [8, 128], strides = [1, 1]} : vector<8x1024xbf16> to vector<8x128xbf16>
    %c0_12 = arith.constant 0 : index
    %c128 = arith.constant 128 : index
    %28 = vector.load %arg9[%c0_12, %c128] : memref<8x1024xbf16, #tpu.memory_space<vmem>>, vector<8x128xbf16>
    %c0_13 = arith.constant 0 : index
    %c128_14 = arith.constant 128 : index
    %29 = vector.load %arg10[%c0_13, %c128_14] : memref<8x1024xbf16, #tpu.memory_space<vmem>>, vector<8x128xbf16>
    %cst_15 = arith.constant dense<0.000000e+00> : vector<8x8xf32>
    %30 = tpu.matmul %27, %28, %cst_15 {dimension_numbers = #tpu.dot_dimension_numbers<[1], [1], [0], [0], [0, 0, 1, 0], [], []>} : vector<8x128xbf16>, vector<8x128xbf16>, vector<8x8xf32> -> vector<8x8xf32>
    %cst_16 = arith.constant dense<0xFF800000> : vector<8xf32>
    %31 = vector.multi_reduction <maximumf>, %30, %cst_16 [1] : vector<8x8xf32> to vector<8xf32>
    %32 = vector.shape_cast %31 : vector<8xf32> to vector<8x1xf32>
    %33 = vector.broadcast %32 : vector<8x1xf32> to vector<8x8xf32>
    %34 = arith.subf %30, %33 : vector<8x8xf32>
    %35 = math.exp %34 : vector<8x8xf32>
    %cst_17 = arith.constant dense<0.000000e+00> : vector<8xf32>
    %36 = vector.multi_reduction <add>, %35, %cst_17 [1] : vector<8x8xf32> to vector<8xf32>
    %37 = vector.shape_cast %36 : vector<8xf32> to vector<8x1xf32>
    %38 = tpu.reciprocal %37 {approx = true} : vector<8x1xf32> -> vector<8x1xf32>
    %39 = arith.truncf %35 : vector<8x8xf32> to vector<8x8xbf16>
    %cst_18 = arith.constant dense<0.000000e+00> : vector<8x128xf32>
    %40 = tpu.matmul %39, %29, %cst_18 {dimension_numbers = #tpu.dot_dimension_numbers<[1], [0], [0], [1], [0, 0, 1, 1], [], []>} : vector<8x8xbf16>, vector<8x128xbf16>, vector<8x128xf32> -> vector<8x128xf32>
    %41 = vector.broadcast %38 : vector<8x1xf32> to vector<8x128xf32>
    %42 = arith.mulf %40, %41 : vector<8x128xf32>
    %43 = vector.extract_strided_slice %10 {offsets = [0, 256], sizes = [8, 128], strides = [1, 1]} : vector<8x1024xbf16> to vector<8x128xbf16>
    %c0_19 = arith.constant 0 : index
    %c256 = arith.constant 256 : index
    %44 = vector.load %arg9[%c0_19, %c256] : memref<8x1024xbf16, #tpu.memory_space<vmem>>, vector<8x128xbf16>
    %c0_20 = arith.constant 0 : index
    %c256_21 = arith.constant 256 : index
    %45 = vector.load %arg10[%c0_20, %c256_21] : memref<8x1024xbf16, #tpu.memory_space<vmem>>, vector<8x128xbf16>
    %cst_22 = arith.constant dense<0.000000e+00> : vector<8x8xf32>
    %46 = tpu.matmul %43, %44, %cst_22 {dimension_numbers = #tpu.dot_dimension_numbers<[1], [1], [0], [0], [0, 0, 1, 0], [], []>} : vector<8x128xbf16>, vector<8x128xbf16>, vector<8x8xf32> -> vector<8x8xf32>
    %cst_23 = arith.constant dense<0xFF800000> : vector<8xf32>
    %47 = vector.multi_reduction <maximumf>, %46, %cst_23 [1] : vector<8x8xf32> to vector<8xf32>
    %48 = vector.shape_cast %47 : vector<8xf32> to vector<8x1xf32>
    %49 = vector.broadcast %48 : vector<8x1xf32> to vector<8x8xf32>
    %50 = arith.subf %46, %49 : vector<8x8xf32>
    %51 = math.exp %50 : vector<8x8xf32>
    %cst_24 = arith.constant dense<0.000000e+00> : vector<8xf32>
    %52 = vector.multi_reduction <add>, %51, %cst_24 [1] : vector<8x8xf32> to vector<8xf32>
    %53 = vector.shape_cast %52 : vector<8xf32> to vector<8x1xf32>
    %54 = tpu.reciprocal %53 {approx = true} : vector<8x1xf32> -> vector<8x1xf32>
    %55 = arith.truncf %51 : vector<8x8xf32> to vector<8x8xbf16>
    %cst_25 = arith.constant dense<0.000000e+00> : vector<8x128xf32>
    %56 = tpu.matmul %55, %45, %cst_25 {dimension_numbers = #tpu.dot_dimension_numbers<[1], [0], [0], [1], [0, 0, 1, 1], [], []>} : vector<8x8xbf16>, vector<8x128xbf16>, vector<8x128xf32> -> vector<8x128xf32>
    %57 = vector.broadcast %54 : vector<8x1xf32> to vector<8x128xf32>
    %58 = arith.mulf %56, %57 : vector<8x128xf32>
    %59 = vector.extract_strided_slice %10 {offsets = [0, 384], sizes = [8, 128], strides = [1, 1]} : vector<8x1024xbf16> to vector<8x128xbf16>
    %c0_26 = arith.constant 0 : index
    %c384 = arith.constant 384 : index
    %60 = vector.load %arg9[%c0_26, %c384] : memref<8x1024xbf16, #tpu.memory_space<vmem>>, vector<8x128xbf16>
    %c0_27 = arith.constant 0 : index
    %c384_28 = arith.constant 384 : index
    %61 = vector.load %arg10[%c0_27, %c384_28] : memref<8x1024xbf16, #tpu.memory_space<vmem>>, vector<8x128xbf16>
    %cst_29 = arith.constant dense<0.000000e+00> : vector<8x8xf32>
    %62 = tpu.matmul %59, %60, %cst_29 {dimension_numbers = #tpu.dot_dimension_numbers<[1], [1], [0], [0], [0, 0, 1, 0], [], []>} : vector<8x128xbf16>, vector<8x128xbf16>, vector<8x8xf32> -> vector<8x8xf32>
    %cst_30 = arith.constant dense<0xFF800000> : vector<8xf32>
    %63 = vector.multi_reduction <maximumf>, %62, %cst_30 [1] : vector<8x8xf32> to vector<8xf32>
    %64 = vector.shape_cast %63 : vector<8xf32> to vector<8x1xf32>
    %65 = vector.broadcast %64 : vector<8x1xf32> to vector<8x8xf32>
    %66 = arith.subf %62, %65 : vector<8x8xf32>
    %67 = math.exp %66 : vector<8x8xf32>
    %cst_31 = arith.constant dense<0.000000e+00> : vector<8xf32>
    %68 = vector.multi_reduction <add>, %67, %cst_31 [1] : vector<8x8xf32> to vector<8xf32>
    %69 = vector.shape_cast %68 : vector<8xf32> to vector<8x1xf32>
    %70 = tpu.reciprocal %69 {approx = true} : vector<8x1xf32> -> vector<8x1xf32>
    %71 = arith.truncf %67 : vector<8x8xf32> to vector<8x8xbf16>
    %cst_32 = arith.constant dense<0.000000e+00> : vector<8x128xf32>
    %72 = tpu.matmul %71, %61, %cst_32 {dimension_numbers = #tpu.dot_dimension_numbers<[1], [0], [0], [1], [0, 0, 1, 1], [], []>} : vector<8x8xbf16>, vector<8x128xbf16>, vector<8x128xf32> -> vector<8x128xf32>
    %73 = vector.broadcast %70 : vector<8x1xf32> to vector<8x128xf32>
    %74 = arith.mulf %72, %73 : vector<8x128xf32>
    %75 = vector.extract_strided_slice %10 {offsets = [0, 512], sizes = [8, 128], strides = [1, 1]} : vector<8x1024xbf16> to vector<8x128xbf16>
    %c0_33 = arith.constant 0 : index
    %c512 = arith.constant 512 : index
    %76 = vector.load %arg9[%c0_33, %c512] : memref<8x1024xbf16, #tpu.memory_space<vmem>>, vector<8x128xbf16>
    %c0_34 = arith.constant 0 : index
    %c512_35 = arith.constant 512 : index
    %77 = vector.load %arg10[%c0_34, %c512_35] : memref<8x1024xbf16, #tpu.memory_space<vmem>>, vector<8x128xbf16>
    %cst_36 = arith.constant dense<0.000000e+00> : vector<8x8xf32>
    %78 = tpu.matmul %75, %76, %cst_36 {dimension_numbers = #tpu.dot_dimension_numbers<[1], [1], [0], [0], [0, 0, 1, 0], [], []>} : vector<8x128xbf16>, vector<8x128xbf16>, vector<8x8xf32> -> vector<8x8xf32>
    %cst_37 = arith.constant dense<0xFF800000> : vector<8xf32>
    %79 = vector.multi_reduction <maximumf>, %78, %cst_37 [1] : vector<8x8xf32> to vector<8xf32>
    %80 = vector.shape_cast %79 : vector<8xf32> to vector<8x1xf32>
    %81 = vector.broadcast %80 : vector<8x1xf32> to vector<8x8xf32>
    %82 = arith.subf %78, %81 : vector<8x8xf32>
    %83 = math.exp %82 : vector<8x8xf32>
    %cst_38 = arith.constant dense<0.000000e+00> : vector<8xf32>
    %84 = vector.multi_reduction <add>, %83, %cst_38 [1] : vector<8x8xf32> to vector<8xf32>
    %85 = vector.shape_cast %84 : vector<8xf32> to vector<8x1xf32>
    %86 = tpu.reciprocal %85 {approx = true} : vector<8x1xf32> -> vector<8x1xf32>
    %87 = arith.truncf %83 : vector<8x8xf32> to vector<8x8xbf16>
    %cst_39 = arith.constant dense<0.000000e+00> : vector<8x128xf32>
    %88 = tpu.matmul %87, %77, %cst_39 {dimension_numbers = #tpu.dot_dimension_numbers<[1], [0], [0], [1], [0, 0, 1, 1], [], []>} : vector<8x8xbf16>, vector<8x128xbf16>, vector<8x128xf32> -> vector<8x128xf32>
    %89 = vector.broadcast %86 : vector<8x1xf32> to vector<8x128xf32>
    %90 = arith.mulf %88, %89 : vector<8x128xf32>
    %91 = vector.extract_strided_slice %10 {offsets = [0, 640], sizes = [8, 128], strides = [1, 1]} : vector<8x1024xbf16> to vector<8x128xbf16>
    %c0_40 = arith.constant 0 : index
    %c640 = arith.constant 640 : index
    %92 = vector.load %arg9[%c0_40, %c640] : memref<8x1024xbf16, #tpu.memory_space<vmem>>, vector<8x128xbf16>
    %c0_41 = arith.constant 0 : index
    %c640_42 = arith.constant 640 : index
    %93 = vector.load %arg10[%c0_41, %c640_42] : memref<8x1024xbf16, #tpu.memory_space<vmem>>, vector<8x128xbf16>
    %cst_43 = arith.constant dense<0.000000e+00> : vector<8x8xf32>
    %94 = tpu.matmul %91, %92, %cst_43 {dimension_numbers = #tpu.dot_dimension_numbers<[1], [1], [0], [0], [0, 0, 1, 0], [], []>} : vector<8x128xbf16>, vector<8x128xbf16>, vector<8x8xf32> -> vector<8x8xf32>
    %cst_44 = arith.constant dense<0xFF800000> : vector<8xf32>
    %95 = vector.multi_reduction <maximumf>, %94, %cst_44 [1] : vector<8x8xf32> to vector<8xf32>
    %96 = vector.shape_cast %95 : vector<8xf32> to vector<8x1xf32>
    %97 = vector.broadcast %96 : vector<8x1xf32> to vector<8x8xf32>
    %98 = arith.subf %94, %97 : vector<8x8xf32>
    %99 = math.exp %98 : vector<8x8xf32>
    %cst_45 = arith.constant dense<0.000000e+00> : vector<8xf32>
    %100 = vector.multi_reduction <add>, %99, %cst_45 [1] : vector<8x8xf32> to vector<8xf32>
    %101 = vector.shape_cast %100 : vector<8xf32> to vector<8x1xf32>
    %102 = tpu.reciprocal %101 {approx = true} : vector<8x1xf32> -> vector<8x1xf32>
    %103 = arith.truncf %99 : vector<8x8xf32> to vector<8x8xbf16>
    %cst_46 = arith.constant dense<0.000000e+00> : vector<8x128xf32>
    %104 = tpu.matmul %103, %93, %cst_46 {dimension_numbers = #tpu.dot_dimension_numbers<[1], [0], [0], [1], [0, 0, 1, 1], [], []>} : vector<8x8xbf16>, vector<8x128xbf16>, vector<8x128xf32> -> vector<8x128xf32>
    %105 = vector.broadcast %102 : vector<8x1xf32> to vector<8x128xf32>
    %106 = arith.mulf %104, %105 : vector<8x128xf32>
    %107 = vector.extract_strided_slice %10 {offsets = [0, 768], sizes = [8, 128], strides = [1, 1]} : vector<8x1024xbf16> to vector<8x128xbf16>
    %c0_47 = arith.constant 0 : index
    %c768 = arith.constant 768 : index
    %108 = vector.load %arg9[%c0_47, %c768] : memref<8x1024xbf16, #tpu.memory_space<vmem>>, vector<8x128xbf16>
    %c0_48 = arith.constant 0 : index
    %c768_49 = arith.constant 768 : index
    %109 = vector.load %arg10[%c0_48, %c768_49] : memref<8x1024xbf16, #tpu.memory_space<vmem>>, vector<8x128xbf16>
    %cst_50 = arith.constant dense<0.000000e+00> : vector<8x8xf32>
    %110 = tpu.matmul %107, %108, %cst_50 {dimension_numbers = #tpu.dot_dimension_numbers<[1], [1], [0], [0], [0, 0, 1, 0], [], []>} : vector<8x128xbf16>, vector<8x128xbf16>, vector<8x8xf32> -> vector<8x8xf32>
    %cst_51 = arith.constant dense<0xFF800000> : vector<8xf32>
    %111 = vector.multi_reduction <maximumf>, %110, %cst_51 [1] : vector<8x8xf32> to vector<8xf32>
    %112 = vector.shape_cast %111 : vector<8xf32> to vector<8x1xf32>
    %113 = vector.broadcast %112 : vector<8x1xf32> to vector<8x8xf32>
    %114 = arith.subf %110, %113 : vector<8x8xf32>
    %115 = math.exp %114 : vector<8x8xf32>
    %cst_52 = arith.constant dense<0.000000e+00> : vector<8xf32>
    %116 = vector.multi_reduction <add>, %115, %cst_52 [1] : vector<8x8xf32> to vector<8xf32>
    %117 = vector.shape_cast %116 : vector<8xf32> to vector<8x1xf32>
    %118 = tpu.reciprocal %117 {approx = true} : vector<8x1xf32> -> vector<8x1xf32>
    %119 = arith.truncf %115 : vector<8x8xf32> to vector<8x8xbf16>
    %cst_53 = arith.constant dense<0.000000e+00> : vector<8x128xf32>
    %120 = tpu.matmul %119, %109, %cst_53 {dimension_numbers = #tpu.dot_dimension_numbers<[1], [0], [0], [1], [0, 0, 1, 1], [], []>} : vector<8x8xbf16>, vector<8x128xbf16>, vector<8x128xf32> -> vector<8x128xf32>
    %121 = vector.broadcast %118 : vector<8x1xf32> to vector<8x128xf32>
    %122 = arith.mulf %120, %121 : vector<8x128xf32>
    %123 = vector.extract_strided_slice %10 {offsets = [0, 896], sizes = [8, 128], strides = [1, 1]} : vector<8x1024xbf16> to vector<8x128xbf16>
    %c0_54 = arith.constant 0 : index
    %c896 = arith.constant 896 : index
    %124 = vector.load %arg9[%c0_54, %c896] : memref<8x1024xbf16, #tpu.memory_space<vmem>>, vector<8x128xbf16>
    %c0_55 = arith.constant 0 : index
    %c896_56 = arith.constant 896 : index
    %125 = vector.load %arg10[%c0_55, %c896_56] : memref<8x1024xbf16, #tpu.memory_space<vmem>>, vector<8x128xbf16>
    %cst_57 = arith.constant dense<0.000000e+00> : vector<8x8xf32>
    %126 = tpu.matmul %123, %124, %cst_57 {dimension_numbers = #tpu.dot_dimension_numbers<[1], [1], [0], [0], [0, 0, 1, 0], [], []>} : vector<8x128xbf16>, vector<8x128xbf16>, vector<8x8xf32> -> vector<8x8xf32>
    %cst_58 = arith.constant dense<0xFF800000> : vector<8xf32>
    %127 = vector.multi_reduction <maximumf>, %126, %cst_58 [1] : vector<8x8xf32> to vector<8xf32>
    %128 = vector.shape_cast %127 : vector<8xf32> to vector<8x1xf32>
    %129 = vector.broadcast %128 : vector<8x1xf32> to vector<8x8xf32>
    %130 = arith.subf %126, %129 : vector<8x8xf32>
    %131 = math.exp %130 : vector<8x8xf32>
    %cst_59 = arith.constant dense<0.000000e+00> : vector<8xf32>
    %132 = vector.multi_reduction <add>, %131, %cst_59 [1] : vector<8x8xf32> to vector<8xf32>
    %133 = vector.shape_cast %132 : vector<8xf32> to vector<8x1xf32>
    %134 = tpu.reciprocal %133 {approx = true} : vector<8x1xf32> -> vector<8x1xf32>
    %135 = arith.truncf %131 : vector<8x8xf32> to vector<8x8xbf16>
    %cst_60 = arith.constant dense<0.000000e+00> : vector<8x128xf32>
    %136 = tpu.matmul %135, %125, %cst_60 {dimension_numbers = #tpu.dot_dimension_numbers<[1], [0], [0], [1], [0, 0, 1, 1], [], []>} : vector<8x8xbf16>, vector<8x128xbf16>, vector<8x128xf32> -> vector<8x128xf32>
    %137 = vector.broadcast %134 : vector<8x1xf32> to vector<8x128xf32>
    %138 = arith.mulf %136, %137 : vector<8x128xf32>
    %139 = tpu.concatenate %26, %42, %58, %74, %90, %106, %122, %138 in 1 : vector<8x128xf32>, vector<8x128xf32>, vector<8x128xf32>, vector<8x128xf32>, vector<8x128xf32>, vector<8x128xf32>, vector<8x128xf32>, vector<8x128xf32> -> vector<8x1024xf32>
    %140 = arith.truncf %139 : vector<8x1024xf32> to vector<8x1024xbf16>
    %c0_61 = arith.constant 0 : index
    %c0_62 = arith.constant 0 : index
    %141 = vector.load %arg6[%c0_61, %c0_62] : memref<1024x128xbf16, #tpu.memory_space<vmem>>, vector<1024x128xbf16>
    %cst_63 = arith.constant dense<0.000000e+00> : vector<8x128xf32>
    %142 = tpu.matmul %140, %141, %cst_63 {dimension_numbers = #tpu.dot_dimension_numbers<[1], [0], [0], [1], [0, 0, 1, 1], [], []>} : vector<8x1024xbf16>, vector<1024x128xbf16>, vector<8x128xf32> -> vector<8x128xf32>
    %c0_64 = arith.constant 0 : index
    %c0_65 = arith.constant 0 : index
    %143 = vector.load %arg7[%c0_64, %c0_65] : memref<1x128xf32, #tpu.memory_space<vmem>>, vector<1x128xf32>
    %144 = vector.broadcast %143 : vector<1x128xf32> to vector<8x128xf32>
    %145 = arith.addf %142, %144 : vector<8x128xf32>
    %c0_66 = arith.constant 0 : index
    %c0_67 = arith.constant 0 : index
    %c0_68 = arith.constant 0 : index
    %146 = vector.load %arg8[%c0_66, %c0_67, %c0_68] : memref<1x8x128xf32, #tpu.memory_space<vmem>>, vector<1x8x128xf32>
    %147 = vector.shape_cast %146 : vector<1x8x128xf32> to vector<8x128xf32>
    %148 = vector.shape_cast %145 : vector<8x128xf32> to vector<1x8x128xf32>
    tpu.vector_store %arg8[%c0_66, %c0_67, %c0_68], %148 {strides = array<i32>} : memref<1x8x128xf32, #tpu.memory_space<vmem>>, vector<1x8x128xf32>,
    return
  }
  func.func @transform_0(%arg0: i32, %arg1: i32) -> (i32, i32, i32) {
    %c0_i32 = arith.constant 0 : i32
    %c0_i32_0 = arith.constant 0 : i32
    %c0_i32_1 = arith.constant 0 : i32
    return %arg0, %c0_i32, %c0_i32_0 : i32, i32, i32
  }
  func.func @transform_1(%arg0: i32, %arg1: i32) -> (i32, i32) {
    %c0_i32 = arith.constant 0 : i32
    %c0_i32_0 = arith.constant 0 : i32
    %c0_i32_1 = arith.constant 0 : i32
    return %c0_i32, %c0_i32_0 : i32, i32
  }
  func.func @transform_2(%arg0: i32, %arg1: i32) -> (i32, i32) {
    %c0_i32 = arith.constant 0 : i32
    %c0_i32_0 = arith.constant 0 : i32
    %c0_i32_1 = arith.constant 0 : i32
    return %c0_i32, %c0_i32_0 : i32, i32
  }
  func.func @transform_3(%arg0: i32, %arg1: i32) -> (i32, i32) {
    %c0_i32 = arith.constant 0 : i32
    %c0_i32_0 = arith.constant 0 : i32
    %c0_i32_1 = arith.constant 0 : i32
    return %c0_i32, %c0_i32_0 : i32, i32
  }
  func.func @transform_4(%arg0: i32, %arg1: i32) -> (i32, i32) {
    %c0_i32 = arith.constant 0 : i32
    %c0_i32_0 = arith.constant 0 : i32
    %c0_i32_1 = arith.constant 0 : i32
    return %c0_i32, %c0_i32_0 : i32, i32
  }
  func.func @transform_5(%arg0: i32, %arg1: i32) -> (i32, i32) {
    %c0_i32 = arith.constant 0 : i32
    %c0_i32_0 = arith.constant 0 : i32
    %c0_i32_1 = arith.constant 0 : i32
    return %c0_i32, %c0_i32_0 : i32, i32
  }
  func.func @transform_6(%arg0: i32, %arg1: i32) -> (i32, i32, i32) {
    %c0_i32 = arith.constant 0 : i32
    %c0_i32_0 = arith.constant 0 : i32
    return %arg0, %arg1, %c0_i32 : i32, i32, i32
  }
}

</mosaic_0001>

<llo_original>
// kernel: tpu_custom_call.1
$region0: #{tpu_custom_call.1}
  #allocation0 [shape = 'u32[]', space=smem, size = 0x4, offset = 0x4, fixed_abs, tag = 'smem constant byte address 0x4 - core index']
  #allocation1 [shape = 'u32[144,128]{1,0:T(1,128)}', space=vmem, size = 0x12000, scoped, tag = 'internal scratch']
  #allocation2 [shape = 'bf16[8,1024]{1,0:T(8,128)(2,1)}', space=vmem, size = 0x4000, scoped, tag = 'scratch operand']
  #allocation3 [shape = 'bf16[8,1024]{1,0:T(8,128)(2,1)}', space=vmem, size = 0x4000, scoped, tag = 'scratch operand']
  %s0 = inlined_call_operand.hbm [shape: bf16[2,8,128], index: 0, kind: input, shape index: {}]
  %s1 = inlined_call_operand.hbm [shape: bf16[128,1024], index: 1, kind: input, shape index: {}]
  %s2 = inlined_call_operand.hbm [shape: bf16[128,1024], index: 2, kind: input, shape index: {}]
  %s3 = inlined_call_operand.hbm [shape: bf16[128,1024], index: 3, kind: input, shape index: {}]
  %s4 = inlined_call_operand.hbm [shape: bf16[1024,128], index: 4, kind: input, shape index: {}]
  %s5 = inlined_call_operand.vmem [shape: f32[1,128], index: 5, kind: input, shape index: {}]
  %s6 = inlined_call_operand.hbm [shape: f32[2,8,128], index: 6, kind: output, shape index: {}]
  %s7 = sld [smem:[#allocation0]]
  $region81: #{tpu_custom_call.1} parent=0
    _
  %s9 = ssub.s32 1, %s7
  %s10 = scalar_select 0, %s9, %s7
  $region1: #{tpu_custom_call.1} parent=0
    #allocation4 [shape = 'u8[4096]{0}', space=vmem, size = 0x1000, scoped, tag = 'input window, operand 0']
    #allocation5 [shape = 's32[2]{0}', space=sflag, size = 0x8, scoped, tag = 'scoped memory for tpu_custom_call.1']
    #allocation6 [shape = 's32[2]{0}', space=sflag, size = 0x8, scoped, tag = 'scoped memory for tpu_custom_call.1']
    #allocation7 [shape = 'u8[262144]{0}', space=vmem, size = 0x40000, scoped, tag = 'input window, operand 1, single buffered']
    #allocation8 [shape = 's32[1]{0}', space=sflag, size = 0x4, scoped, tag = 'scoped memory for tpu_custom_call.1']
    #allocation9 [shape = 'u8[262144]{0}', space=vmem, size = 0x40000, scoped, tag = 'input window, operand 2, single buffered']
    #allocation10 [shape = 'u8[262144]{0}', space=vmem, size = 0x40000, scoped, tag = 'input window, operand 3, single buffered']
    #allocation11 [shape = 's32[1]{0}', space=sflag, size = 0x4, scoped, tag = 'scoped memory for tpu_custom_call.1']
    #allocation12 [shape = 'u8[262144]{0}', space=vmem, size = 0x40000, scoped, tag = 'input window, operand 4, single buffered']
    #allocation13 [shape = 'u8[8192]{0}', space=vmem, size = 0x2000, scoped, tag = 'output window, operand 0']
    %11 = vsyncpa [#allocation5], 0
    %s12 = scalar_lea.sflag [#allocation5], 1
    %13 = vsyncpa %s12, 0
    %14 = vsyncpa [#allocation8], 0
    %15 = vsyncpa [#allocation11], 0
    %16 = vsyncpa [#allocation6], 0
    %s17 = scalar_lea.sflag [#allocation6], 1
    %18 = vsyncpa %s17, 0
    loop: start=0, step=1, limit=4
    $region2: #{tpu_custom_call.1} parent=1 // loop_pre_header
      _
    $region3: #{tpu_custom_call.1} parent=1 // loop_header
      %s20 = sphi 0, %s24
      %p21 = scmp.ge.s32.totalorder %s20, 4
      %s27 = sphi 0, %s39
      %s28 = sphi 0, %s35
      %s29 = sphi 0, %s27
      %s30 = sphi 0, %s28
      %s31 = sphi 0, %s29
      %s32 = sphi 0, %s30
      %s42 = sphi 0, %s44
      %s45 = sphi 0, %s42
      %s46 = sphi 0, %s45
      %s62 = sphi 0, %s46
      %s66 = sphi 0, %s66
      %s68 = sphi 0, %s66
      %s69 = sphi 0, %s68
      %s83 = sphi 0, %s69
      %s87 = sphi 0, %s87
      %s89 = sphi 0, %s87
      %s90 = sphi 0, %s89
      %s104 = sphi 0, %s90
      %s108 = sphi 0, %s108
      %s110 = sphi 0, %s108
      %s111 = sphi 0, %s110
      %s125 = sphi 0, %s111
      %s129 = sphi 0, %s129
      %s131 = sphi 0, %s129
      %s132 = sphi 0, %s131
      %s146 = sphi 0, %s132
      %s150 = sphi 0, %s150
      %s152 = sphi 0, %s150
      %s153 = sphi 0, %s152
      %s167 = sphi 0, %s153
      %s175 = sphi 0, %s177
      %s178 = sphi 0, %s175
      %s179 = sphi 0, %s178
      %s195 = sphi 0, %s179
    $region4: #{tpu_custom_call.1} parent=1 // loop_header_branch
      %23 = sbr.rel (%p21) target = $region8
    $region5: #{tpu_custom_call.1} parent=1 // loop_body
      %s25 = ssub.s32 %s20, 1
      %s26 = ssub.s32 %s20, 2
      %s33 = sadd.s32 1, %s28
      %p34 = scmp.ge.s32.totalorder %s33, 1
      %s35 = scalar_select %p34, 0, %s33
      %s36 = sadd.s32 1, %s27
      %s37 = scalar_select %p34, %s36, %s27
      %p38 = scmp.ge.s32.totalorder %s37, 2
      %s39 = scalar_select %p38, 0, %s37
      %s40 = ssub.s32 %s27, %s39
      %p41 = scmp.eq.s32.totalorder %s40, 0
      %s43 = sadd.s32 %s42, 1
      %s44 = scalar_select %p41, %s42, %s43
      %p47 = pneg %p41
      %p48 = scmp.eq.s32.totalorder %s20, 1
      %p49 = por %p47, %p48
      %p50 = scmp.ne.s32.totalorder %s42, %s45
      %p51 = scmp.eq.s32.totalorder %s20, 0
      %p52 = por %p50, %p51
      %p53 = scmp.ne.s32.totalorder %s42, %s45
      %p54 = scmp.eq.s32.totalorder %s25, 1
      %p55 = por %p53, %p54
      %p56 = scmp.ne.s32.totalorder %s45, %s46
      %p57 = scmp.eq.s32.totalorder %s25, 0
      %p58 = por %p56, %p57
      %p59 = scmp.ne.s32.totalorder %s45, %s46
      %p60 = scmp.eq.s32.totalorder %s26, 1
      %p61 = por %p59, %p60
      %p63 = scmp.ne.s32.totalorder %s46, %s62
      %p64 = scmp.eq.s32.totalorder %s26, 0
      %p65 = por %p63, %p64
      %s67 = sadd.s32 %s66, 1
      %p70 = scmp.eq.s32.totalorder %s20, 1
      %p71 = scmp.ne.s32.totalorder %s66, %s68
      %p72 = scmp.eq.s32.totalorder %s20, 0
      %p73 = por %p71, %p72
      %p74 = scmp.ne.s32.totalorder %s66, %s68
      %p75 = scmp.eq.s32.totalorder %s25, 1
      %p76 = por %p74, %p75
      %p77 = scmp.ne.s32.totalorder %s68, %s69
      %p78 = scmp.eq.s32.totalorder %s25, 0
      %p79 = por %p77, %p78
      %p80 = scmp.ne.s32.totalorder %s68, %s69
      %p81 = scmp.eq.s32.totalorder %s26, 1
      %p82 = por %p80, %p81
      %p84 = scmp.ne.s32.totalorder %s69, %s83
      %p85 = scmp.eq.s32.totalorder %s26, 0
      %p86 = por %p84, %p85
      %s88 = sadd.s32 %s87, 1
      %p91 = scmp.eq.s32.totalorder %s20, 1
      %p92 = scmp.ne.s32.totalorder %s87, %s89
      %p93 = scmp.eq.s32.totalorder %s20, 0
      %p94 = por %p92, %p93
      %p95 = scmp.ne.s32.totalorder %s87, %s89
      %p96 = scmp.eq.s32.totalorder %s25, 1
      %p97 = por %p95, %p96
      %p98 = scmp.ne.s32.totalorder %s89, %s90
      %p99 = scmp.eq.s32.totalorder %s25, 0
      %p100 = por %p98, %p99
      %p101 = scmp.ne.s32.totalorder %s89, %s90
      %p102 = scmp.eq.s32.totalorder %s26, 1
      %p103 = por %p101, %p102
      %p105 = scmp.ne.s32.totalorder %s90, %s104
      %p106 = scmp.eq.s32.totalorder %s26, 0
      %p107 = por %p105, %p106
      %s109 = sadd.s32 %s108, 1
      %p112 = scmp.eq.s32.totalorder %s20, 1
      %p113 = scmp.ne.s32.totalorder %s108, %s110
      %p114 = scmp.eq.s32.totalorder %s20, 0
      %p115 = por %p113, %p114
      %p116 = scmp.ne.s32.totalorder %s108, %s110
      %p117 = scmp.eq.s32.totalorder %s25, 1
      %p118 = por %p116, %p117
      %p119 = scmp.ne.s32.totalorder %s110, %s111
      %p120 = scmp.eq.s32.totalorder %s25, 0
      %p121 = por %p119, %p120
      %p122 = scmp.ne.s32.totalorder %s110, %s111
      %p123 = scmp.eq.s32.totalorder %s26, 1
      %p124 = por %p122, %p123
      %p126 = scmp.ne.s32.totalorder %s111, %s125
      %p127 = scmp.eq.s32.totalorder %s26, 0
      %p128 = por %p126, %p127
      %s130 = sadd.s32 %s129, 1
      %p133 = scmp.eq.s32.totalorder %s20, 1
      %p134 = scmp.ne.s32.totalorder %s129, %s131
      %p135 = scmp.eq.s32.totalorder %s20, 0
      %p136 = por %p134, %p135
      %p137 = scmp.ne.s32.totalorder %s129, %s131
      %p138 = scmp.eq.s32.totalorder %s25, 1
      %p139 = por %p137, %p138
      %p140 = scmp.ne.s32.totalorder %s131, %s132
      %p141 = scmp.eq.s32.totalorder %s25, 0
      %p142 = por %p140, %p141
      %p143 = scmp.ne.s32.totalorder %s131, %s132
      %p144 = scmp.eq.s32.totalorder %s26, 1
      %p145 = por %p143, %p144
      %p147 = scmp.ne.s32.totalorder %s132, %s146
      %p148 = scmp.eq.s32.totalorder %s26, 0
      %p149 = por %p147, %p148
      %s151 = sadd.s32 %s150, 1
      %p154 = scmp.eq.s32.totalorder %s20, 1
      %p155 = scmp.ne.s32.totalorder %s150, %s152
      %p156 = scmp.eq.s32.totalorder %s20, 0
      %p157 = por %p155, %p156
      %p158 = scmp.ne.s32.totalorder %s150, %s152
      %p159 = scmp.eq.s32.totalorder %s25, 1
      %p160 = por %p158, %p159
      %p161 = scmp.ne.s32.totalorder %s152, %s153
      %p162 = scmp.eq.s32.totalorder %s25, 0
      %p163 = por %p161, %p162
      %p164 = scmp.ne.s32.totalorder %s152, %s153
      %p165 = scmp.eq.s32.totalorder %s26, 1
      %p166 = por %p164, %p165
      %p168 = scmp.ne.s32.totalorder %s153, %s167
      %p169 = scmp.eq.s32.totalorder %s26, 0
      %p170 = por %p168, %p169
      %s171 = ssub.s32 %s27, %s39
      %s172 = ssub.s32 %s28, %s35
      %s173 = sor.u32 %s171, %s172
      %p174 = scmp.eq.s32.totalorder %s173, 0
      %s176 = sadd.s32 %s175, 1
      %s177 = scalar_select %p174, %s175, %s176
      %p180 = pneg %p174
      %p181 = scmp.eq.s32.totalorder %s20, 1
      %p182 = por %p180, %p181
      %p183 = scmp.ne.s32.totalorder %s175, %s178
      %p184 = scmp.eq.s32.totalorder %s20, 0
      %p185 = por %p183, %p184
      %p186 = scmp.ne.s32.totalorder %s175, %s178
      %p187 = scmp.eq.s32.totalorder %s25, 1
      %p188 = por %p186, %p187
      %p189 = scmp.ne.s32.totalorder %s178, %s179
      %p190 = scmp.eq.s32.totalorder %s25, 0
      %p191 = por %p189, %p190
      %p192 = scmp.ne.s32.totalorder %s178, %s179
      %p193 = scmp.eq.s32.totalorder %s26, 1
      %p194 = por %p192, %p193
      %p196 = scmp.ne.s32.totalorder %s179, %s195
      %p197 = scmp.eq.s32.totalorder %s26, 0
      %p198 = por %p196, %p197
      %p199 = scmp.le.s32.totalorder 1, %s20
      %p200 = scmp.lt.s32.totalorder %s20, 3
      %p201 = pnand %p199, %p200
      %p202 = pneg %p201
      // Predicated region
      $region9: #{tpu_custom_call.1} parent=5 // pred_check
        _
      $region10: #{tpu_custom_call.1} parent=5 // pred_check_branch
        %204 = sbr.rel (%p201) target = $region12
      $region11: #{tpu_custom_call.1} parent=5 // pred_region
        %s205 = ssub.s32 %s20, 1
        // Predicated region
        $region13: #{tpu_custom_call.1} parent=11 // pred_check
          %p206 = pneg %p79
        $region14: #{tpu_custom_call.1} parent=11 // pred_check_branch
          %208 = sbr.rel (%p206) target = $region16
        $region15: #{tpu_custom_call.1} parent=11 // pred_region
          %s210 = ssub.s32 8192, 8192
          %211 = vsyncadd [#allocation8], %s210
          %s212 = sshll.u32 [#allocation7], 4
          %s213 = int_to_ptr.vmem [resolvable:$true] %s212
          %218 = dma.hbm_to_vmem [thread:$0]  %s1, 8192, %s213, [#allocation8], 512, 512, 32
        $region16: #{tpu_custom_call.1} parent=11 // pred_fallthru
          _
        // Predicated region
        $region17: #{tpu_custom_call.1} parent=11 // pred_check
          %p219 = pneg %p100
        $region18: #{tpu_custom_call.1} parent=11 // pred_check_branch
          %221 = sbr.rel (%p219) target = $region20
        $region19: #{tpu_custom_call.1} parent=11 // pred_region
          %s223 = ssub.s32 8192, 8192
          %224 = vsyncadd [#allocation8], %s223
          %s225 = sshll.u32 [#allocation9], 4
          %s226 = int_to_ptr.vmem [resolvable:$true] %s225
          %231 = dma.hbm_to_vmem [thread:$0]  %s2, 8192, %s226, [#allocation8], 512, 512, 32
        $region20: #{tpu_custom_call.1} parent=11 // pred_fallthru
          _
        // Predicated region
        $region21: #{tpu_custom_call.1} parent=11 // pred_check
          %p232 = pneg %p121
        $region22: #{tpu_custom_call.1} parent=11 // pred_check_branch
          %234 = sbr.rel (%p232) target = $region24
        $region23: #{tpu_custom_call.1} parent=11 // pred_region
          %s236 = ssub.s32 8192, 8192
          %237 = vsyncadd [#allocation11], %s236
          %s238 = sshll.u32 [#allocation10], 4
          %s239 = int_to_ptr.vmem [resolvable:$true] %s238
          %244 = dma.hbm_to_vmem [thread:$0]  %s3, 8192, %s239, [#allocation11], 512, 512, 32
        $region24: #{tpu_custom_call.1} parent=11 // pred_fallthru
          _
        // Predicated region
        $region25: #{tpu_custom_call.1} parent=11 // pred_check
          %p245 = pneg %p142
        $region26: #{tpu_custom_call.1} parent=11 // pred_check_branch
          %247 = sbr.rel (%p245) target = $region28
        $region27: #{tpu_custom_call.1} parent=11 // pred_region
          %s249 = ssub.s32 8192, 8192
          %250 = vsyncadd [#allocation11], %s249
          %s251 = sshll.u32 [#allocation12], 4
          %s252 = int_to_ptr.vmem [resolvable:$true] %s251
          %257 = dma.hbm_to_vmem [thread:$0]  %s4, 8192, %s252, [#allocation11], 64, 64, 4
        $region28: #{tpu_custom_call.1} parent=11 // pred_fallthru
          _
        // Predicated region
        $region29: #{tpu_custom_call.1} parent=11 // pred_check
          %p258 = pneg %p163
        $region30: #{tpu_custom_call.1} parent=11 // pred_check_branch
          %260 = sbr.rel (%p258) target = $region32
        $region31: #{tpu_custom_call.1} parent=11 // pred_region
          _
        $region32: #{tpu_custom_call.1} parent=11 // pred_fallthru
          _
      $region12: #{tpu_custom_call.1} parent=5 // pred_fallthru
        _
      %p261 = scmp.lt.s32.totalorder %s20, 2
      // Predicated region
      $region33: #{tpu_custom_call.1} parent=5 // pred_check
        %p262 = pneg %p261
      $region34: #{tpu_custom_call.1} parent=5 // pred_check_branch
        %264 = sbr.rel (%p262) target = $region36
      $region35: #{tpu_custom_call.1} parent=5 // pred_region
        // Predicated region
        $region37: #{tpu_custom_call.1} parent=35 // pred_check
          %p265 = pneg %p52
        $region38: #{tpu_custom_call.1} parent=35 // pred_check_branch
          %267 = sbr.rel (%p265) target = $region40
        $region39: #{tpu_custom_call.1} parent=35 // pred_region
          %s268 = sand.u32 %s42, 1
          %s269 = scalar_lea.sflag [#allocation5], %s268
          %s270 = sand.u32 %s42, 1
          %s271 = smul.addr %s270, 4
          %s272 = scalar_lea.vmem [#allocation4], %s271
          %s274 = ssub.s32 64, 64
          %275 = vsyncadd %s269, %s274
          %s276 = smul.addr %s27, 64
          %s277 = scalar_lea.hbm %s0, %s276
          %s279 = sshll.u32 %s272, 4
          %s280 = int_to_ptr.vmem [resolvable:$true] %s279
          %282 = dma.hbm_to_vmem [thread:$0]  %s277, 64, %s280, %s269
        $region40: #{tpu_custom_call.1} parent=35 // pred_fallthru
          _
      $region36: #{tpu_custom_call.1} parent=5 // pred_fallthru
        _
      %p283 = scmp.le.s32.totalorder 1, %s20
      %p284 = scmp.lt.s32.totalorder %s20, 3
      %p285 = pnand %p283, %p284
      %p286 = pneg %p285
      // Predicated region
      $region41: #{tpu_custom_call.1} parent=5 // pred_check
        _
      $region42: #{tpu_custom_call.1} parent=5 // pred_check_branch
        %288 = sbr.rel (%p285) target = $region44
      $region43: #{tpu_custom_call.1} parent=5 // pred_region
        %s289 = ssub.s32 %s20, 1
        %s290 = sand.u32 %s45, 1
        %s291 = scalar_lea.sflag [#allocation5], %s290
        %s292 = sand.u32 %s45, 1
        %s293 = smul.addr %s292, 4
        %s294 = scalar_lea.vmem [#allocation4], %s293
        // Predicated region
        $region45: #{tpu_custom_call.1} parent=43 // pred_check
          %p295 = pneg %p58
        $region46: #{tpu_custom_call.1} parent=43 // pred_check_branch
          %297 = sbr.rel (%p295) target = $region48
        $region47: #{tpu_custom_call.1} parent=43 // pred_region
          %298 = dma.done %s291, 64
        $region48: #{tpu_custom_call.1} parent=43 // pred_fallthru
          _
        // Predicated region
        $region49: #{tpu_custom_call.1} parent=43 // pred_check
          %p299 = pneg %p79
        $region50: #{tpu_custom_call.1} parent=43 // pred_check_branch
          %301 = sbr.rel (%p299) target = $region52
        $region51: #{tpu_custom_call.1} parent=43 // pred_region
          %302 = dma.done [#allocation8], 8192
        $region52: #{tpu_custom_call.1} parent=43 // pred_fallthru
          _
        // Predicated region
        $region53: #{tpu_custom_call.1} parent=43 // pred_check
          %p303 = pneg %p100
        $region54: #{tpu_custom_call.1} parent=43 // pred_check_branch
          %305 = sbr.rel (%p303) target = $region56
        $region55: #{tpu_custom_call.1} parent=43 // pred_region
          %306 = dma.done [#allocation8], 8192
        $region56: #{tpu_custom_call.1} parent=43 // pred_fallthru
          _
        // Predicated region
        $region57: #{tpu_custom_call.1} parent=43 // pred_check
          %p307 = pneg %p121
        $region58: #{tpu_custom_call.1} parent=43 // pred_check_branch
          %309 = sbr.rel (%p307) target = $region60
        $region59: #{tpu_custom_call.1} parent=43 // pred_region
          %310 = dma.done [#allocation11], 8192
        $region60: #{tpu_custom_call.1} parent=43 // pred_fallthru
          _
        // Predicated region
        $region61: #{tpu_custom_call.1} parent=43 // pred_check
          %p311 = pneg %p142
        $region62: #{tpu_custom_call.1} parent=43 // pred_check_branch
          %313 = sbr.rel (%p311) target = $region64
        $region63: #{tpu_custom_call.1} parent=43 // pred_region
          %314 = dma.done [#allocation11], 8192
        $region64: #{tpu_custom_call.1} parent=43 // pred_fallthru
          _
        %s315 = sand.u32 %s45, 1
        %s316 = scalar_lea.sflag [#allocation5], %s315
        %s317 = sand.u32 %s45, 1
        %s318 = smul.addr %s317, 4
        %s319 = scalar_lea.vmem [#allocation4], %s318
        %p320 = pneg %p58
        %p321 = pneg %p55
        %p322 = pneg %p79
        %p323 = pneg %p76
        %p324 = pneg %p100
        %p325 = pneg %p97
        %p326 = pneg %p121
        %p327 = pneg %p118
        %p328 = pneg %p142
        %p329 = pneg %p139
        %p330 = pneg %p163
        %p331 = pneg %p160
        %p332 = pneg %p191
        %p333 = pneg %p188
        %s334 = sand.u32 %s178, 1
        %s335 = scalar_lea.sflag [#allocation6], %s334
        %s336 = sand.u32 %s178, 1
        %s337 = smul.addr %s336, 8
        %s338 = scalar_lea.vmem [#allocation13], %s337
        %p340 = scmp.eq.s32.totalorder %s30, 0
        // Predicated region
        $region65: #{tpu_custom_call.1} parent=43 // pred_check
          %p341 = pneg %p340
        $region66: #{tpu_custom_call.1} parent=43 // pred_check_branch
          %343 = sbr.rel (%p341) target = $region68
        $region67: #{tpu_custom_call.1} parent=43 // pred_region
          %v344 = vld [vmem:[%s294] sm:$0xf]
          %v345 = vld [vmem:[#allocation9] sm:$0xff]
          %v346 = vld [vmem:[#allocation9 + $0x8] sm:$0xff]
          %v347 = vld [vmem:[#allocation9 + $0x10] sm:$0xff]
          %v348 = vld [vmem:[#allocation9 + $0x18] sm:$0xff]
          %v349 = vld [vmem:[#allocation9 + $0x20] sm:$0xff]
          %v350 = vld [vmem:[#allocation9 + $0x28] sm:$0xff]
          %v351 = vld [vmem:[#allocation9 + $0x30] sm:$0xff]
          %v352 = vld [vmem:[#allocation9 + $0x38] sm:$0xff]
          %v353 = vld [vmem:[#allocation9 + $0x40] sm:$0xff]
          %v354 = vld [vmem:[#allocation9 + $0x48] sm:$0xff]
          %v355 = vld [vmem:[#allocation9 + $0x50] sm:$0xff]
          %v356 = vld [vmem:[#allocation9 + $0x58] sm:$0xff]
          %v357 = vld [vmem:[#allocation9 + $0x60] sm:$0xff]
          %v358 = vld [vmem:[#allocation9 + $0x68] sm:$0xff]
          %v359 = vld [vmem:[#allocation9 + $0x70] sm:$0xff]
          %v360 = vld [vmem:[#allocation9 + $0x78] sm:$0xff]
          %v361 = vld [vmem:[#allocation9 + $0x80] sm:$0xff]
          %v362 = vld [vmem:[#allocation9 + $0x88] sm:$0xff]
          %v363 = vld [vmem:[#allocation9 + $0x90] sm:$0xff]
          %v364 = vld [vmem:[#allocation9 + $0x98] sm:$0xff]
          %v365 = vld [vmem:[#allocation9 + $0xa0] sm:$0xff]
          %v366 = vld [vmem:[#allocation9 + $0xa8] sm:$0xff]
          %v367 = vld [vmem:[#allocation9 + $0xb0] sm:$0xff]
          %v368 = vld [vmem:[#allocation9 + $0xb8] sm:$0xff]
          %v369 = vld [vmem:[#allocation9 + $0xc0] sm:$0xff]
          %v370 = vld [vmem:[#allocation9 + $0xc8] sm:$0xff]
          %v371 = vld [vmem:[#allocation9 + $0xd0] sm:$0xff]
          %v372 = vld [vmem:[#allocation9 + $0xd8] sm:$0xff]
          %v373 = vld [vmem:[#allocation9 + $0xe0] sm:$0xff]
          %v374 = vld [vmem:[#allocation9 + $0xe8] sm:$0xff]
          %v375 = vld [vmem:[#allocation9 + $0xf0] sm:$0xff]
          %v376 = vld [vmem:[#allocation9 + $0xf8] sm:$0xff]
          %v377 = vld [vmem:[#allocation9 + $0x100] sm:$0xff]
          %v378 = vld [vmem:[#allocation9 + $0x108] sm:$0xff]
          %v379 = vld [vmem:[#allocation9 + $0x110] sm:$0xff]
          %v380 = vld [vmem:[#allocation9 + $0x118] sm:$0xff]
          %v381 = vld [vmem:[#allocation9 + $0x120] sm:$0xff]
          %v382 = vld [vmem:[#allocation9 + $0x128] sm:$0xff]
          %v383 = vld [vmem:[#allocation9 + $0x130] sm:$0xff]
          %v384 = vld [vmem:[#allocation9 + $0x138] sm:$0xff]
          %v385 = vld [vmem:[#allocation9 + $0x140] sm:$0xff]
          %v386 = vld [vmem:[#allocation9 + $0x148] sm:$0xff]
          %v387 = vld [vmem:[#allocation9 + $0x150] sm:$0xff]
          %v388 = vld [vmem:[#allocation9 + $0x158] sm:$0xff]
          %v389 = vld [vmem:[#allocation9 + $0x160] sm:$0xff]
          %v390 = vld [vmem:[#allocation9 + $0x168] sm:$0xff]
          %v391 = vld [vmem:[#allocation9 + $0x170] sm:$0xff]
          %v392 = vld [vmem:[#allocation9 + $0x178] sm:$0xff]
          %v393 = vld [vmem:[#allocation9 + $0x180] sm:$0xff]
          %v394 = vld [vmem:[#allocation9 + $0x188] sm:$0xff]
          %v395 = vld [vmem:[#allocation9 + $0x190] sm:$0xff]
          %v396 = vld [vmem:[#allocation9 + $0x198] sm:$0xff]
          %v397 = vld [vmem:[#allocation9 + $0x1a0] sm:$0xff]
          %v398 = vld [vmem:[#allocation9 + $0x1a8] sm:$0xff]
          %v399 = vld [vmem:[#allocation9 + $0x1b0] sm:$0xff]
          %v400 = vld [vmem:[#allocation9 + $0x1b8] sm:$0xff]
          %v401 = vld [vmem:[#allocation9 + $0x1c0] sm:$0xff]
          %v402 = vld [vmem:[#allocation9 + $0x1c8] sm:$0xff]
          %v403 = vld [vmem:[#allocation9 + $0x1d0] sm:$0xff]
          %v404 = vld [vmem:[#allocation9 + $0x1d8] sm:$0xff]
          %v405 = vld [vmem:[#allocation9 + $0x1e0] sm:$0xff]
          %v406 = vld [vmem:[#allocation9 + $0x1e8] sm:$0xff]
          %v407 = vld [vmem:[#allocation9 + $0x1f0] sm:$0xff]
          %v408 = vld [vmem:[#allocation9 + $0x1f8] sm:$0xff]
          %v473 = vunpack.c.l.b16 %v345
          %v474 = vunpack.c.h.b16 %v345
          %v475 = vunpack.c.l.b16 %v346
          %v476 = vunpack.c.h.b16 %v346
          %v477 = vunpack.c.l.b16 %v347
          %v478 = vunpack.c.h.b16 %v347
          %v479 = vunpack.c.l.b16 %v348
          %v480 = vunpack.c.h.b16 %v348
          %v481 = vunpack.c.l.b16 %v349
          %v482 = vunpack.c.h.b16 %v349
          %v483 = vunpack.c.l.b16 %v350
          %v484 = vunpack.c.h.b16 %v350
          %v485 = vunpack.c.l.b16 %v351
          %v486 = vunpack.c.h.b16 %v351
          %v487 = vunpack.c.l.b16 %v352
          %v488 = vunpack.c.h.b16 %v352
          %v489 = vunpack.c.l.b16 %v353
          %v490 = vunpack.c.h.b16 %v353
          %v491 = vunpack.c.l.b16 %v354
          %v492 = vunpack.c.h.b16 %v354
          %v493 = vunpack.c.l.b16 %v355
          %v494 = vunpack.c.h.b16 %v355
          %v495 = vunpack.c.l.b16 %v356
          %v496 = vunpack.c.h.b16 %v356
          %v497 = vunpack.c.l.b16 %v357
          %v498 = vunpack.c.h.b16 %v357
          %v499 = vunpack.c.l.b16 %v358
          %v500 = vunpack.c.h.b16 %v358
          %v501 = vunpack.c.l.b16 %v359
          %v502 = vunpack.c.h.b16 %v359
          %v503 = vunpack.c.l.b16 %v360
          %v504 = vunpack.c.h.b16 %v360
          %v505 = vunpack.c.l.b16 %v361
          %v506 = vunpack.c.h.b16 %v361
          %v507 = vunpack.c.l.b16 %v362
          %v508 = vunpack.c.h.b16 %v362
          %v509 = vunpack.c.l.b16 %v363
          %v510 = vunpack.c.h.b16 %v363
          %v511 = vunpack.c.l.b16 %v364
          %v512 = vunpack.c.h.b16 %v364
          %v513 = vunpack.c.l.b16 %v365
          %v514 = vunpack.c.h.b16 %v365
          %v515 = vunpack.c.l.b16 %v366
          %v516 = vunpack.c.h.b16 %v366
          %v517 = vunpack.c.l.b16 %v367
          %v518 = vunpack.c.h.b16 %v367
          %v519 = vunpack.c.l.b16 %v368
          %v520 = vunpack.c.h.b16 %v368
          %v521 = vunpack.c.l.b16 %v369
          %v522 = vunpack.c.h.b16 %v369
          %v523 = vunpack.c.l.b16 %v370
          %v524 = vunpack.c.h.b16 %v370
          %v525 = vunpack.c.l.b16 %v371
          %v526 = vunpack.c.h.b16 %v371
          %v527 = vunpack.c.l.b16 %v372
          %v528 = vunpack.c.h.b16 %v372
          %v529 = vunpack.c.l.b16 %v373
          %v530 = vunpack.c.h.b16 %v373
          %v531 = vunpack.c.l.b16 %v374
          %v532 = vunpack.c.h.b16 %v374
          %v533 = vunpack.c.l.b16 %v375
          %v534 = vunpack.c.h.b16 %v375
          %v535 = vunpack.c.l.b16 %v376
          %v536 = vunpack.c.h.b16 %v376
          %v537 = vunpack.c.l.b16 %v377
          %v538 = vunpack.c.h.b16 %v377
          %v539 = vunpack.c.l.b16 %v378
          %v540 = vunpack.c.h.b16 %v378
          %v541 = vunpack.c.l.b16 %v379
          %v542 = vunpack.c.h.b16 %v379
          %v543 = vunpack.c.l.b16 %v380
          %v544 = vunpack.c.h.b16 %v380
          %v545 = vunpack.c.l.b16 %v381
          %v546 = vunpack.c.h.b16 %v381
          %v547 = vunpack.c.l.b16 %v382
          %v548 = vunpack.c.h.b16 %v382
          %v549 = vunpack.c.l.b16 %v383
          %v550 = vunpack.c.h.b16 %v383
          %v551 = vunpack.c.l.b16 %v384
          %v552 = vunpack.c.h.b16 %v384
          %v553 = vunpack.c.l.b16 %v385
          %v554 = vunpack.c.h.b16 %v385
          %v555 = vunpack.c.l.b16 %v386
          %v556 = vunpack.c.h.b16 %v386
          %v557 = vunpack.c.l.b16 %v387
          %v558 = vunpack.c.h.b16 %v387
          %v559 = vunpack.c.l.b16 %v388
          %v560 = vunpack.c.h.b16 %v388
          %v561 = vunpack.c.l.b16 %v389
          %v562 = vunpack.c.h.b16 %v389
          %v563 = vunpack.c.l.b16 %v390
          %v564 = vunpack.c.h.b16 %v390
          %v565 = vunpack.c.l.b16 %v391
          %v566 = vunpack.c.h.b16 %v391
          %v567 = vunpack.c.l.b16 %v392
          %v568 = vunpack.c.h.b16 %v392
          %v569 = vunpack.c.l.b16 %v393
          %v570 = vunpack.c.h.b16 %v393
          %v571 = vunpack.c.l.b16 %v394
          %v572 = vunpack.c.h.b16 %v394
          %v573 = vunpack.c.l.b16 %v395
          %v574 = vunpack.c.h.b16 %v395
          %v575 = vunpack.c.l.b16 %v396
          %v576 = vunpack.c.h.b16 %v396
          %v577 = vunpack.c.l.b16 %v397
          %v578 = vunpack.c.h.b16 %v397
          %v579 = vunpack.c.l.b16 %v398
          %v580 = vunpack.c.h.b16 %v398
          %v581 = vunpack.c.l.b16 %v399
          %v582 = vunpack.c.h.b16 %v399
          %v583 = vunpack.c.l.b16 %v400
          %v584 = vunpack.c.h.b16 %v400
          %v585 = vunpack.c.l.b16 %v401
          %v586 = vunpack.c.h.b16 %v401
          %v587 = vunpack.c.l.b16 %v402
          %v588 = vunpack.c.h.b16 %v402
          %v589 = vunpack.c.l.b16 %v403
          %v590 = vunpack.c.h.b16 %v403
          %v591 = vunpack.c.l.b16 %v404
          %v592 = vunpack.c.h.b16 %v404
          %v593 = vunpack.c.l.b16 %v405
          %v594 = vunpack.c.h.b16 %v405
          %v595 = vunpack.c.l.b16 %v406
          %v596 = vunpack.c.h.b16 %v406
          %v597 = vunpack.c.l.b16 %v407
          %v598 = vunpack.c.h.b16 %v407
          %v599 = vunpack.c.l.b16 %v408
          %v600 = vunpack.c.h.b16 %v408
          %v601 = vpack.c.b16 %v481, %v473
          %v602 = vpack.c.b16 %v482, %v474
          %v603 = vpack.c.b16 %v483, %v475
          %v604 = vpack.c.b16 %v484, %v476
          %v605 = vpack.c.b16 %v485, %v477
          %v606 = vpack.c.b16 %v486, %v478
          %v607 = vpack.c.b16 %v487, %v479
          %v608 = vpack.c.b16 %v488, %v480
          %v609 = vpack.c.b16 %v497, %v489
          %v610 = vpack.c.b16 %v498, %v490
          %v611 = vpack.c.b16 %v499, %v491
          %v612 = vpack.c.b16 %v500, %v492
          %v613 = vpack.c.b16 %v501, %v493
          %v614 = vpack.c.b16 %v502, %v494
          %v615 = vpack.c.b16 %v503, %v495
          %v616 = vpack.c.b16 %v504, %v496
          %v617 = vpack.c.b16 %v513, %v505
          %v618 = vpack.c.b16 %v514, %v506
          %v619 = vpack.c.b16 %v515, %v507
          %v620 = vpack.c.b16 %v516, %v508
          %v621 = vpack.c.b16 %v517, %v509
          %v622 = vpack.c.b16 %v518, %v510
          %v623 = vpack.c.b16 %v519, %v511
          %v624 = vpack.c.b16 %v520, %v512
          %v625 = vpack.c.b16 %v529, %v521
          %v626 = vpack.c.b16 %v530, %v522
          %v627 = vpack.c.b16 %v531, %v523
          %v628 = vpack.c.b16 %v532, %v524
          %v629 = vpack.c.b16 %v533, %v525
          %v630 = vpack.c.b16 %v534, %v526
          %v631 = vpack.c.b16 %v535, %v527
          %v632 = vpack.c.b16 %v536, %v528
          %v633 = vpack.c.b16 %v545, %v537
          %v634 = vpack.c.b16 %v546, %v538
          %v635 = vpack.c.b16 %v547, %v539
          %v636 = vpack.c.b16 %v548, %v540
          %v637 = vpack.c.b16 %v549, %v541
          %v638 = vpack.c.b16 %v550, %v542
          %v639 = vpack.c.b16 %v551, %v543
          %v640 = vpack.c.b16 %v552, %v544
          %v641 = vpack.c.b16 %v561, %v553
          %v642 = vpack.c.b16 %v562, %v554
          %v643 = vpack.c.b16 %v563, %v555
          %v644 = vpack.c.b16 %v564, %v556
          %v645 = vpack.c.b16 %v565, %v557
          %v646 = vpack.c.b16 %v566, %v558
          %v647 = vpack.c.b16 %v567, %v559
          %v648 = vpack.c.b16 %v568, %v560
          %v649 = vpack.c.b16 %v577, %v569
          %v650 = vpack.c.b16 %v578, %v570
          %v651 = vpack.c.b16 %v579, %v571
          %v652 = vpack.c.b16 %v580, %v572
          %v653 = vpack.c.b16 %v581, %v573
          %v654 = vpack.c.b16 %v582, %v574
          %v655 = vpack.c.b16 %v583, %v575
          %v656 = vpack.c.b16 %v584, %v576
          %v657 = vpack.c.b16 %v593, %v585
          %v658 = vpack.c.b16 %v594, %v586
          %v659 = vpack.c.b16 %v595, %v587
          %v660 = vpack.c.b16 %v596, %v588
          %v661 = vpack.c.b16 %v597, %v589
          %v662 = vpack.c.b16 %v598, %v590
          %v663 = vpack.c.b16 %v599, %v591
          %v664 = vpack.c.b16 %v600, %v592
          %729 = vmatprep.subr.bf16.mxu0 %v658
          %730 = vmatpush1.bf16.msra.mxu0 %v657
          %731 = vmatprep.subr.bf16.mxu0 %v650
          %732 = vmatpush1.bf16.msra.mxu0 %v649
          %733 = vmatprep.subr.bf16.mxu0 %v642
          %734 = vmatpush1.bf16.msra.mxu0 %v641
          %735 = vmatprep.subr.bf16.mxu0 %v634
          %736 = vmatpush1.bf16.msra.mxu0 %v633
          %737 = vmatprep.subr.bf16.mxu0 %v626
          %738 = vmatpush1.bf16.msra.mxu0 %v625
          %739 = vmatprep.subr.bf16.mxu0 %v618
          %740 = vmatpush1.bf16.msra.mxu0 %v617
          %741 = vmatprep.subr.bf16.mxu0 %v610
          %742 = vmatpush1.bf16.msra.mxu0 %v609
          %743 = vmatprep.subr.bf16.mxu0 %v602
          %744 = vmatpush1.bf16.msra.mxu0 %v601
          %745 = vmatprep.subr.bf16.mxu0 0
          %746 = vmatpush2.bf16.msra.mxu0 0
          %747 = vmatprep.subr.bf16.mxu0 0
          %748 = vmatpush2.bf16.msra.mxu0 0
          %749 = vmatprep.subr.bf16.mxu0 0
          %750 = vmatpush2.bf16.msra.mxu0 0
          %751 = vmatprep.subr.bf16.mxu0 0
          %752 = vmatpush2.bf16.msra.mxu0 0
          %753 = vmatprep.subr.bf16.mxu0 0
          %754 = vmatpush2.bf16.msra.mxu0 0
          %755 = vmatprep.subr.bf16.mxu0 0
          %756 = vmatpush2.bf16.msra.mxu0 0
          %757 = vmatprep.subr.bf16.mxu0 0
          %758 = vmatpush2.bf16.msra.mxu0 0
          %759 = vmatprep.subr.bf16.mxu0 0
          %760 = vmatpush2.bf16.msra.mxu0 0
          %761 = vmatprep.mubr.bf16.mxu0 0
          %762 = vmatmul.mubr.bf16.gmra.mxu0 %v344
          %v763 = vpop.f32.mrf.mxu0
          %v764 = vadd.f32 0.0, %v763
          %v765 = vpop.f32.mrf.mxu0
          %v766 = vadd.f32 0.0, %v765
          %v767 = vpop.f32.mrf.mxu0
          %v768 = vpop.f32.mrf.mxu0
          %769 = vdwg.mxu0
          %770 = vmatprep.subr.bf16.mxu0 %v660
          %771 = vmatpush1.bf16.msra.mxu0 %v659
          %772 = vmatprep.subr.bf16.mxu0 %v652
          %773 = vmatpush1.bf16.msra.mxu0 %v651
          %774 = vmatprep.subr.bf16.mxu0 %v644
          %775 = vmatpush1.bf16.msra.mxu0 %v643
          %776 = vmatprep.subr.bf16.mxu0 %v636
          %777 = vmatpush1.bf16.msra.mxu0 %v635
          %778 = vmatprep.subr.bf16.mxu0 %v628
          %779 = vmatpush1.bf16.msra.mxu0 %v627
          %780 = vmatprep.subr.bf16.mxu0 %v620
          %781 = vmatpush1.bf16.msra.mxu0 %v619
          %782 = vmatprep.subr.bf16.mxu0 %v612
          %783 = vmatpush1.bf16.msra.mxu0 %v611
          %784 = vmatprep.subr.bf16.mxu0 %v604
          %785 = vmatpush1.bf16.msra.mxu0 %v603
          %786 = vmatprep.subr.bf16.mxu0 0
          %787 = vmatpush2.bf16.msra.mxu0 0
          %788 = vmatprep.subr.bf16.mxu0 0
          %789 = vmatpush2.bf16.msra.mxu0 0
          %790 = vmatprep.subr.bf16.mxu0 0
          %791 = vmatpush2.bf16.msra.mxu0 0
          %792 = vmatprep.subr.bf16.mxu0 0
          %793 = vmatpush2.bf16.msra.mxu0 0
          %794 = vmatprep.subr.bf16.mxu0 0
          %795 = vmatpush2.bf16.msra.mxu0 0
          %796 = vmatprep.subr.bf16.mxu0 0
          %797 = vmatpush2.bf16.msra.mxu0 0
          %798 = vmatprep.subr.bf16.mxu0 0
          %799 = vmatpush2.bf16.msra.mxu0 0
          %800 = vmatprep.subr.bf16.mxu0 0
          %801 = vmatpush2.bf16.msra.mxu0 0
          %802 = vmatprep.mubr.bf16.mxu0 0
          %803 = vmatmul.mubr.bf16.gmra.mxu0 %v344
          %v804 = vpop.f32.mrf.mxu0
          %v805 = vadd.f32 0.0, %v804
          %v806 = vpop.f32.mrf.mxu0
          %v807 = vadd.f32 0.0, %v806
          %v808 = vpop.f32.mrf.mxu0
          %v809 = vpop.f32.mrf.mxu0
          %810 = vdwg.mxu0
          %811 = vmatprep.subr.bf16.mxu0 %v662
          %812 = vmatpush1.bf16.msra.mxu0 %v661
          %813 = vmatprep.subr.bf16.mxu0 %v654
          %814 = vmatpush1.bf16.msra.mxu0 %v653
          %815 = vmatprep.subr.bf16.mxu0 %v646
          %816 = vmatpush1.bf16.msra.mxu0 %v645
          %817 = vmatprep.subr.bf16.mxu0 %v638
          %818 = vmatpush1.bf16.msra.mxu0 %v637
          %819 = vmatprep.subr.bf16.mxu0 %v630
          %820 = vmatpush1.bf16.msra.mxu0 %v629
          %821 = vmatprep.subr.bf16.mxu0 %v622
          %822 = vmatpush1.bf16.msra.mxu0 %v621
          %823 = vmatprep.subr.bf16.mxu0 %v614
          %824 = vmatpush1.bf16.msra.mxu0 %v613
          %825 = vmatprep.subr.bf16.mxu0 %v606
          %826 = vmatpush1.bf16.msra.mxu0 %v605
          %827 = vmatprep.subr.bf16.mxu0 0
          %828 = vmatpush2.bf16.msra.mxu0 0
          %829 = vmatprep.subr.bf16.mxu0 0
          %830 = vmatpush2.bf16.msra.mxu0 0
          %831 = vmatprep.subr.bf16.mxu0 0
          %832 = vmatpush2.bf16.msra.mxu0 0
          %833 = vmatprep.subr.bf16.mxu0 0
          %834 = vmatpush2.bf16.msra.mxu0 0
          %835 = vmatprep.subr.bf16.mxu0 0
          %836 = vmatpush2.bf16.msra.mxu0 0
          %837 = vmatprep.subr.bf16.mxu0 0
          %838 = vmatpush2.bf16.msra.mxu0 0
          %839 = vmatprep.subr.bf16.mxu0 0
          %840 = vmatpush2.bf16.msra.mxu0 0
          %841 = vmatprep.subr.bf16.mxu0 0
          %842 = vmatpush2.bf16.msra.mxu0 0
          %843 = vmatprep.mubr.bf16.mxu0 0
          %844 = vmatmul.mubr.bf16.gmra.mxu0 %v344
          %v845 = vpop.f32.mrf.mxu0
          %v846 = vadd.f32 0.0, %v845
          %v847 = vpop.f32.mrf.mxu0
          %v848 = vadd.f32 0.0, %v847
          %v849 = vpop.f32.mrf.mxu0
          %v850 = vpop.f32.mrf.mxu0
          %851 = vdwg.mxu0
          %852 = vmatprep.subr.bf16.mxu0 %v664
          %853 = vmatpush1.bf16.msra.mxu0 %v663
          %854 = vmatprep.subr.bf16.mxu0 %v656
          %855 = vmatpush1.bf16.msra.mxu0 %v655
          %856 = vmatprep.subr.bf16.mxu0 %v648
          %857 = vmatpush1.bf16.msra.mxu0 %v647
          %858 = vmatprep.subr.bf16.mxu0 %v640
          %859 = vmatpush1.bf16.msra.mxu0 %v639
          %860 = vmatprep.subr.bf16.mxu0 %v632
          %861 = vmatpush1.bf16.msra.mxu0 %v631
          %862 = vmatprep.subr.bf16.mxu0 %v624
          %863 = vmatpush1.bf16.msra.mxu0 %v623
          %864 = vmatprep.subr.bf16.mxu0 %v616
          %865 = vmatpush1.bf16.msra.mxu0 %v615
          %866 = vmatprep.subr.bf16.mxu0 %v608
          %867 = vmatpush1.bf16.msra.mxu0 %v607
          %868 = vmatprep.subr.bf16.mxu0 0
          %869 = vmatpush2.bf16.msra.mxu0 0
          %870 = vmatprep.subr.bf16.mxu0 0
          %871 = vmatpush2.bf16.msra.mxu0 0
          %872 = vmatprep.subr.bf16.mxu0 0
          %873 = vmatpush2.bf16.msra.mxu0 0
          %874 = vmatprep.subr.bf16.mxu0 0
          %875 = vmatpush2.bf16.msra.mxu0 0
          %876 = vmatprep.subr.bf16.mxu0 0
          %877 = vmatpush2.bf16.msra.mxu0 0
          %878 = vmatprep.subr.bf16.mxu0 0
          %879 = vmatpush2.bf16.msra.mxu0 0
          %880 = vmatprep.subr.bf16.mxu0 0
          %881 = vmatpush2.bf16.msra.mxu0 0
          %882 = vmatprep.subr.bf16.mxu0 0
          %883 = vmatpush2.bf16.msra.mxu0 0
          %884 = vmatprep.mubr.bf16.mxu0 0
          %885 = vmatmul.mubr.bf16.gmra.mxu0 %v344
          %v886 = vpop.f32.mrf.mxu0
          %v887 = vadd.f32 0.0, %v886
          %v888 = vpop.f32.mrf.mxu0
          %v889 = vadd.f32 0.0, %v888
          %v890 = vpop.f32.mrf.mxu0
          %v891 = vpop.f32.mrf.mxu0
          %892 = vdwg.mxu0
          %v893 = vpack.c.bf16 %v764, %v764
          %v894 = vpack.c.bf16 %v766, %v766
          %v895 = vpack.c.bf16 %v805, %v805
          %v896 = vpack.c.bf16 %v807, %v807
          %v897 = vpack.c.bf16 %v846, %v846
          %v898 = vpack.c.bf16 %v848, %v848
          %v899 = vpack.c.bf16 %v887, %v887
          %v900 = vpack.c.bf16 %v889, %v889
          %v909 = vunpack.c.l.b16 %v893
          %v910 = vunpack.c.l.b16 %v894
          %v911 = vunpack.c.l.b16 %v895
          %v912 = vunpack.c.l.b16 %v896
          %v913 = vunpack.c.l.b16 %v897
          %v914 = vunpack.c.l.b16 %v898
          %v915 = vunpack.c.l.b16 %v899
          %v916 = vunpack.c.l.b16 %v900
          %v917 = vpack.c.b16 %v910, %v909
          %v918 = vpack.c.b16 %v912, %v911
          %v919 = vpack.c.b16 %v914, %v913
          %v920 = vpack.c.b16 %v916, %v915
          %925 = vst [vmem:[#allocation2] sm:$0xff] %v917
          %926 = vst [vmem:[#allocation2 + $0x8] sm:$0xff] %v918
          %927 = vst [vmem:[#allocation2 + $0x10] sm:$0xff] %v919
          %928 = vst [vmem:[#allocation2 + $0x18] sm:$0xff] %v920
          %v929 = vld [vmem:[#allocation10] sm:$0xff]
          %v930 = vld [vmem:[#allocation10 + $0x8] sm:$0xff]
          %v931 = vld [vmem:[#allocation10 + $0x10] sm:$0xff]
          %v932 = vld [vmem:[#allocation10 + $0x18] sm:$0xff]
          %v933 = vld [vmem:[#allocation10 + $0x20] sm:$0xff]
          %v934 = vld [vmem:[#allocation10 + $0x28] sm:$0xff]
          %v935 = vld [vmem:[#allocation10 + $0x30] sm:$0xff]
          %v936 = vld [vmem:[#allocation10 + $0x38] sm:$0xff]
          %v937 = vld [vmem:[#allocation10 + $0x40] sm:$0xff]
          %v938 = vld [vmem:[#allocation10 + $0x48] sm:$0xff]
          %v939 = vld [vmem:[#allocation10 + $0x50] sm:$0xff]
          %v940 = vld [vmem:[#allocation10 + $0x58] sm:$0xff]
          %v941 = vld [vmem:[#allocation10 + $0x60] sm:$0xff]
          %v942 = vld [vmem:[#allocation10 + $0x68] sm:$0xff]
          %v943 = vld [vmem:[#allocation10 + $0x70] sm:$0xff]
          %v944 = vld [vmem:[#allocation10 + $0x78] sm:$0xff]
          %v945 = vld [vmem:[#allocation10 + $0x80] sm:$0xff]
          %v946 = vld [vmem:[#allocation10 + $0x88] sm:$0xff]
          %v947 = vld [vmem:[#allocation10 + $0x90] sm:$0xff]
          %v948 = vld [vmem:[#allocation10 + $0x98] sm:$0xff]
          %v949 = vld [vmem:[#allocation10 + $0xa0] sm:$0xff]
          %v950 = vld [vmem:[#allocation10 + $0xa8] sm:$0xff]
          %v951 = vld [vmem:[#allocation10 + $0xb0] sm:$0xff]
          %v952 = vld [vmem:[#allocation10 + $0xb8] sm:$0xff]
          %v953 = vld [vmem:[#allocation10 + $0xc0] sm:$0xff]
          %v954 = vld [vmem:[#allocation10 + $0xc8] sm:$0xff]
          %v955 = vld [vmem:[#allocation10 + $0xd0] sm:$0xff]
          %v956 = vld [vmem:[#allocation10 + $0xd8] sm:$0xff]
          %v957 = vld [vmem:[#allocation10 + $0xe0] sm:$0xff]
          %v958 = vld [vmem:[#allocation10 + $0xe8] sm:$0xff]
          %v959 = vld [vmem:[#allocation10 + $0xf0] sm:$0xff]
          %v960 = vld [vmem:[#allocation10 + $0xf8] sm:$0xff]
          %v961 = vld [vmem:[#allocation10 + $0x100] sm:$0xff]
          %v962 = vld [vmem:[#allocation10 + $0x108] sm:$0xff]
          %v963 = vld [vmem:[#allocation10 + $0x110] sm:$0xff]
          %v964 = vld [vmem:[#allocation10 + $0x118] sm:$0xff]
          %v965 = vld [vmem:[#allocation10 + $0x120] sm:$0xff]
          %v966 = vld [vmem:[#allocation10 + $0x128] sm:$0xff]
          %v967 = vld [vmem:[#allocation10 + $0x130] sm:$0xff]
          %v968 = vld [vmem:[#allocation10 + $0x138] sm:$0xff]
          %v969 = vld [vmem:[#allocation10 + $0x140] sm:$0xff]
          %v970 = vld [vmem:[#allocation10 + $0x148] sm:$0xff]
          %v971 = vld [vmem:[#allocation10 + $0x150] sm:$0xff]
          %v972 = vld [vmem:[#allocation10 + $0x158] sm:$0xff]
          %v973 = vld [vmem:[#allocation10 + $0x160] sm:$0xff]
          %v974 = vld [vmem:[#allocation10 + $0x168] sm:$0xff]
          %v975 = vld [vmem:[#allocation10 + $0x170] sm:$0xff]
          %v976 = vld [vmem:[#allocation10 + $0x178] sm:$0xff]
          %v977 = vld [vmem:[#allocation10 + $0x180] sm:$0xff]
          %v978 = vld [vmem:[#allocation10 + $0x188] sm:$0xff]
          %v979 = vld [vmem:[#allocation10 + $0x190] sm:$0xff]
          %v980 = vld [vmem:[#allocation10 + $0x198] sm:$0xff]
          %v981 = vld [vmem:[#allocation10 + $0x1a0] sm:$0xff]
          %v982 = vld [vmem:[#allocation10 + $0x1a8] sm:$0xff]
          %v983 = vld [vmem:[#allocation10 + $0x1b0] sm:$0xff]
          %v984 = vld [vmem:[#allocation10 + $0x1b8] sm:$0xff]
          %v985 = vld [vmem:[#allocation10 + $0x1c0] sm:$0xff]
          %v986 = vld [vmem:[#allocation10 + $0x1c8] sm:$0xff]
          %v987 = vld [vmem:[#allocation10 + $0x1d0] sm:$0xff]
          %v988 = vld [vmem:[#allocation10 + $0x1d8] sm:$0xff]
          %v989 = vld [vmem:[#allocation10 + $0x1e0] sm:$0xff]
          %v990 = vld [vmem:[#allocation10 + $0x1e8] sm:$0xff]
          %v991 = vld [vmem:[#allocation10 + $0x1f0] sm:$0xff]
          %v992 = vld [vmem:[#allocation10 + $0x1f8] sm:$0xff]
          %v1057 = vunpack.c.l.b16 %v929
          %v1058 = vunpack.c.h.b16 %v929
          %v1059 = vunpack.c.l.b16 %v930
          %v1060 = vunpack.c.h.b16 %v930
          %v1061 = vunpack.c.l.b16 %v931
          %v1062 = vunpack.c.h.b16 %v931
          %v1063 = vunpack.c.l.b16 %v932
          %v1064 = vunpack.c.h.b16 %v932
          %v1065 = vunpack.c.l.b16 %v933
          %v1066 = vunpack.c.h.b16 %v933
          %v1067 = vunpack.c.l.b16 %v934
          %v1068 = vunpack.c.h.b16 %v934
          %v1069 = vunpack.c.l.b16 %v935
          %v1070 = vunpack.c.h.b16 %v935
          %v1071 = vunpack.c.l.b16 %v936
          %v1072 = vunpack.c.h.b16 %v936
          %v1073 = vunpack.c.l.b16 %v937
          %v1074 = vunpack.c.h.b16 %v937
          %v1075 = vunpack.c.l.b16 %v938
          %v1076 = vunpack.c.h.b16 %v938
          %v1077 = vunpack.c.l.b16 %v939
          %v1078 = vunpack.c.h.b16 %v939
          %v1079 = vunpack.c.l.b16 %v940
          %v1080 = vunpack.c.h.b16 %v940
          %v1081 = vunpack.c.l.b16 %v941
          %v1082 = vunpack.c.h.b16 %v941
          %v1083 = vunpack.c.l.b16 %v942
          %v1084 = vunpack.c.h.b16 %v942
          %v1085 = vunpack.c.l.b16 %v943
          %v1086 = vunpack.c.h.b16 %v943
          %v1087 = vunpack.c.l.b16 %v944
          %v1088 = vunpack.c.h.b16 %v944
          %v1089 = vunpack.c.l.b16 %v945
          %v1090 = vunpack.c.h.b16 %v945
          %v1091 = vunpack.c.l.b16 %v946
          %v1092 = vunpack.c.h.b16 %v946
          %v1093 = vunpack.c.l.b16 %v947
          %v1094 = vunpack.c.h.b16 %v947
          %v1095 = vunpack.c.l.b16 %v948
          %v1096 = vunpack.c.h.b16 %v948
          %v1097 = vunpack.c.l.b16 %v949
          %v1098 = vunpack.c.h.b16 %v949
          %v1099 = vunpack.c.l.b16 %v950
          %v1100 = vunpack.c.h.b16 %v950
          %v1101 = vunpack.c.l.b16 %v951
          %v1102 = vunpack.c.h.b16 %v951
          %v1103 = vunpack.c.l.b16 %v952
          %v1104 = vunpack.c.h.b16 %v952
          %v1105 = vunpack.c.l.b16 %v953
          %v1106 = vunpack.c.h.b16 %v953
          %v1107 = vunpack.c.l.b16 %v954
          %v1108 = vunpack.c.h.b16 %v954
          %v1109 = vunpack.c.l.b16 %v955
          %v1110 = vunpack.c.h.b16 %v955
          %v1111 = vunpack.c.l.b16 %v956
          %v1112 = vunpack.c.h.b16 %v956
          %v1113 = vunpack.c.l.b16 %v957
          %v1114 = vunpack.c.h.b16 %v957
          %v1115 = vunpack.c.l.b16 %v958
          %v1116 = vunpack.c.h.b16 %v958
          %v1117 = vunpack.c.l.b16 %v959
          %v1118 = vunpack.c.h.b16 %v959
          %v1119 = vunpack.c.l.b16 %v960
          %v1120 = vunpack.c.h.b16 %v960
          %v1121 = vunpack.c.l.b16 %v961
          %v1122 = vunpack.c.h.b16 %v961
          %v1123 = vunpack.c.l.b16 %v962
          %v1124 = vunpack.c.h.b16 %v962
          %v1125 = vunpack.c.l.b16 %v963
          %v1126 = vunpack.c.h.b16 %v963
          %v1127 = vunpack.c.l.b16 %v964
          %v1128 = vunpack.c.h.b16 %v964
          %v1129 = vunpack.c.l.b16 %v965
          %v1130 = vunpack.c.h.b16 %v965
          %v1131 = vunpack.c.l.b16 %v966
          %v1132 = vunpack.c.h.b16 %v966
          %v1133 = vunpack.c.l.b16 %v967
          %v1134 = vunpack.c.h.b16 %v967
          %v1135 = vunpack.c.l.b16 %v968
          %v1136 = vunpack.c.h.b16 %v968
          %v1137 = vunpack.c.l.b16 %v969
          %v1138 = vunpack.c.h.b16 %v969
          %v1139 = vunpack.c.l.b16 %v970
          %v1140 = vunpack.c.h.b16 %v970
          %v1141 = vunpack.c.l.b16 %v971
          %v1142 = vunpack.c.h.b16 %v971
          %v1143 = vunpack.c.l.b16 %v972
          %v1144 = vunpack.c.h.b16 %v972
          %v1145 = vunpack.c.l.b16 %v973
          %v1146 = vunpack.c.h.b16 %v973
          %v1147 = vunpack.c.l.b16 %v974
          %v1148 = vunpack.c.h.b16 %v974
          %v1149 = vunpack.c.l.b16 %v975
          %v1150 = vunpack.c.h.b16 %v975
          %v1151 = vunpack.c.l.b16 %v976
          %v1152 = vunpack.c.h.b16 %v976
          %v1153 = vunpack.c.l.b16 %v977
          %v1154 = vunpack.c.h.b16 %v977
          %v1155 = vunpack.c.l.b16 %v978
          %v1156 = vunpack.c.h.b16 %v978
          %v1157 = vunpack.c.l.b16 %v979
          %v1158 = vunpack.c.h.b16 %v979
          %v1159 = vunpack.c.l.b16 %v980
          %v1160 = vunpack.c.h.b16 %v980
          %v1161 = vunpack.c.l.b16 %v981
          %v1162 = vunpack.c.h.b16 %v981
          %v1163 = vunpack.c.l.b16 %v982
          %v1164 = vunpack.c.h.b16 %v982
          %v1165 = vunpack.c.l.b16 %v983
          %v1166 = vunpack.c.h.b16 %v983
          %v1167 = vunpack.c.l.b16 %v984
          %v1168 = vunpack.c.h.b16 %v984
          %v1169 = vunpack.c.l.b16 %v985
          %v1170 = vunpack.c.h.b16 %v985
          %v1171 = vunpack.c.l.b16 %v986
          %v1172 = vunpack.c.h.b16 %v986
          %v1173 = vunpack.c.l.b16 %v987
          %v1174 = vunpack.c.h.b16 %v987
          %v1175 = vunpack.c.l.b16 %v988
          %v1176 = vunpack.c.h.b16 %v988
          %v1177 = vunpack.c.l.b16 %v989
          %v1178 = vunpack.c.h.b16 %v989
          %v1179 = vunpack.c.l.b16 %v990
          %v1180 = vunpack.c.h.b16 %v990
          %v1181 = vunpack.c.l.b16 %v991
          %v1182 = vunpack.c.h.b16 %v991
          %v1183 = vunpack.c.l.b16 %v992
          %v1184 = vunpack.c.h.b16 %v992
          %v1185 = vpack.c.b16 %v1065, %v1057
          %v1186 = vpack.c.b16 %v1066, %v1058
          %v1187 = vpack.c.b16 %v1067, %v1059
          %v1188 = vpack.c.b16 %v1068, %v1060
          %v1189 = vpack.c.b16 %v1069, %v1061
          %v1190 = vpack.c.b16 %v1070, %v1062
          %v1191 = vpack.c.b16 %v1071, %v1063
          %v1192 = vpack.c.b16 %v1072, %v1064
          %v1193 = vpack.c.b16 %v1081, %v1073
          %v1194 = vpack.c.b16 %v1082, %v1074
          %v1195 = vpack.c.b16 %v1083, %v1075
          %v1196 = vpack.c.b16 %v1084, %v1076
          %v1197 = vpack.c.b16 %v1085, %v1077
          %v1198 = vpack.c.b16 %v1086, %v1078
          %v1199 = vpack.c.b16 %v1087, %v1079
          %v1200 = vpack.c.b16 %v1088, %v1080
          %v1201 = vpack.c.b16 %v1097, %v1089
          %v1202 = vpack.c.b16 %v1098, %v1090
          %v1203 = vpack.c.b16 %v1099, %v1091
          %v1204 = vpack.c.b16 %v1100, %v1092
          %v1205 = vpack.c.b16 %v1101, %v1093
          %v1206 = vpack.c.b16 %v1102, %v1094
          %v1207 = vpack.c.b16 %v1103, %v1095
          %v1208 = vpack.c.b16 %v1104, %v1096
          %v1209 = vpack.c.b16 %v1113, %v1105
          %v1210 = vpack.c.b16 %v1114, %v1106
          %v1211 = vpack.c.b16 %v1115, %v1107
          %v1212 = vpack.c.b16 %v1116, %v1108
          %v1213 = vpack.c.b16 %v1117, %v1109
          %v1214 = vpack.c.b16 %v1118, %v1110
          %v1215 = vpack.c.b16 %v1119, %v1111
          %v1216 = vpack.c.b16 %v1120, %v1112
          %v1217 = vpack.c.b16 %v1129, %v1121
          %v1218 = vpack.c.b16 %v1130, %v1122
          %v1219 = vpack.c.b16 %v1131, %v1123
          %v1220 = vpack.c.b16 %v1132, %v1124
          %v1221 = vpack.c.b16 %v1133, %v1125
          %v1222 = vpack.c.b16 %v1134, %v1126
          %v1223 = vpack.c.b16 %v1135, %v1127
          %v1224 = vpack.c.b16 %v1136, %v1128
          %v1225 = vpack.c.b16 %v1145, %v1137
          %v1226 = vpack.c.b16 %v1146, %v1138
          %v1227 = vpack.c.b16 %v1147, %v1139
          %v1228 = vpack.c.b16 %v1148, %v1140
          %v1229 = vpack.c.b16 %v1149, %v1141
          %v1230 = vpack.c.b16 %v1150, %v1142
          %v1231 = vpack.c.b16 %v1151, %v1143
          %v1232 = vpack.c.b16 %v1152, %v1144
          %v1233 = vpack.c.b16 %v1161, %v1153
          %v1234 = vpack.c.b16 %v1162, %v1154
          %v1235 = vpack.c.b16 %v1163, %v1155
          %v1236 = vpack.c.b16 %v1164, %v1156
          %v1237 = vpack.c.b16 %v1165, %v1157
          %v1238 = vpack.c.b16 %v1166, %v1158
          %v1239 = vpack.c.b16 %v1167, %v1159
          %v1240 = vpack.c.b16 %v1168, %v1160
          %v1241 = vpack.c.b16 %v1177, %v1169
          %v1242 = vpack.c.b16 %v1178, %v1170
          %v1243 = vpack.c.b16 %v1179, %v1171
          %v1244 = vpack.c.b16 %v1180, %v1172
          %v1245 = vpack.c.b16 %v1181, %v1173
          %v1246 = vpack.c.b16 %v1182, %v1174
          %v1247 = vpack.c.b16 %v1183, %v1175
          %v1248 = vpack.c.b16 %v1184, %v1176
          %1313 = vmatprep.subr.bf16.mxu0 %v1242
          %1314 = vmatpush1.bf16.msra.mxu0 %v1241
          %1315 = vmatprep.subr.bf16.mxu0 %v1234
          %1316 = vmatpush1.bf16.msra.mxu0 %v1233
          %1317 = vmatprep.subr.bf16.mxu0 %v1226
          %1318 = vmatpush1.bf16.msra.mxu0 %v1225
          %1319 = vmatprep.subr.bf16.mxu0 %v1218
          %1320 = vmatpush1.bf16.msra.mxu0 %v1217
          %1321 = vmatprep.subr.bf16.mxu0 %v1210
          %1322 = vmatpush1.bf16.msra.mxu0 %v1209
          %1323 = vmatprep.subr.bf16.mxu0 %v1202
          %1324 = vmatpush1.bf16.msra.mxu0 %v1201
          %1325 = vmatprep.subr.bf16.mxu0 %v1194
          %1326 = vmatpush1.bf16.msra.mxu0 %v1193
          %1327 = vmatprep.subr.bf16.mxu0 %v1186
          %1328 = vmatpush1.bf16.msra.mxu0 %v1185
          %1329 = vmatprep.subr.bf16.mxu0 0
          %1330 = vmatpush2.bf16.msra.mxu0 0
          %1331 = vmatprep.subr.bf16.mxu0 0
          %1332 = vmatpush2.bf16.msra.mxu0 0
          %1333 = vmatprep.subr.bf16.mxu0 0
          %1334 = vmatpush2.bf16.msra.mxu0 0
          %1335 = vmatprep.subr.bf16.mxu0 0
          %1336 = vmatpush2.bf16.msra.mxu0 0
          %1337 = vmatprep.subr.bf16.mxu0 0
          %1338 = vmatpush2.bf16.msra.mxu0 0
          %1339 = vmatprep.subr.bf16.mxu0 0
          %1340 = vmatpush2.bf16.msra.mxu0 0
          %1341 = vmatprep.subr.bf16.mxu0 0
          %1342 = vmatpush2.bf16.msra.mxu0 0
          %1343 = vmatprep.subr.bf16.mxu0 0
          %1344 = vmatpush2.bf16.msra.mxu0 0
          %1345 = vmatprep.mubr.bf16.mxu0 0
          %1346 = vmatmul.mubr.bf16.gmra.mxu0 %v344
          %v1347 = vpop.f32.mrf.mxu0
          %v1348 = vadd.f32 0.0, %v1347
          %v1349 = vpop.f32.mrf.mxu0
          %v1350 = vadd.f32 0.0, %v1349
          %v1351 = vpop.f32.mrf.mxu0
          %v1352 = vpop.f32.mrf.mxu0
          %1353 = vdwg.mxu0
          %1354 = vmatprep.subr.bf16.mxu0 %v1244
          %1355 = vmatpush1.bf16.msra.mxu0 %v1243
          %1356 = vmatprep.subr.bf16.mxu0 %v1236
          %1357 = vmatpush1.bf16.msra.mxu0 %v1235
          %1358 = vmatprep.subr.bf16.mxu0 %v1228
          %1359 = vmatpush1.bf16.msra.mxu0 %v1227
          %1360 = vmatprep.subr.bf16.mxu0 %v1220
          %1361 = vmatpush1.bf16.msra.mxu0 %v1219
          %1362 = vmatprep.subr.bf16.mxu0 %v1212
          %1363 = vmatpush1.bf16.msra.mxu0 %v1211
          %1364 = vmatprep.subr.bf16.mxu0 %v1204
          %1365 = vmatpush1.bf16.msra.mxu0 %v1203
          %1366 = vmatprep.subr.bf16.mxu0 %v1196
          %1367 = vmatpush1.bf16.msra.mxu0 %v1195
          %1368 = vmatprep.subr.bf16.mxu0 %v1188
          %1369 = vmatpush1.bf16.msra.mxu0 %v1187
          %1370 = vmatprep.subr.bf16.mxu0 0
          %1371 = vmatpush2.bf16.msra.mxu0 0
          %1372 = vmatprep.subr.bf16.mxu0 0
          %1373 = vmatpush2.bf16.msra.mxu0 0
          %1374 = vmatprep.subr.bf16.mxu0 0
          %1375 = vmatpush2.bf16.msra.mxu0 0
          %1376 = vmatprep.subr.bf16.mxu0 0
          %1377 = vmatpush2.bf16.msra.mxu0 0
          %1378 = vmatprep.subr.bf16.mxu0 0
          %1379 = vmatpush2.bf16.msra.mxu0 0
          %1380 = vmatprep.subr.bf16.mxu0 0
          %1381 = vmatpush2.bf16.msra.mxu0 0
          %1382 = vmatprep.subr.bf16.mxu0 0
          %1383 = vmatpush2.bf16.msra.mxu0 0
          %1384 = vmatprep.subr.bf16.mxu0 0
          %1385 = vmatpush2.bf16.msra.mxu0 0
          %1386 = vmatprep.mubr.bf16.mxu0 0
          %1387 = vmatmul.mubr.bf16.gmra.mxu0 %v344
          %v1388 = vpop.f32.mrf.mxu0
          %v1389 = vadd.f32 0.0, %v1388
          %v1390 = vpop.f32.mrf.mxu0
          %v1391 = vadd.f32 0.0, %v1390
          %v1392 = vpop.f32.mrf.mxu0
          %v1393 = vpop.f32.mrf.mxu0
          %1394 = vdwg.mxu0
          %1395 = vmatprep.subr.bf16.mxu0 %v1246
          %1396 = vmatpush1.bf16.msra.mxu0 %v1245
          %1397 = vmatprep.subr.bf16.mxu0 %v1238
          %1398 = vmatpush1.bf16.msra.mxu0 %v1237
          %1399 = vmatprep.subr.bf16.mxu0 %v1230
          %1400 = vmatpush1.bf16.msra.mxu0 %v1229
          %1401 = vmatprep.subr.bf16.mxu0 %v1222
          %1402 = vmatpush1.bf16.msra.mxu0 %v1221
          %1403 = vmatprep.subr.bf16.mxu0 %v1214
          %1404 = vmatpush1.bf16.msra.mxu0 %v1213
          %1405 = vmatprep.subr.bf16.mxu0 %v1206
          %1406 = vmatpush1.bf16.msra.mxu0 %v1205
          %1407 = vmatprep.subr.bf16.mxu0 %v1198
          %1408 = vmatpush1.bf16.msra.mxu0 %v1197
          %1409 = vmatprep.subr.bf16.mxu0 %v1190
          %1410 = vmatpush1.bf16.msra.mxu0 %v1189
          %1411 = vmatprep.subr.bf16.mxu0 0
          %1412 = vmatpush2.bf16.msra.mxu0 0
          %1413 = vmatprep.subr.bf16.mxu0 0
          %1414 = vmatpush2.bf16.msra.mxu0 0
          %1415 = vmatprep.subr.bf16.mxu0 0
          %1416 = vmatpush2.bf16.msra.mxu0 0
          %1417 = vmatprep.subr.bf16.mxu0 0
          %1418 = vmatpush2.bf16.msra.mxu0 0
          %1419 = vmatprep.subr.bf16.mxu0 0
          %1420 = vmatpush2.bf16.msra.mxu0 0
          %1421 = vmatprep.subr.bf16.mxu0 0
          %1422 = vmatpush2.bf16.msra.mxu0 0
          %1423 = vmatprep.subr.bf16.mxu0 0
          %1424 = vmatpush2.bf16.msra.mxu0 0
          %1425 = vmatprep.subr.bf16.mxu0 0
          %1426 = vmatpush2.bf16.msra.mxu0 0
          %1427 = vmatprep.mubr.bf16.mxu0 0
          %1428 = vmatmul.mubr.bf16.gmra.mxu0 %v344
          %v1429 = vpop.f32.mrf.mxu0
          %v1430 = vadd.f32 0.0, %v1429
          %v1431 = vpop.f32.mrf.mxu0
          %v1432 = vadd.f32 0.0, %v1431
          %v1433 = vpop.f32.mrf.mxu0
          %v1434 = vpop.f32.mrf.mxu0
          %1435 = vdwg.mxu0
          %1436 = vmatprep.subr.bf16.mxu0 %v1248
          %1437 = vmatpush1.bf16.msra.mxu0 %v1247
          %1438 = vmatprep.subr.bf16.mxu0 %v1240
          %1439 = vmatpush1.bf16.msra.mxu0 %v1239
          %1440 = vmatprep.subr.bf16.mxu0 %v1232
          %1441 = vmatpush1.bf16.msra.mxu0 %v1231
          %1442 = vmatprep.subr.bf16.mxu0 %v1224
          %1443 = vmatpush1.bf16.msra.mxu0 %v1223
          %1444 = vmatprep.subr.bf16.mxu0 %v1216
          %1445 = vmatpush1.bf16.msra.mxu0 %v1215
          %1446 = vmatprep.subr.bf16.mxu0 %v1208
          %1447 = vmatpush1.bf16.msra.mxu0 %v1207
          %1448 = vmatprep.subr.bf16.mxu0 %v1200
          %1449 = vmatpush1.bf16.msra.mxu0 %v1199
          %1450 = vmatprep.subr.bf16.mxu0 %v1192
          %1451 = vmatpush1.bf16.msra.mxu0 %v1191
          %1452 = vmatprep.subr.bf16.mxu0 0
          %1453 = vmatpush2.bf16.msra.mxu0 0
          %1454 = vmatprep.subr.bf16.mxu0 0
          %1455 = vmatpush2.bf16.msra.mxu0 0
          %1456 = vmatprep.subr.bf16.mxu0 0
          %1457 = vmatpush2.bf16.msra.mxu0 0
          %1458 = vmatprep.subr.bf16.mxu0 0
          %1459 = vmatpush2.bf16.msra.mxu0 0
          %1460 = vmatprep.subr.bf16.mxu0 0
          %1461 = vmatpush2.bf16.msra.mxu0 0
          %1462 = vmatprep.subr.bf16.mxu0 0
          %1463 = vmatpush2.bf16.msra.mxu0 0
          %1464 = vmatprep.subr.bf16.mxu0 0
          %1465 = vmatpush2.bf16.msra.mxu0 0
          %1466 = vmatprep.subr.bf16.mxu0 0
          %1467 = vmatpush2.bf16.msra.mxu0 0
          %1468 = vmatprep.mubr.bf16.mxu0 0
          %1469 = vmatmul.mubr.bf16.gmra.mxu0 %v344
          %v1470 = vpop.f32.mrf.mxu0
          %v1471 = vadd.f32 0.0, %v1470
          %v1472 = vpop.f32.mrf.mxu0
          %v1473 = vadd.f32 0.0, %v1472
          %v1474 = vpop.f32.mrf.mxu0
          %v1475 = vpop.f32.mrf.mxu0
          %1476 = vdwg.mxu0
          %v1477 = vpack.c.bf16 %v1348, %v1348
          %v1478 = vpack.c.bf16 %v1350, %v1350
          %v1479 = vpack.c.bf16 %v1389, %v1389
          %v1480 = vpack.c.bf16 %v1391, %v1391
          %v1481 = vpack.c.bf16 %v1430, %v1430
          %v1482 = vpack.c.bf16 %v1432, %v1432
          %v1483 = vpack.c.bf16 %v1471, %v1471
          %v1484 = vpack.c.bf16 %v1473, %v1473
          %v1493 = vunpack.c.l.b16 %v1477
          %v1494 = vunpack.c.l.b16 %v1478
          %v1495 = vunpack.c.l.b16 %v1479
          %v1496 = vunpack.c.l.b16 %v1480
          %v1497 = vunpack.c.l.b16 %v1481
          %v1498 = vunpack.c.l.b16 %v1482
          %v1499 = vunpack.c.l.b16 %v1483
          %v1500 = vunpack.c.l.b16 %v1484
          %v1501 = vpack.c.b16 %v1494, %v1493
          %v1502 = vpack.c.b16 %v1496, %v1495
          %v1503 = vpack.c.b16 %v1498, %v1497
          %v1504 = vpack.c.b16 %v1500, %v1499
          %1509 = vst [vmem:[#allocation3] sm:$0xff] %v1501
          %1510 = vst [vmem:[#allocation3 + $0x8] sm:$0xff] %v1502
          %1511 = vst [vmem:[#allocation3 + $0x10] sm:$0xff] %v1503
          %1512 = vst [vmem:[#allocation3 + $0x18] sm:$0xff] %v1504
        $region68: #{tpu_custom_call.1} parent=43 // pred_fallthru
          _
        %s1513 = smul.u32 %s30, 8
        %s1514 = sshra.s32 %s1513, 3
        %s1515 = sand.u32 %s1513, 7
        %s1516 = smul.addr %s1514, 4
        %s1517 = scalar_lea.vmem %s294, %s1516 [#allocation4]
        %v1518 = vld [vmem:[%s1517] sm:$0xf]
        %v1519 = vld [vmem:[#allocation7] sm:$0xff]
        %v1520 = vld [vmem:[#allocation7 + $0x8] sm:$0xff]
        %v1521 = vld [vmem:[#allocation7 + $0x10] sm:$0xff]
        %v1522 = vld [vmem:[#allocation7 + $0x18] sm:$0xff]
        %v1523 = vld [vmem:[#allocation7 + $0x20] sm:$0xff]
        %v1524 = vld [vmem:[#allocation7 + $0x28] sm:$0xff]
        %v1525 = vld [vmem:[#allocation7 + $0x30] sm:$0xff]
        %v1526 = vld [vmem:[#allocation7 + $0x38] sm:$0xff]
        %v1527 = vld [vmem:[#allocation7 + $0x40] sm:$0xff]
        %v1528 = vld [vmem:[#allocation7 + $0x48] sm:$0xff]
        %v1529 = vld [vmem:[#allocation7 + $0x50] sm:$0xff]
        %v1530 = vld [vmem:[#allocation7 + $0x58] sm:$0xff]
        %v1531 = vld [vmem:[#allocation7 + $0x60] sm:$0xff]
        %v1532 = vld [vmem:[#allocation7 + $0x68] sm:$0xff]
        %v1533 = vld [vmem:[#allocation7 + $0x70] sm:$0xff]
        %v1534 = vld [vmem:[#allocation7 + $0x78] sm:$0xff]
        %v1535 = vld [vmem:[#allocation7 + $0x80] sm:$0xff]
        %v1536 = vld [vmem:[#allocation7 + $0x88] sm:$0xff]
        %v1537 = vld [vmem:[#allocation7 + $0x90] sm:$0xff]
        %v1538 = vld [vmem:[#allocation7 + $0x98] sm:$0xff]
        %v1539 = vld [vmem:[#allocation7 + $0xa0] sm:$0xff]
        %v1540 = vld [vmem:[#allocation7 + $0xa8] sm:$0xff]
        %v1541 = vld [vmem:[#allocation7 + $0xb0] sm:$0xff]
        %v1542 = vld [vmem:[#allocation7 + $0xb8] sm:$0xff]
        %v1543 = vld [vmem:[#allocation7 + $0xc0] sm:$0xff]
        %v1544 = vld [vmem:[#allocation7 + $0xc8] sm:$0xff]
        %v1545 = vld [vmem:[#allocation7 + $0xd0] sm:$0xff]
        %v1546 = vld [vmem:[#allocation7 + $0xd8] sm:$0xff]
        %v1547 = vld [vmem:[#allocation7 + $0xe0] sm:$0xff]
        %v1548 = vld [vmem:[#allocation7 + $0xe8] sm:$0xff]
        %v1549 = vld [vmem:[#allocation7 + $0xf0] sm:$0xff]
        %v1550 = vld [vmem:[#allocation7 + $0xf8] sm:$0xff]
        %v1551 = vld [vmem:[#allocation7 + $0x100] sm:$0xff]
        %v1552 = vld [vmem:[#allocation7 + $0x108] sm:$0xff]
        %v1553 = vld [vmem:[#allocation7 + $0x110] sm:$0xff]
        %v1554 = vld [vmem:[#allocation7 + $0x118] sm:$0xff]
        %v1555 = vld [vmem:[#allocation7 + $0x120] sm:$0xff]
        %v1556 = vld [vmem:[#allocation7 + $0x128] sm:$0xff]
        %v1557 = vld [vmem:[#allocation7 + $0x130] sm:$0xff]
        %v1558 = vld [vmem:[#allocation7 + $0x138] sm:$0xff]
        %v1559 = vld [vmem:[#allocation7 + $0x140] sm:$0xff]
        %v1560 = vld [vmem:[#allocation7 + $0x148] sm:$0xff]
        %v1561 = vld [vmem:[#allocation7 + $0x150] sm:$0xff]
        %v1562 = vld [vmem:[#allocation7 + $0x158] sm:$0xff]
        %v1563 = vld [vmem:[#allocation7 + $0x160] sm:$0xff]
        %v1564 = vld [vmem:[#allocation7 + $0x168] sm:$0xff]
        %v1565 = vld [vmem:[#allocation7 + $0x170] sm:$0xff]
        %v1566 = vld [vmem:[#allocation7 + $0x178] sm:$0xff]
        %v1567 = vld [vmem:[#allocation7 + $0x180] sm:$0xff]
        %v1568 = vld [vmem:[#allocation7 + $0x188] sm:$0xff]
        %v1569 = vld [vmem:[#allocation7 + $0x190] sm:$0xff]
        %v1570 = vld [vmem:[#allocation7 + $0x198] sm:$0xff]
        %v1571 = vld [vmem:[#allocation7 + $0x1a0] sm:$0xff]
        %v1572 = vld [vmem:[#allocation7 + $0x1a8] sm:$0xff]
        %v1573 = vld [vmem:[#allocation7 + $0x1b0] sm:$0xff]
        %v1574 = vld [vmem:[#allocation7 + $0x1b8] sm:$0xff]
        %v1575 = vld [vmem:[#allocation7 + $0x1c0] sm:$0xff]
        %v1576 = vld [vmem:[#allocation7 + $0x1c8] sm:$0xff]
        %v1577 = vld [vmem:[#allocation7 + $0x1d0] sm:$0xff]
        %v1578 = vld [vmem:[#allocation7 + $0x1d8] sm:$0xff]
        %v1579 = vld [vmem:[#allocation7 + $0x1e0] sm:$0xff]
        %v1580 = vld [vmem:[#allocation7 + $0x1e8] sm:$0xff]
        %v1581 = vld [vmem:[#allocation7 + $0x1f0] sm:$0xff]
        %v1582 = vld [vmem:[#allocation7 + $0x1f8] sm:$0xff]
        %v1647 = vunpack.c.l.b16 %v1519
        %v1648 = vunpack.c.h.b16 %v1519
        %v1649 = vunpack.c.l.b16 %v1520
        %v1650 = vunpack.c.h.b16 %v1520
        %v1651 = vunpack.c.l.b16 %v1521
        %v1652 = vunpack.c.h.b16 %v1521
        %v1653 = vunpack.c.l.b16 %v1522
        %v1654 = vunpack.c.h.b16 %v1522
        %v1655 = vunpack.c.l.b16 %v1523
        %v1656 = vunpack.c.h.b16 %v1523
        %v1657 = vunpack.c.l.b16 %v1524
        %v1658 = vunpack.c.h.b16 %v1524
        %v1659 = vunpack.c.l.b16 %v1525
        %v1660 = vunpack.c.h.b16 %v1525
        %v1661 = vunpack.c.l.b16 %v1526
        %v1662 = vunpack.c.h.b16 %v1526
        %v1663 = vunpack.c.l.b16 %v1527
        %v1664 = vunpack.c.h.b16 %v1527
        %v1665 = vunpack.c.l.b16 %v1528
        %v1666 = vunpack.c.h.b16 %v1528
        %v1667 = vunpack.c.l.b16 %v1529
        %v1668 = vunpack.c.h.b16 %v1529
        %v1669 = vunpack.c.l.b16 %v1530
        %v1670 = vunpack.c.h.b16 %v1530
        %v1671 = vunpack.c.l.b16 %v1531
        %v1672 = vunpack.c.h.b16 %v1531
        %v1673 = vunpack.c.l.b16 %v1532
        %v1674 = vunpack.c.h.b16 %v1532
        %v1675 = vunpack.c.l.b16 %v1533
        %v1676 = vunpack.c.h.b16 %v1533
        %v1677 = vunpack.c.l.b16 %v1534
        %v1678 = vunpack.c.h.b16 %v1534
        %v1679 = vunpack.c.l.b16 %v1535
        %v1680 = vunpack.c.h.b16 %v1535
        %v1681 = vunpack.c.l.b16 %v1536
        %v1682 = vunpack.c.h.b16 %v1536
        %v1683 = vunpack.c.l.b16 %v1537
        %v1684 = vunpack.c.h.b16 %v1537
        %v1685 = vunpack.c.l.b16 %v1538
        %v1686 = vunpack.c.h.b16 %v1538
        %v1687 = vunpack.c.l.b16 %v1539
        %v1688 = vunpack.c.h.b16 %v1539
        %v1689 = vunpack.c.l.b16 %v1540
        %v1690 = vunpack.c.h.b16 %v1540
        %v1691 = vunpack.c.l.b16 %v1541
        %v1692 = vunpack.c.h.b16 %v1541
        %v1693 = vunpack.c.l.b16 %v1542
        %v1694 = vunpack.c.h.b16 %v1542
        %v1695 = vunpack.c.l.b16 %v1543
        %v1696 = vunpack.c.h.b16 %v1543
        %v1697 = vunpack.c.l.b16 %v1544
        %v1698 = vunpack.c.h.b16 %v1544
        %v1699 = vunpack.c.l.b16 %v1545
        %v1700 = vunpack.c.h.b16 %v1545
        %v1701 = vunpack.c.l.b16 %v1546
        %v1702 = vunpack.c.h.b16 %v1546
        %v1703 = vunpack.c.l.b16 %v1547
        %v1704 = vunpack.c.h.b16 %v1547
        %v1705 = vunpack.c.l.b16 %v1548
        %v1706 = vunpack.c.h.b16 %v1548
        %v1707 = vunpack.c.l.b16 %v1549
        %v1708 = vunpack.c.h.b16 %v1549
        %v1709 = vunpack.c.l.b16 %v1550
        %v1710 = vunpack.c.h.b16 %v1550
        %v1711 = vunpack.c.l.b16 %v1551
        %v1712 = vunpack.c.h.b16 %v1551
        %v1713 = vunpack.c.l.b16 %v1552
        %v1714 = vunpack.c.h.b16 %v1552
        %v1715 = vunpack.c.l.b16 %v1553
        %v1716 = vunpack.c.h.b16 %v1553
        %v1717 = vunpack.c.l.b16 %v1554
        %v1718 = vunpack.c.h.b16 %v1554
        %v1719 = vunpack.c.l.b16 %v1555
        %v1720 = vunpack.c.h.b16 %v1555
        %v1721 = vunpack.c.l.b16 %v1556
        %v1722 = vunpack.c.h.b16 %v1556
        %v1723 = vunpack.c.l.b16 %v1557
        %v1724 = vunpack.c.h.b16 %v1557
        %v1725 = vunpack.c.l.b16 %v1558
        %v1726 = vunpack.c.h.b16 %v1558
        %v1727 = vunpack.c.l.b16 %v1559
        %v1728 = vunpack.c.h.b16 %v1559
        %v1729 = vunpack.c.l.b16 %v1560
        %v1730 = vunpack.c.h.b16 %v1560
        %v1731 = vunpack.c.l.b16 %v1561
        %v1732 = vunpack.c.h.b16 %v1561
        %v1733 = vunpack.c.l.b16 %v1562
        %v1734 = vunpack.c.h.b16 %v1562
        %v1735 = vunpack.c.l.b16 %v1563
        %v1736 = vunpack.c.h.b16 %v1563
        %v1737 = vunpack.c.l.b16 %v1564
        %v1738 = vunpack.c.h.b16 %v1564
        %v1739 = vunpack.c.l.b16 %v1565
        %v1740 = vunpack.c.h.b16 %v1565
        %v1741 = vunpack.c.l.b16 %v1566
        %v1742 = vunpack.c.h.b16 %v1566
        %v1743 = vunpack.c.l.b16 %v1567
        %v1744 = vunpack.c.h.b16 %v1567
        %v1745 = vunpack.c.l.b16 %v1568
        %v1746 = vunpack.c.h.b16 %v1568
        %v1747 = vunpack.c.l.b16 %v1569
        %v1748 = vunpack.c.h.b16 %v1569
        %v1749 = vunpack.c.l.b16 %v1570
        %v1750 = vunpack.c.h.b16 %v1570
        %v1751 = vunpack.c.l.b16 %v1571
        %v1752 = vunpack.c.h.b16 %v1571
        %v1753 = vunpack.c.l.b16 %v1572
        %v1754 = vunpack.c.h.b16 %v1572
        %v1755 = vunpack.c.l.b16 %v1573
        %v1756 = vunpack.c.h.b16 %v1573
        %v1757 = vunpack.c.l.b16 %v1574
        %v1758 = vunpack.c.h.b16 %v1574
        %v1759 = vunpack.c.l.b16 %v1575
        %v1760 = vunpack.c.h.b16 %v1575
        %v1761 = vunpack.c.l.b16 %v1576
        %v1762 = vunpack.c.h.b16 %v1576
        %v1763 = vunpack.c.l.b16 %v1577
        %v1764 = vunpack.c.h.b16 %v1577
        %v1765 = vunpack.c.l.b16 %v1578
        %v1766 = vunpack.c.h.b16 %v1578
        %v1767 = vunpack.c.l.b16 %v1579
        %v1768 = vunpack.c.h.b16 %v1579
        %v1769 = vunpack.c.l.b16 %v1580
        %v1770 = vunpack.c.h.b16 %v1580
        %v1771 = vunpack.c.l.b16 %v1581
        %v1772 = vunpack.c.h.b16 %v1581
        %v1773 = vunpack.c.l.b16 %v1582
        %v1774 = vunpack.c.h.b16 %v1582
        %v1775 = vpack.c.b16 %v1655, %v1647
        %v1776 = vpack.c.b16 %v1656, %v1648
        %v1777 = vpack.c.b16 %v1657, %v1649
        %v1778 = vpack.c.b16 %v1658, %v1650
        %v1779 = vpack.c.b16 %v1659, %v1651
        %v1780 = vpack.c.b16 %v1660, %v1652
        %v1781 = vpack.c.b16 %v1661, %v1653
        %v1782 = vpack.c.b16 %v1662, %v1654
        %v1783 = vpack.c.b16 %v1671, %v1663
        %v1784 = vpack.c.b16 %v1672, %v1664
        %v1785 = vpack.c.b16 %v1673, %v1665
        %v1786 = vpack.c.b16 %v1674, %v1666
        %v1787 = vpack.c.b16 %v1675, %v1667
        %v1788 = vpack.c.b16 %v1676, %v1668
        %v1789 = vpack.c.b16 %v1677, %v1669
        %v1790 = vpack.c.b16 %v1678, %v1670
        %v1791 = vpack.c.b16 %v1687, %v1679
        %v1792 = vpack.c.b16 %v1688, %v1680
        %v1793 = vpack.c.b16 %v1689, %v1681
        %v1794 = vpack.c.b16 %v1690, %v1682
        %v1795 = vpack.c.b16 %v1691, %v1683
        %v1796 = vpack.c.b16 %v1692, %v1684
        %v1797 = vpack.c.b16 %v1693, %v1685
        %v1798 = vpack.c.b16 %v1694, %v1686
        %v1799 = vpack.c.b16 %v1703, %v1695
        %v1800 = vpack.c.b16 %v1704, %v1696
        %v1801 = vpack.c.b16 %v1705, %v1697
        %v1802 = vpack.c.b16 %v1706, %v1698
        %v1803 = vpack.c.b16 %v1707, %v1699
        %v1804 = vpack.c.b16 %v1708, %v1700
        %v1805 = vpack.c.b16 %v1709, %v1701
        %v1806 = vpack.c.b16 %v1710, %v1702
        %v1807 = vpack.c.b16 %v1719, %v1711
        %v1808 = vpack.c.b16 %v1720, %v1712
        %v1809 = vpack.c.b16 %v1721, %v1713
        %v1810 = vpack.c.b16 %v1722, %v1714
        %v1811 = vpack.c.b16 %v1723, %v1715
        %v1812 = vpack.c.b16 %v1724, %v1716
        %v1813 = vpack.c.b16 %v1725, %v1717
        %v1814 = vpack.c.b16 %v1726, %v1718
        %v1815 = vpack.c.b16 %v1735, %v1727
        %v1816 = vpack.c.b16 %v1736, %v1728
        %v1817 = vpack.c.b16 %v1737, %v1729
        %v1818 = vpack.c.b16 %v1738, %v1730
        %v1819 = vpack.c.b16 %v1739, %v1731
        %v1820 = vpack.c.b16 %v1740, %v1732
        %v1821 = vpack.c.b16 %v1741, %v1733
        %v1822 = vpack.c.b16 %v1742, %v1734
        %v1823 = vpack.c.b16 %v1751, %v1743
        %v1824 = vpack.c.b16 %v1752, %v1744
        %v1825 = vpack.c.b16 %v1753, %v1745
        %v1826 = vpack.c.b16 %v1754, %v1746
        %v1827 = vpack.c.b16 %v1755, %v1747
        %v1828 = vpack.c.b16 %v1756, %v1748
        %v1829 = vpack.c.b16 %v1757, %v1749
        %v1830 = vpack.c.b16 %v1758, %v1750
        %v1831 = vpack.c.b16 %v1767, %v1759
        %v1832 = vpack.c.b16 %v1768, %v1760
        %v1833 = vpack.c.b16 %v1769, %v1761
        %v1834 = vpack.c.b16 %v1770, %v1762
        %v1835 = vpack.c.b16 %v1771, %v1763
        %v1836 = vpack.c.b16 %v1772, %v1764
        %v1837 = vpack.c.b16 %v1773, %v1765
        %v1838 = vpack.c.b16 %v1774, %v1766
        %1903 = vmatprep.subr.bf16.mxu0 %v1832
        %1904 = vmatpush1.bf16.msra.mxu0 %v1831
        %1905 = vmatprep.subr.bf16.mxu0 %v1824
        %1906 = vmatpush1.bf16.msra.mxu0 %v1823
        %1907 = vmatprep.subr.bf16.mxu0 %v1816
        %1908 = vmatpush1.bf16.msra.mxu0 %v1815
        %1909 = vmatprep.subr.bf16.mxu0 %v1808
        %1910 = vmatpush1.bf16.msra.mxu0 %v1807
        %1911 = vmatprep.subr.bf16.mxu0 %v1800
        %1912 = vmatpush1.bf16.msra.mxu0 %v1799
        %1913 = vmatprep.subr.bf16.mxu0 %v1792
        %1914 = vmatpush1.bf16.msra.mxu0 %v1791
        %1915 = vmatprep.subr.bf16.mxu0 %v1784
        %1916 = vmatpush1.bf16.msra.mxu0 %v1783
        %1917 = vmatprep.subr.bf16.mxu0 %v1776
        %1918 = vmatpush1.bf16.msra.mxu0 %v1775
        %1919 = vmatprep.subr.bf16.mxu0 0
        %1920 = vmatpush2.bf16.msra.mxu0 0
        %1921 = vmatprep.subr.bf16.mxu0 0
        %1922 = vmatpush2.bf16.msra.mxu0 0
        %1923 = vmatprep.subr.bf16.mxu0 0
        %1924 = vmatpush2.bf16.msra.mxu0 0
        %1925 = vmatprep.subr.bf16.mxu0 0
        %1926 = vmatpush2.bf16.msra.mxu0 0
        %1927 = vmatprep.subr.bf16.mxu0 0
        %1928 = vmatpush2.bf16.msra.mxu0 0
        %1929 = vmatprep.subr.bf16.mxu0 0
        %1930 = vmatpush2.bf16.msra.mxu0 0
        %1931 = vmatprep.subr.bf16.mxu0 0
        %1932 = vmatpush2.bf16.msra.mxu0 0
        %1933 = vmatprep.subr.bf16.mxu0 0
        %1934 = vmatpush2.bf16.msra.mxu0 0
        %1935 = vmatprep.mubr.bf16.mxu0 0
        %1936 = vmatmul.mubr.bf16.gmra.mxu0 %v1518
        %v1937 = vpop.f32.mrf.mxu0
        %v1938 = vadd.f32 0.0, %v1937
        %v1939 = vpop.f32.mrf.mxu0
        %v1940 = vadd.f32 0.0, %v1939
        %v1941 = vpop.f32.mrf.mxu0
        %v1942 = vpop.f32.mrf.mxu0
        %1943 = vdwg.mxu0
        %1944 = vmatprep.subr.bf16.mxu0 %v1834
        %1945 = vmatpush1.bf16.msra.mxu0 %v1833
        %1946 = vmatprep.subr.bf16.mxu0 %v1826
        %1947 = vmatpush1.bf16.msra.mxu0 %v1825
        %1948 = vmatprep.subr.bf16.mxu0 %v1818
        %1949 = vmatpush1.bf16.msra.mxu0 %v1817
        %1950 = vmatprep.subr.bf16.mxu0 %v1810
        %1951 = vmatpush1.bf16.msra.mxu0 %v1809
        %1952 = vmatprep.subr.bf16.mxu0 %v1802
        %1953 = vmatpush1.bf16.msra.mxu0 %v1801
        %1954 = vmatprep.subr.bf16.mxu0 %v1794
        %1955 = vmatpush1.bf16.msra.mxu0 %v1793
        %1956 = vmatprep.subr.bf16.mxu0 %v1786
        %1957 = vmatpush1.bf16.msra.mxu0 %v1785
        %1958 = vmatprep.subr.bf16.mxu0 %v1778
        %1959 = vmatpush1.bf16.msra.mxu0 %v1777
        %1960 = vmatprep.subr.bf16.mxu0 0
        %1961 = vmatpush2.bf16.msra.mxu0 0
        %1962 = vmatprep.subr.bf16.mxu0 0
        %1963 = vmatpush2.bf16.msra.mxu0 0
        %1964 = vmatprep.subr.bf16.mxu0 0
        %1965 = vmatpush2.bf16.msra.mxu0 0
        %1966 = vmatprep.subr.bf16.mxu0 0
        %1967 = vmatpush2.bf16.msra.mxu0 0
        %1968 = vmatprep.subr.bf16.mxu0 0
        %1969 = vmatpush2.bf16.msra.mxu0 0
        %1970 = vmatprep.subr.bf16.mxu0 0
        %1971 = vmatpush2.bf16.msra.mxu0 0
        %1972 = vmatprep.subr.bf16.mxu0 0
        %1973 = vmatpush2.bf16.msra.mxu0 0
        %1974 = vmatprep.subr.bf16.mxu0 0
        %1975 = vmatpush2.bf16.msra.mxu0 0
        %1976 = vmatprep.mubr.bf16.mxu0 0
        %1977 = vmatmul.mubr.bf16.gmra.mxu0 %v1518
        %v1978 = vpop.f32.mrf.mxu0
        %v1979 = vadd.f32 0.0, %v1978
        %v1980 = vpop.f32.mrf.mxu0
        %v1981 = vadd.f32 0.0, %v1980
        %v1982 = vpop.f32.mrf.mxu0
        %v1983 = vpop.f32.mrf.mxu0
        %1984 = vdwg.mxu0
        %1985 = vmatprep.subr.bf16.mxu0 %v1836
        %1986 = vmatpush1.bf16.msra.mxu0 %v1835
        %1987 = vmatprep.subr.bf16.mxu0 %v1828
        %1988 = vmatpush1.bf16.msra.mxu0 %v1827
        %1989 = vmatprep.subr.bf16.mxu0 %v1820
        %1990 = vmatpush1.bf16.msra.mxu0 %v1819
        %1991 = vmatprep.subr.bf16.mxu0 %v1812
        %1992 = vmatpush1.bf16.msra.mxu0 %v1811
        %1993 = vmatprep.subr.bf16.mxu0 %v1804
        %1994 = vmatpush1.bf16.msra.mxu0 %v1803
        %1995 = vmatprep.subr.bf16.mxu0 %v1796
        %1996 = vmatpush1.bf16.msra.mxu0 %v1795
        %1997 = vmatprep.subr.bf16.mxu0 %v1788
        %1998 = vmatpush1.bf16.msra.mxu0 %v1787
        %1999 = vmatprep.subr.bf16.mxu0 %v1780
        %2000 = vmatpush1.bf16.msra.mxu0 %v1779
        %2001 = vmatprep.subr.bf16.mxu0 0
        %2002 = vmatpush2.bf16.msra.mxu0 0
        %2003 = vmatprep.subr.bf16.mxu0 0
        %2004 = vmatpush2.bf16.msra.mxu0 0
        %2005 = vmatprep.subr.bf16.mxu0 0
        %2006 = vmatpush2.bf16.msra.mxu0 0
        %2007 = vmatprep.subr.bf16.mxu0 0
        %2008 = vmatpush2.bf16.msra.mxu0 0
        %2009 = vmatprep.subr.bf16.mxu0 0
        %2010 = vmatpush2.bf16.msra.mxu0 0
        %2011 = vmatprep.subr.bf16.mxu0 0
        %2012 = vmatpush2.bf16.msra.mxu0 0
        %2013 = vmatprep.subr.bf16.mxu0 0
        %2014 = vmatpush2.bf16.msra.mxu0 0
        %2015 = vmatprep.subr.bf16.mxu0 0
        %2016 = vmatpush2.bf16.msra.mxu0 0
        %2017 = vmatprep.mubr.bf16.mxu0 0
        %2018 = vmatmul.mubr.bf16.gmra.mxu0 %v1518
        %v2019 = vpop.f32.mrf.mxu0
        %v2020 = vadd.f32 0.0, %v2019
        %v2021 = vpop.f32.mrf.mxu0
        %v2022 = vadd.f32 0.0, %v2021
        %v2023 = vpop.f32.mrf.mxu0
        %v2024 = vpop.f32.mrf.mxu0
        %2025 = vdwg.mxu0
        %2026 = vmatprep.subr.bf16.mxu0 %v1838
        %2027 = vmatpush1.bf16.msra.mxu0 %v1837
        %2028 = vmatprep.subr.bf16.mxu0 %v1830
        %2029 = vmatpush1.bf16.msra.mxu0 %v1829
        %2030 = vmatprep.subr.bf16.mxu0 %v1822
        %2031 = vmatpush1.bf16.msra.mxu0 %v1821
        %2032 = vmatprep.subr.bf16.mxu0 %v1814
        %2033 = vmatpush1.bf16.msra.mxu0 %v1813
        %2034 = vmatprep.subr.bf16.mxu0 %v1806
        %2035 = vmatpush1.bf16.msra.mxu0 %v1805
        %2036 = vmatprep.subr.bf16.mxu0 %v1798
        %2037 = vmatpush1.bf16.msra.mxu0 %v1797
        %2038 = vmatprep.subr.bf16.mxu0 %v1790
        %2039 = vmatpush1.bf16.msra.mxu0 %v1789
        %2040 = vmatprep.subr.bf16.mxu0 %v1782
        %2041 = vmatpush1.bf16.msra.mxu0 %v1781
        %2042 = vmatprep.subr.bf16.mxu0 0
        %2043 = vmatpush2.bf16.msra.mxu0 0
        %2044 = vmatprep.subr.bf16.mxu0 0
        %2045 = vmatpush2.bf16.msra.mxu0 0
        %2046 = vmatprep.subr.bf16.mxu0 0
        %2047 = vmatpush2.bf16.msra.mxu0 0
        %2048 = vmatprep.subr.bf16.mxu0 0
        %2049 = vmatpush2.bf16.msra.mxu0 0
        %2050 = vmatprep.subr.bf16.mxu0 0
        %2051 = vmatpush2.bf16.msra.mxu0 0
        %2052 = vmatprep.subr.bf16.mxu0 0
        %2053 = vmatpush2.bf16.msra.mxu0 0
        %2054 = vmatprep.subr.bf16.mxu0 0
        %2055 = vmatpush2.bf16.msra.mxu0 0
        %2056 = vmatprep.subr.bf16.mxu0 0
        %2057 = vmatpush2.bf16.msra.mxu0 0
        %2058 = vmatprep.mubr.bf16.mxu0 0
        %2059 = vmatmul.mubr.bf16.gmra.mxu0 %v1518
        %v2060 = vpop.f32.mrf.mxu0
        %v2061 = vadd.f32 0.0, %v2060
        %v2062 = vpop.f32.mrf.mxu0
        %v2063 = vadd.f32 0.0, %v2062
        %v2064 = vpop.f32.mrf.mxu0
        %v2065 = vpop.f32.mrf.mxu0
        %2066 = vdwg.mxu0
        %v2067 = vpack.c.bf16 %v1938, %v1938
        %v2068 = vpack.c.bf16 %v1940, %v1940
        %v2069 = vpack.c.bf16 %v1979, %v1979
        %v2070 = vpack.c.bf16 %v1981, %v1981
        %v2071 = vpack.c.bf16 %v2020, %v2020
        %v2072 = vpack.c.bf16 %v2022, %v2022
        %v2073 = vpack.c.bf16 %v2061, %v2061
        %v2074 = vpack.c.bf16 %v2063, %v2063
        %v2075 = vld [vmem:[#allocation2] sm:$0xf]
        %v2076 = vld [vmem:[#allocation3] sm:$0xf]
        %2077 = vmatprep.subr.bf16.mxu0 0
        %2078 = vmatpush1.bf16.xpose.msra.mxu0 0
        %2079 = vmatprep.subr.bf16.mxu0 0
        %2080 = vmatpush1.bf16.xpose.msra.mxu0 0
        %2081 = vmatprep.subr.bf16.mxu0 0
        %2082 = vmatpush1.bf16.xpose.msra.mxu0 0
        %2083 = vmatprep.subr.bf16.mxu0 0
        %2084 = vmatpush1.bf16.xpose.msra.mxu0 0
        %2085 = vmatprep.subr.bf16.mxu0 0
        %2086 = vmatpush1.bf16.xpose.msra.mxu0 0
        %2087 = vmatprep.subr.bf16.mxu0 0
        %2088 = vmatpush1.bf16.xpose.msra.mxu0 0
        %2089 = vmatprep.subr.bf16.mxu0 0
        %2090 = vmatpush1.bf16.xpose.msra.mxu0 0
        %2091 = vmatprep.subr.bf16.mxu0 0
        %2092 = vmatpush1.bf16.xpose.msra.mxu0 %v2075
        %2093 = vmatprep.subr.bf16.mxu0 0
        %2094 = vmatpush2.bf16.xpose.msra.mxu0 0
        %2095 = vmatprep.subr.bf16.mxu0 0
        %2096 = vmatpush2.bf16.xpose.msra.mxu0 0
        %2097 = vmatprep.subr.bf16.mxu0 0
        %2098 = vmatpush2.bf16.xpose.msra.mxu0 0
        %2099 = vmatprep.subr.bf16.mxu0 0
        %2100 = vmatpush2.bf16.xpose.msra.mxu0 0
        %2101 = vmatprep.subr.bf16.mxu0 0
        %2102 = vmatpush2.bf16.xpose.msra.mxu0 0
        %2103 = vmatprep.subr.bf16.mxu0 0
        %2104 = vmatpush2.bf16.xpose.msra.mxu0 0
        %2105 = vmatprep.subr.bf16.mxu0 0
        %2106 = vmatpush2.bf16.xpose.msra.mxu0 0
        %2107 = vmatprep.subr.bf16.mxu0 0
        %2108 = vmatpush2.bf16.xpose.msra.mxu0 0
        %2109 = vmatprep.mubr.bf16.mxu0 0
        %2110 = vmatmul.mubr.bf16.gmra.mxu0 %v2067
        %v2111 = vpop.f32.mrf.mxu0
        %v2112 = vadd.f32 0.0, %v2111
        %v2113 = vpop.f32.mrf.mxu0
        %v2114 = vpop.f32.mrf.mxu0
        %v2115 = vpop.f32.mrf.mxu0
        %2116 = vdwg.mxu0
        %vm2117 = vcmask 64512
        %v2118 = vsel %vm2117, %v2112, -inf
        %2119 = vmax.xlane.f32.xlu0 %v2118
        %v2120 = vpop.xlane.xlu0 %2119
        %v2121 = vsub.f32 %v2112, %v2120
        %v2122 = vmul.f32 %v2121, 1.442695
        %v2123 = vpow.pop %v2122
        %v2124 = vsel %vm2117, %v2123, 0.0
        %2125 = vadd.xlane.f32.xlu0 %v2124
        %v2126 = vpop.xlane.xlu0 %2125
        %v2127 = vrcp.pop %v2126
        %v2128 = vpack.c.bf16 %v2123, %v2123
        %v2130 = vsel %vm2117, %v2128, 0
        %vm2132 = vcmask 1043456
        %v2134 = vsel %vm2132, %v2076, 0
        %2136 = vmatprep.subr.bf16.mxu0 0
        %2137 = vmatpush1.bf16.msra.mxu0 0
        %2138 = vmatprep.subr.bf16.mxu0 0
        %2139 = vmatpush1.bf16.msra.mxu0 0
        %2140 = vmatprep.subr.bf16.mxu0 0
        %2141 = vmatpush1.bf16.msra.mxu0 0
        %2142 = vmatprep.subr.bf16.mxu0 0
        %2143 = vmatpush1.bf16.msra.mxu0 0
        %2144 = vmatprep.subr.bf16.mxu0 0
        %2145 = vmatpush1.bf16.msra.mxu0 0
        %2146 = vmatprep.subr.bf16.mxu0 0
        %2147 = vmatpush1.bf16.msra.mxu0 0
        %2148 = vmatprep.subr.bf16.mxu0 0
        %2149 = vmatpush1.bf16.msra.mxu0 0
        %2150 = vmatprep.subr.bf16.mxu0 0
        %2151 = vmatpush1.bf16.msra.mxu0 %v2134
        %2152 = vmatprep.subr.bf16.mxu0 0
        %2153 = vmatpush2.bf16.msra.mxu0 0
        %2154 = vmatprep.subr.bf16.mxu0 0
        %2155 = vmatpush2.bf16.msra.mxu0 0
        %2156 = vmatprep.subr.bf16.mxu0 0
        %2157 = vmatpush2.bf16.msra.mxu0 0
        %2158 = vmatprep.subr.bf16.mxu0 0
        %2159 = vmatpush2.bf16.msra.mxu0 0
        %2160 = vmatprep.subr.bf16.mxu0 0
        %2161 = vmatpush2.bf16.msra.mxu0 0
        %2162 = vmatprep.subr.bf16.mxu0 0
        %2163 = vmatpush2.bf16.msra.mxu0 0
        %2164 = vmatprep.subr.bf16.mxu0 0
        %2165 = vmatpush2.bf16.msra.mxu0 0
        %2166 = vmatprep.subr.bf16.mxu0 0
        %2167 = vmatpush2.bf16.msra.mxu0 0
        %2168 = vmatprep.mubr.bf16.mxu0 0
        %2169 = vmatmul.mubr.bf16.gmra.mxu0 %v2130
        %v2170 = vpop.f32.mrf.mxu0
        %v2171 = vadd.f32 0.0, %v2170
        %v2172 = vpop.f32.mrf.mxu0
        %v2173 = vpop.f32.mrf.mxu0
        %v2174 = vpop.f32.mrf.mxu0
        %2175 = vdwg.mxu0
        %v2176 = vmul.f32 %v2171, %v2127
        %v2177 = vld [vmem:[#allocation2 + $0x4] sm:$0xf]
        %v2178 = vld [vmem:[#allocation3 + $0x4] sm:$0xf]
        %2179 = vmatprep.subr.bf16.mxu0 0
        %2180 = vmatpush1.bf16.xpose.msra.mxu0 0
        %2181 = vmatprep.subr.bf16.mxu0 0
        %2182 = vmatpush1.bf16.xpose.msra.mxu0 0
        %2183 = vmatprep.subr.bf16.mxu0 0
        %2184 = vmatpush1.bf16.xpose.msra.mxu0 0
        %2185 = vmatprep.subr.bf16.mxu0 0
        %2186 = vmatpush1.bf16.xpose.msra.mxu0 0
        %2187 = vmatprep.subr.bf16.mxu0 0
        %2188 = vmatpush1.bf16.xpose.msra.mxu0 0
        %2189 = vmatprep.subr.bf16.mxu0 0
        %2190 = vmatpush1.bf16.xpose.msra.mxu0 0
        %2191 = vmatprep.subr.bf16.mxu0 0
        %2192 = vmatpush1.bf16.xpose.msra.mxu0 0
        %2193 = vmatprep.subr.bf16.mxu0 0
        %2194 = vmatpush1.bf16.xpose.msra.mxu0 %v2177
        %2195 = vmatprep.subr.bf16.mxu0 0
        %2196 = vmatpush2.bf16.xpose.msra.mxu0 0
        %2197 = vmatprep.subr.bf16.mxu0 0
        %2198 = vmatpush2.bf16.xpose.msra.mxu0 0
        %2199 = vmatprep.subr.bf16.mxu0 0
        %2200 = vmatpush2.bf16.xpose.msra.mxu0 0
        %2201 = vmatprep.subr.bf16.mxu0 0
        %2202 = vmatpush2.bf16.xpose.msra.mxu0 0
        %2203 = vmatprep.subr.bf16.mxu0 0
        %2204 = vmatpush2.bf16.xpose.msra.mxu0 0
        %2205 = vmatprep.subr.bf16.mxu0 0
        %2206 = vmatpush2.bf16.xpose.msra.mxu0 0
        %2207 = vmatprep.subr.bf16.mxu0 0
        %2208 = vmatpush2.bf16.xpose.msra.mxu0 0
        %2209 = vmatprep.subr.bf16.mxu0 0
        %2210 = vmatpush2.bf16.xpose.msra.mxu0 0
        %2211 = vmatprep.mubr.bf16.mxu0 0
        %2212 = vmatmul.mubr.bf16.gmra.mxu0 %v2068
        %v2213 = vpop.f32.mrf.mxu0
        %v2214 = vadd.f32 0.0, %v2213
        %v2215 = vpop.f32.mrf.mxu0
        %v2216 = vpop.f32.mrf.mxu0
        %v2217 = vpop.f32.mrf.mxu0
        %2218 = vdwg.mxu0
        %v2219 = vsel %vm2117, %v2214, -inf
        %2220 = vmax.xlane.f32.xlu0 %v2219
        %v2221 = vpop.xlane.xlu0 %2220
        %v2222 = vsub.f32 %v2214, %v2221
        %v2223 = vmul.f32 %v2222, 1.442695
        %v2224 = vpow.pop %v2223
        %v2225 = vsel %vm2117, %v2224, 0.0
        %2226 = vadd.xlane.f32.xlu0 %v2225
        %v2227 = vpop.xlane.xlu0 %2226
        %v2228 = vrcp.pop %v2227
        %v2229 = vpack.c.bf16 %v2224, %v2224
        %v2231 = vsel %vm2117, %v2229, 0
        %v2234 = vsel %vm2132, %v2178, 0
        %2236 = vmatprep.subr.bf16.mxu0 0
        %2237 = vmatpush1.bf16.msra.mxu0 0
        %2238 = vmatprep.subr.bf16.mxu0 0
        %2239 = vmatpush1.bf16.msra.mxu0 0
        %2240 = vmatprep.subr.bf16.mxu0 0
        %2241 = vmatpush1.bf16.msra.mxu0 0
        %2242 = vmatprep.subr.bf16.mxu0 0
        %2243 = vmatpush1.bf16.msra.mxu0 0
        %2244 = vmatprep.subr.bf16.mxu0 0
        %2245 = vmatpush1.bf16.msra.mxu0 0
        %2246 = vmatprep.subr.bf16.mxu0 0
        %2247 = vmatpush1.bf16.msra.mxu0 0
        %2248 = vmatprep.subr.bf16.mxu0 0
        %2249 = vmatpush1.bf16.msra.mxu0 0
        %2250 = vmatprep.subr.bf16.mxu0 0
        %2251 = vmatpush1.bf16.msra.mxu0 %v2234
        %2252 = vmatprep.subr.bf16.mxu0 0
        %2253 = vmatpush2.bf16.msra.mxu0 0
        %2254 = vmatprep.subr.bf16.mxu0 0
        %2255 = vmatpush2.bf16.msra.mxu0 0
        %2256 = vmatprep.subr.bf16.mxu0 0
        %2257 = vmatpush2.bf16.msra.mxu0 0
        %2258 = vmatprep.subr.bf16.mxu0 0
        %2259 = vmatpush2.bf16.msra.mxu0 0
        %2260 = vmatprep.subr.bf16.mxu0 0
        %2261 = vmatpush2.bf16.msra.mxu0 0
        %2262 = vmatprep.subr.bf16.mxu0 0
        %2263 = vmatpush2.bf16.msra.mxu0 0
        %2264 = vmatprep.subr.bf16.mxu0 0
        %2265 = vmatpush2.bf16.msra.mxu0 0
        %2266 = vmatprep.subr.bf16.mxu0 0
        %2267 = vmatpush2.bf16.msra.mxu0 0
        %2268 = vmatprep.mubr.bf16.mxu0 0
        %2269 = vmatmul.mubr.bf16.gmra.mxu0 %v2231
        %v2270 = vpop.f32.mrf.mxu0
        %v2271 = vadd.f32 0.0, %v2270
        %v2272 = vpop.f32.mrf.mxu0
        %v2273 = vpop.f32.mrf.mxu0
        %v2274 = vpop.f32.mrf.mxu0
        %2275 = vdwg.mxu0
        %v2276 = vmul.f32 %v2271, %v2228
        %v2277 = vld [vmem:[#allocation2 + $0x8] sm:$0xf]
        %v2278 = vld [vmem:[#allocation3 + $0x8] sm:$0xf]
        %2279 = vmatprep.subr.bf16.mxu0 0
        %2280 = vmatpush1.bf16.xpose.msra.mxu0 0
        %2281 = vmatprep.subr.bf16.mxu0 0
        %2282 = vmatpush1.bf16.xpose.msra.mxu0 0
        %2283 = vmatprep.subr.bf16.mxu0 0
        %2284 = vmatpush1.bf16.xpose.msra.mxu0 0
        %2285 = vmatprep.subr.bf16.mxu0 0
        %2286 = vmatpush1.bf16.xpose.msra.mxu0 0
        %2287 = vmatprep.subr.bf16.mxu0 0
        %2288 = vmatpush1.bf16.xpose.msra.mxu0 0
        %2289 = vmatprep.subr.bf16.mxu0 0
        %2290 = vmatpush1.bf16.xpose.msra.mxu0 0
        %2291 = vmatprep.subr.bf16.mxu0 0
        %2292 = vmatpush1.bf16.xpose.msra.mxu0 0
        %2293 = vmatprep.subr.bf16.mxu0 0
        %2294 = vmatpush1.bf16.xpose.msra.mxu0 %v2277
        %2295 = vmatprep.subr.bf16.mxu0 0
        %2296 = vmatpush2.bf16.xpose.msra.mxu0 0
        %2297 = vmatprep.subr.bf16.mxu0 0
        %2298 = vmatpush2.bf16.xpose.msra.mxu0 0
        %2299 = vmatprep.subr.bf16.mxu0 0
        %2300 = vmatpush2.bf16.xpose.msra.mxu0 0
        %2301 = vmatprep.subr.bf16.mxu0 0
        %2302 = vmatpush2.bf16.xpose.msra.mxu0 0
        %2303 = vmatprep.subr.bf16.mxu0 0
        %2304 = vmatpush2.bf16.xpose.msra.mxu0 0
        %2305 = vmatprep.subr.bf16.mxu0 0
        %2306 = vmatpush2.bf16.xpose.msra.mxu0 0
        %2307 = vmatprep.subr.bf16.mxu0 0
        %2308 = vmatpush2.bf16.xpose.msra.mxu0 0
        %2309 = vmatprep.subr.bf16.mxu0 0
        %2310 = vmatpush2.bf16.xpose.msra.mxu0 0
        %2311 = vmatprep.mubr.bf16.mxu0 0
        %2312 = vmatmul.mubr.bf16.gmra.mxu0 %v2069
        %v2313 = vpop.f32.mrf.mxu0
        %v2314 = vadd.f32 0.0, %v2313
        %v2315 = vpop.f32.mrf.mxu0
        %v2316 = vpop.f32.mrf.mxu0
        %v2317 = vpop.f32.mrf.mxu0
        %2318 = vdwg.mxu0
        %v2319 = vsel %vm2117, %v2314, -inf
        %2320 = vmax.xlane.f32.xlu0 %v2319
        %v2321 = vpop.xlane.xlu0 %2320
        %v2322 = vsub.f32 %v2314, %v2321
        %v2323 = vmul.f32 %v2322, 1.442695
        %v2324 = vpow.pop %v2323
        %v2325 = vsel %vm2117, %v2324, 0.0
        %2326 = vadd.xlane.f32.xlu0 %v2325
        %v2327 = vpop.xlane.xlu0 %2326
        %v2328 = vrcp.pop %v2327
        %v2329 = vpack.c.bf16 %v2324, %v2324
        %v2331 = vsel %vm2117, %v2329, 0
        %v2334 = vsel %vm2132, %v2278, 0
        %2336 = vmatprep.subr.bf16.mxu0 0
        %2337 = vmatpush1.bf16.msra.mxu0 0
        %2338 = vmatprep.subr.bf16.mxu0 0
        %2339 = vmatpush1.bf16.msra.mxu0 0
        %2340 = vmatprep.subr.bf16.mxu0 0
        %2341 = vmatpush1.bf16.msra.mxu0 0
        %2342 = vmatprep.subr.bf16.mxu0 0
        %2343 = vmatpush1.bf16.msra.mxu0 0
        %2344 = vmatprep.subr.bf16.mxu0 0
        %2345 = vmatpush1.bf16.msra.mxu0 0
        %2346 = vmatprep.subr.bf16.mxu0 0
        %2347 = vmatpush1.bf16.msra.mxu0 0
        %2348 = vmatprep.subr.bf16.mxu0 0
        %2349 = vmatpush1.bf16.msra.mxu0 0
        %2350 = vmatprep.subr.bf16.mxu0 0
        %2351 = vmatpush1.bf16.msra.mxu0 %v2334
        %2352 = vmatprep.subr.bf16.mxu0 0
        %2353 = vmatpush2.bf16.msra.mxu0 0
        %2354 = vmatprep.subr.bf16.mxu0 0
        %2355 = vmatpush2.bf16.msra.mxu0 0
        %2356 = vmatprep.subr.bf16.mxu0 0
        %2357 = vmatpush2.bf16.msra.mxu0 0
        %2358 = vmatprep.subr.bf16.mxu0 0
        %2359 = vmatpush2.bf16.msra.mxu0 0
        %2360 = vmatprep.subr.bf16.mxu0 0
        %2361 = vmatpush2.bf16.msra.mxu0 0
        %2362 = vmatprep.subr.bf16.mxu0 0
        %2363 = vmatpush2.bf16.msra.mxu0 0
        %2364 = vmatprep.subr.bf16.mxu0 0
        %2365 = vmatpush2.bf16.msra.mxu0 0
        %2366 = vmatprep.subr.bf16.mxu0 0
        %2367 = vmatpush2.bf16.msra.mxu0 0
        %2368 = vmatprep.mubr.bf16.mxu0 0
        %2369 = vmatmul.mubr.bf16.gmra.mxu0 %v2331
        %v2370 = vpop.f32.mrf.mxu0
        %v2371 = vadd.f32 0.0, %v2370
        %v2372 = vpop.f32.mrf.mxu0
        %v2373 = vpop.f32.mrf.mxu0
        %v2374 = vpop.f32.mrf.mxu0
        %2375 = vdwg.mxu0
        %v2376 = vmul.f32 %v2371, %v2328
        %v2377 = vld [vmem:[#allocation2 + $0xc] sm:$0xf]
        %v2378 = vld [vmem:[#allocation3 + $0xc] sm:$0xf]
        %2379 = vmatprep.subr.bf16.mxu0 0
        %2380 = vmatpush1.bf16.xpose.msra.mxu0 0
        %2381 = vmatprep.subr.bf16.mxu0 0
        %2382 = vmatpush1.bf16.xpose.msra.mxu0 0
        %2383 = vmatprep.subr.bf16.mxu0 0
        %2384 = vmatpush1.bf16.xpose.msra.mxu0 0
        %2385 = vmatprep.subr.bf16.mxu0 0
        %2386 = vmatpush1.bf16.xpose.msra.mxu0 0
        %2387 = vmatprep.subr.bf16.mxu0 0
        %2388 = vmatpush1.bf16.xpose.msra.mxu0 0
        %2389 = vmatprep.subr.bf16.mxu0 0
        %2390 = vmatpush1.bf16.xpose.msra.mxu0 0
        %2391 = vmatprep.subr.bf16.mxu0 0
        %2392 = vmatpush1.bf16.xpose.msra.mxu0 0
        %2393 = vmatprep.subr.bf16.mxu0 0
        %2394 = vmatpush1.bf16.xpose.msra.mxu0 %v2377
        %2395 = vmatprep.subr.bf16.mxu0 0
        %2396 = vmatpush2.bf16.xpose.msra.mxu0 0
        %2397 = vmatprep.subr.bf16.mxu0 0
        %2398 = vmatpush2.bf16.xpose.msra.mxu0 0
        %2399 = vmatprep.subr.bf16.mxu0 0
        %2400 = vmatpush2.bf16.xpose.msra.mxu0 0
        %2401 = vmatprep.subr.bf16.mxu0 0
        %2402 = vmatpush2.bf16.xpose.msra.mxu0 0
        %2403 = vmatprep.subr.bf16.mxu0 0
        %2404 = vmatpush2.bf16.xpose.msra.mxu0 0
        %2405 = vmatprep.subr.bf16.mxu0 0
        %2406 = vmatpush2.bf16.xpose.msra.mxu0 0
        %2407 = vmatprep.subr.bf16.mxu0 0
        %2408 = vmatpush2.bf16.xpose.msra.mxu0 0
        %2409 = vmatprep.subr.bf16.mxu0 0
        %2410 = vmatpush2.bf16.xpose.msra.mxu0 0
        %2411 = vmatprep.mubr.bf16.mxu0 0
        %2412 = vmatmul.mubr.bf16.gmra.mxu0 %v2070
        %v2413 = vpop.f32.mrf.mxu0
        %v2414 = vadd.f32 0.0, %v2413
        %v2415 = vpop.f32.mrf.mxu0
        %v2416 = vpop.f32.mrf.mxu0
        %v2417 = vpop.f32.mrf.mxu0
        %2418 = vdwg.mxu0
        %v2419 = vsel %vm2117, %v2414, -inf
        %2420 = vmax.xlane.f32.xlu0 %v2419
        %v2421 = vpop.xlane.xlu0 %2420
        %v2422 = vsub.f32 %v2414, %v2421
        %v2423 = vmul.f32 %v2422, 1.442695
        %v2424 = vpow.pop %v2423
        %v2425 = vsel %vm2117, %v2424, 0.0
        %2426 = vadd.xlane.f32.xlu0 %v2425
        %v2427 = vpop.xlane.xlu0 %2426
        %v2428 = vrcp.pop %v2427
        %v2429 = vpack.c.bf16 %v2424, %v2424
        %v2431 = vsel %vm2117, %v2429, 0
        %v2434 = vsel %vm2132, %v2378, 0
        %2436 = vmatprep.subr.bf16.mxu0 0
        %2437 = vmatpush1.bf16.msra.mxu0 0
        %2438 = vmatprep.subr.bf16.mxu0 0
        %2439 = vmatpush1.bf16.msra.mxu0 0
        %2440 = vmatprep.subr.bf16.mxu0 0
        %2441 = vmatpush1.bf16.msra.mxu0 0
        %2442 = vmatprep.subr.bf16.mxu0 0
        %2443 = vmatpush1.bf16.msra.mxu0 0
        %2444 = vmatprep.subr.bf16.mxu0 0
        %2445 = vmatpush1.bf16.msra.mxu0 0
        %2446 = vmatprep.subr.bf16.mxu0 0
        %2447 = vmatpush1.bf16.msra.mxu0 0
        %2448 = vmatprep.subr.bf16.mxu0 0
        %2449 = vmatpush1.bf16.msra.mxu0 0
        %2450 = vmatprep.subr.bf16.mxu0 0
        %2451 = vmatpush1.bf16.msra.mxu0 %v2434
        %2452 = vmatprep.subr.bf16.mxu0 0
        %2453 = vmatpush2.bf16.msra.mxu0 0
        %2454 = vmatprep.subr.bf16.mxu0 0
        %2455 = vmatpush2.bf16.msra.mxu0 0
        %2456 = vmatprep.subr.bf16.mxu0 0
        %2457 = vmatpush2.bf16.msra.mxu0 0
        %2458 = vmatprep.subr.bf16.mxu0 0
        %2459 = vmatpush2.bf16.msra.mxu0 0
        %2460 = vmatprep.subr.bf16.mxu0 0
        %2461 = vmatpush2.bf16.msra.mxu0 0
        %2462 = vmatprep.subr.bf16.mxu0 0
        %2463 = vmatpush2.bf16.msra.mxu0 0
        %2464 = vmatprep.subr.bf16.mxu0 0
        %2465 = vmatpush2.bf16.msra.mxu0 0
        %2466 = vmatprep.subr.bf16.mxu0 0
        %2467 = vmatpush2.bf16.msra.mxu0 0
        %2468 = vmatprep.mubr.bf16.mxu0 0
        %2469 = vmatmul.mubr.bf16.gmra.mxu0 %v2431
        %v2470 = vpop.f32.mrf.mxu0
        %v2471 = vadd.f32 0.0, %v2470
        %v2472 = vpop.f32.mrf.mxu0
        %v2473 = vpop.f32.mrf.mxu0
        %v2474 = vpop.f32.mrf.mxu0
        %2475 = vdwg.mxu0
        %v2476 = vmul.f32 %v2471, %v2428
        %v2477 = vld [vmem:[#allocation2 + $0x10] sm:$0xf]
        %v2478 = vld [vmem:[#allocation3 + $0x10] sm:$0xf]
        %2479 = vmatprep.subr.bf16.mxu0 0
        %2480 = vmatpush1.bf16.xpose.msra.mxu0 0
        %2481 = vmatprep.subr.bf16.mxu0 0
        %2482 = vmatpush1.bf16.xpose.msra.mxu0 0
        %2483 = vmatprep.subr.bf16.mxu0 0
        %2484 = vmatpush1.bf16.xpose.msra.mxu0 0
        %2485 = vmatprep.subr.bf16.mxu0 0
        %2486 = vmatpush1.bf16.xpose.msra.mxu0 0
        %2487 = vmatprep.subr.bf16.mxu0 0
        %2488 = vmatpush1.bf16.xpose.msra.mxu0 0
        %2489 = vmatprep.subr.bf16.mxu0 0
        %2490 = vmatpush1.bf16.xpose.msra.mxu0 0
        %2491 = vmatprep.subr.bf16.mxu0 0
        %2492 = vmatpush1.bf16.xpose.msra.mxu0 0
        %2493 = vmatprep.subr.bf16.mxu0 0
        %2494 = vmatpush1.bf16.xpose.msra.mxu0 %v2477
        %2495 = vmatprep.subr.bf16.mxu0 0
        %2496 = vmatpush2.bf16.xpose.msra.mxu0 0
        %2497 = vmatprep.subr.bf16.mxu0 0
        %2498 = vmatpush2.bf16.xpose.msra.mxu0 0
        %2499 = vmatprep.subr.bf16.mxu0 0
        %2500 = vmatpush2.bf16.xpose.msra.mxu0 0
        %2501 = vmatprep.subr.bf16.mxu0 0
        %2502 = vmatpush2.bf16.xpose.msra.mxu0 0
        %2503 = vmatprep.subr.bf16.mxu0 0
        %2504 = vmatpush2.bf16.xpose.msra.mxu0 0
        %2505 = vmatprep.subr.bf16.mxu0 0
        %2506 = vmatpush2.bf16.xpose.msra.mxu0 0
        %2507 = vmatprep.subr.bf16.mxu0 0
        %2508 = vmatpush2.bf16.xpose.msra.mxu0 0
        %2509 = vmatprep.subr.bf16.mxu0 0
        %2510 = vmatpush2.bf16.xpose.msra.mxu0 0
        %2511 = vmatprep.mubr.bf16.mxu0 0
        %2512 = vmatmul.mubr.bf16.gmra.mxu0 %v2071
        %v2513 = vpop.f32.mrf.mxu0
        %v2514 = vadd.f32 0.0, %v2513
        %v2515 = vpop.f32.mrf.mxu0
        %v2516 = vpop.f32.mrf.mxu0
        %v2517 = vpop.f32.mrf.mxu0
        %2518 = vdwg.mxu0
        %v2519 = vsel %vm2117, %v2514, -inf
        %2520 = vmax.xlane.f32.xlu0 %v2519
        %v2521 = vpop.xlane.xlu0 %2520
        %v2522 = vsub.f32 %v2514, %v2521
        %v2523 = vmul.f32 %v2522, 1.442695
        %v2524 = vpow.pop %v2523
        %v2525 = vsel %vm2117, %v2524, 0.0
        %2526 = vadd.xlane.f32.xlu0 %v2525
        %v2527 = vpop.xlane.xlu0 %2526
        %v2528 = vrcp.pop %v2527
        %v2529 = vpack.c.bf16 %v2524, %v2524
        %v2531 = vsel %vm2117, %v2529, 0
        %v2534 = vsel %vm2132, %v2478, 0
        %2536 = vmatprep.subr.bf16.mxu0 0
        %2537 = vmatpush1.bf16.msra.mxu0 0
        %2538 = vmatprep.subr.bf16.mxu0 0
        %2539 = vmatpush1.bf16.msra.mxu0 0
        %2540 = vmatprep.subr.bf16.mxu0 0
        %2541 = vmatpush1.bf16.msra.mxu0 0
        %2542 = vmatprep.subr.bf16.mxu0 0
        %2543 = vmatpush1.bf16.msra.mxu0 0
        %2544 = vmatprep.subr.bf16.mxu0 0
        %2545 = vmatpush1.bf16.msra.mxu0 0
        %2546 = vmatprep.subr.bf16.mxu0 0
        %2547 = vmatpush1.bf16.msra.mxu0 0
        %2548 = vmatprep.subr.bf16.mxu0 0
        %2549 = vmatpush1.bf16.msra.mxu0 0
        %2550 = vmatprep.subr.bf16.mxu0 0
        %2551 = vmatpush1.bf16.msra.mxu0 %v2534
        %2552 = vmatprep.subr.bf16.mxu0 0
        %2553 = vmatpush2.bf16.msra.mxu0 0
        %2554 = vmatprep.subr.bf16.mxu0 0
        %2555 = vmatpush2.bf16.msra.mxu0 0
        %2556 = vmatprep.subr.bf16.mxu0 0
        %2557 = vmatpush2.bf16.msra.mxu0 0
        %2558 = vmatprep.subr.bf16.mxu0 0
        %2559 = vmatpush2.bf16.msra.mxu0 0
        %2560 = vmatprep.subr.bf16.mxu0 0
        %2561 = vmatpush2.bf16.msra.mxu0 0
        %2562 = vmatprep.subr.bf16.mxu0 0
        %2563 = vmatpush2.bf16.msra.mxu0 0
        %2564 = vmatprep.subr.bf16.mxu0 0
        %2565 = vmatpush2.bf16.msra.mxu0 0
        %2566 = vmatprep.subr.bf16.mxu0 0
        %2567 = vmatpush2.bf16.msra.mxu0 0
        %2568 = vmatprep.mubr.bf16.mxu0 0
        %2569 = vmatmul.mubr.bf16.gmra.mxu0 %v2531
        %v2570 = vpop.f32.mrf.mxu0
        %v2571 = vadd.f32 0.0, %v2570
        %v2572 = vpop.f32.mrf.mxu0
        %v2573 = vpop.f32.mrf.mxu0
        %v2574 = vpop.f32.mrf.mxu0
        %2575 = vdwg.mxu0
        %v2576 = vmul.f32 %v2571, %v2528
        %v2577 = vld [vmem:[#allocation2 + $0x14] sm:$0xf]
        %v2578 = vld [vmem:[#allocation3 + $0x14] sm:$0xf]
        %2579 = vmatprep.subr.bf16.mxu0 0
        %2580 = vmatpush1.bf16.xpose.msra.mxu0 0
        %2581 = vmatprep.subr.bf16.mxu0 0
        %2582 = vmatpush1.bf16.xpose.msra.mxu0 0
        %2583 = vmatprep.subr.bf16.mxu0 0
        %2584 = vmatpush1.bf16.xpose.msra.mxu0 0
        %2585 = vmatprep.subr.bf16.mxu0 0
        %2586 = vmatpush1.bf16.xpose.msra.mxu0 0
        %2587 = vmatprep.subr.bf16.mxu0 0
        %2588 = vmatpush1.bf16.xpose.msra.mxu0 0
        %2589 = vmatprep.subr.bf16.mxu0 0
        %2590 = vmatpush1.bf16.xpose.msra.mxu0 0
        %2591 = vmatprep.subr.bf16.mxu0 0
        %2592 = vmatpush1.bf16.xpose.msra.mxu0 0
        %2593 = vmatprep.subr.bf16.mxu0 0
        %2594 = vmatpush1.bf16.xpose.msra.mxu0 %v2577
        %2595 = vmatprep.subr.bf16.mxu0 0
        %2596 = vmatpush2.bf16.xpose.msra.mxu0 0
        %2597 = vmatprep.subr.bf16.mxu0 0
        %2598 = vmatpush2.bf16.xpose.msra.mxu0 0
        %2599 = vmatprep.subr.bf16.mxu0 0
        %2600 = vmatpush2.bf16.xpose.msra.mxu0 0
        %2601 = vmatprep.subr.bf16.mxu0 0
        %2602 = vmatpush2.bf16.xpose.msra.mxu0 0
        %2603 = vmatprep.subr.bf16.mxu0 0
        %2604 = vmatpush2.bf16.xpose.msra.mxu0 0
        %2605 = vmatprep.subr.bf16.mxu0 0
        %2606 = vmatpush2.bf16.xpose.msra.mxu0 0
        %2607 = vmatprep.subr.bf16.mxu0 0
        %2608 = vmatpush2.bf16.xpose.msra.mxu0 0
        %2609 = vmatprep.subr.bf16.mxu0 0
        %2610 = vmatpush2.bf16.xpose.msra.mxu0 0
        %2611 = vmatprep.mubr.bf16.mxu0 0
        %2612 = vmatmul.mubr.bf16.gmra.mxu0 %v2072
        %v2613 = vpop.f32.mrf.mxu0
        %v2614 = vadd.f32 0.0, %v2613
        %v2615 = vpop.f32.mrf.mxu0
        %v2616 = vpop.f32.mrf.mxu0
        %v2617 = vpop.f32.mrf.mxu0
        %2618 = vdwg.mxu0
        %v2619 = vsel %vm2117, %v2614, -inf
        %2620 = vmax.xlane.f32.xlu0 %v2619
        %v2621 = vpop.xlane.xlu0 %2620
        %v2622 = vsub.f32 %v2614, %v2621
        %v2623 = vmul.f32 %v2622, 1.442695
        %v2624 = vpow.pop %v2623
        %v2625 = vsel %vm2117, %v2624, 0.0
        %2626 = vadd.xlane.f32.xlu0 %v2625
        %v2627 = vpop.xlane.xlu0 %2626
        %v2628 = vrcp.pop %v2627
        %v2629 = vpack.c.bf16 %v2624, %v2624
        %v2631 = vsel %vm2117, %v2629, 0
        %v2634 = vsel %vm2132, %v2578, 0
        %2636 = vmatprep.subr.bf16.mxu0 0
        %2637 = vmatpush1.bf16.msra.mxu0 0
        %2638 = vmatprep.subr.bf16.mxu0 0
        %2639 = vmatpush1.bf16.msra.mxu0 0
        %2640 = vmatprep.subr.bf16.mxu0 0
        %2641 = vmatpush1.bf16.msra.mxu0 0
        %2642 = vmatprep.subr.bf16.mxu0 0
        %2643 = vmatpush1.bf16.msra.mxu0 0
        %2644 = vmatprep.subr.bf16.mxu0 0
        %2645 = vmatpush1.bf16.msra.mxu0 0
        %2646 = vmatprep.subr.bf16.mxu0 0
        %2647 = vmatpush1.bf16.msra.mxu0 0
        %2648 = vmatprep.subr.bf16.mxu0 0
        %2649 = vmatpush1.bf16.msra.mxu0 0
        %2650 = vmatprep.subr.bf16.mxu0 0
        %2651 = vmatpush1.bf16.msra.mxu0 %v2634
        %2652 = vmatprep.subr.bf16.mxu0 0
        %2653 = vmatpush2.bf16.msra.mxu0 0
        %2654 = vmatprep.subr.bf16.mxu0 0
        %2655 = vmatpush2.bf16.msra.mxu0 0
        %2656 = vmatprep.subr.bf16.mxu0 0
        %2657 = vmatpush2.bf16.msra.mxu0 0
        %2658 = vmatprep.subr.bf16.mxu0 0
        %2659 = vmatpush2.bf16.msra.mxu0 0
        %2660 = vmatprep.subr.bf16.mxu0 0
        %2661 = vmatpush2.bf16.msra.mxu0 0
        %2662 = vmatprep.subr.bf16.mxu0 0
        %2663 = vmatpush2.bf16.msra.mxu0 0
        %2664 = vmatprep.subr.bf16.mxu0 0
        %2665 = vmatpush2.bf16.msra.mxu0 0
        %2666 = vmatprep.subr.bf16.mxu0 0
        %2667 = vmatpush2.bf16.msra.mxu0 0
        %2668 = vmatprep.mubr.bf16.mxu0 0
        %2669 = vmatmul.mubr.bf16.gmra.mxu0 %v2631
        %v2670 = vpop.f32.mrf.mxu0
        %v2671 = vadd.f32 0.0, %v2670
        %v2672 = vpop.f32.mrf.mxu0
        %v2673 = vpop.f32.mrf.mxu0
        %v2674 = vpop.f32.mrf.mxu0
        %2675 = vdwg.mxu0
        %v2676 = vmul.f32 %v2671, %v2628
        %v2677 = vld [vmem:[#allocation2 + $0x18] sm:$0xf]
        %v2678 = vld [vmem:[#allocation3 + $0x18] sm:$0xf]
        %2679 = vmatprep.subr.bf16.mxu0 0
        %2680 = vmatpush1.bf16.xpose.msra.mxu0 0
        %2681 = vmatprep.subr.bf16.mxu0 0
        %2682 = vmatpush1.bf16.xpose.msra.mxu0 0
        %2683 = vmatprep.subr.bf16.mxu0 0
        %2684 = vmatpush1.bf16.xpose.msra.mxu0 0
        %2685 = vmatprep.subr.bf16.mxu0 0
        %2686 = vmatpush1.bf16.xpose.msra.mxu0 0
        %2687 = vmatprep.subr.bf16.mxu0 0
        %2688 = vmatpush1.bf16.xpose.msra.mxu0 0
        %2689 = vmatprep.subr.bf16.mxu0 0
        %2690 = vmatpush1.bf16.xpose.msra.mxu0 0
        %2691 = vmatprep.subr.bf16.mxu0 0
        %2692 = vmatpush1.bf16.xpose.msra.mxu0 0
        %2693 = vmatprep.subr.bf16.mxu0 0
        %2694 = vmatpush1.bf16.xpose.msra.mxu0 %v2677
        %2695 = vmatprep.subr.bf16.mxu0 0
        %2696 = vmatpush2.bf16.xpose.msra.mxu0 0
        %2697 = vmatprep.subr.bf16.mxu0 0
        %2698 = vmatpush2.bf16.xpose.msra.mxu0 0
        %2699 = vmatprep.subr.bf16.mxu0 0
        %2700 = vmatpush2.bf16.xpose.msra.mxu0 0
        %2701 = vmatprep.subr.bf16.mxu0 0
        %2702 = vmatpush2.bf16.xpose.msra.mxu0 0
        %2703 = vmatprep.subr.bf16.mxu0 0
        %2704 = vmatpush2.bf16.xpose.msra.mxu0 0
        %2705 = vmatprep.subr.bf16.mxu0 0
        %2706 = vmatpush2.bf16.xpose.msra.mxu0 0
        %2707 = vmatprep.subr.bf16.mxu0 0
        %2708 = vmatpush2.bf16.xpose.msra.mxu0 0
        %2709 = vmatprep.subr.bf16.mxu0 0
        %2710 = vmatpush2.bf16.xpose.msra.mxu0 0
        %2711 = vmatprep.mubr.bf16.mxu0 0
        %2712 = vmatmul.mubr.bf16.gmra.mxu0 %v2073
        %v2713 = vpop.f32.mrf.mxu0
        %v2714 = vadd.f32 0.0, %v2713
        %v2715 = vpop.f32.mrf.mxu0
        %v2716 = vpop.f32.mrf.mxu0
        %v2717 = vpop.f32.mrf.mxu0
        %2718 = vdwg.mxu0
        %v2719 = vsel %vm2117, %v2714, -inf
        %2720 = vmax.xlane.f32.xlu0 %v2719
        %v2721 = vpop.xlane.xlu0 %2720
        %v2722 = vsub.f32 %v2714, %v2721
        %v2723 = vmul.f32 %v2722, 1.442695
        %v2724 = vpow.pop %v2723
        %v2725 = vsel %vm2117, %v2724, 0.0
        %2726 = vadd.xlane.f32.xlu0 %v2725
        %v2727 = vpop.xlane.xlu0 %2726
        %v2728 = vrcp.pop %v2727
        %v2729 = vpack.c.bf16 %v2724, %v2724
        %v2731 = vsel %vm2117, %v2729, 0
        %v2734 = vsel %vm2132, %v2678, 0
        %2736 = vmatprep.subr.bf16.mxu0 0
        %2737 = vmatpush1.bf16.msra.mxu0 0
        %2738 = vmatprep.subr.bf16.mxu0 0
        %2739 = vmatpush1.bf16.msra.mxu0 0
        %2740 = vmatprep.subr.bf16.mxu0 0
        %2741 = vmatpush1.bf16.msra.mxu0 0
        %2742 = vmatprep.subr.bf16.mxu0 0
        %2743 = vmatpush1.bf16.msra.mxu0 0
        %2744 = vmatprep.subr.bf16.mxu0 0
        %2745 = vmatpush1.bf16.msra.mxu0 0
        %2746 = vmatprep.subr.bf16.mxu0 0
        %2747 = vmatpush1.bf16.msra.mxu0 0
        %2748 = vmatprep.subr.bf16.mxu0 0
        %2749 = vmatpush1.bf16.msra.mxu0 0
        %2750 = vmatprep.subr.bf16.mxu0 0
        %2751 = vmatpush1.bf16.msra.mxu0 %v2734
        %2752 = vmatprep.subr.bf16.mxu0 0
        %2753 = vmatpush2.bf16.msra.mxu0 0
        %2754 = vmatprep.subr.bf16.mxu0 0
        %2755 = vmatpush2.bf16.msra.mxu0 0
        %2756 = vmatprep.subr.bf16.mxu0 0
        %2757 = vmatpush2.bf16.msra.mxu0 0
        %2758 = vmatprep.subr.bf16.mxu0 0
        %2759 = vmatpush2.bf16.msra.mxu0 0
        %2760 = vmatprep.subr.bf16.mxu0 0
        %2761 = vmatpush2.bf16.msra.mxu0 0
        %2762 = vmatprep.subr.bf16.mxu0 0
        %2763 = vmatpush2.bf16.msra.mxu0 0
        %2764 = vmatprep.subr.bf16.mxu0 0
        %2765 = vmatpush2.bf16.msra.mxu0 0
        %2766 = vmatprep.subr.bf16.mxu0 0
        %2767 = vmatpush2.bf16.msra.mxu0 0
        %2768 = vmatprep.mubr.bf16.mxu0 0
        %2769 = vmatmul.mubr.bf16.gmra.mxu0 %v2731
        %v2770 = vpop.f32.mrf.mxu0
        %v2771 = vadd.f32 0.0, %v2770
        %v2772 = vpop.f32.mrf.mxu0
        %v2773 = vpop.f32.mrf.mxu0
        %v2774 = vpop.f32.mrf.mxu0
        %2775 = vdwg.mxu0
        %v2776 = vmul.f32 %v2771, %v2728
        %v2777 = vld [vmem:[#allocation2 + $0x1c] sm:$0xf]
        %v2778 = vld [vmem:[#allocation3 + $0x1c] sm:$0xf]
        %2779 = vmatprep.subr.bf16.mxu0 0
        %2780 = vmatpush1.bf16.xpose.msra.mxu0 0
        %2781 = vmatprep.subr.bf16.mxu0 0
        %2782 = vmatpush1.bf16.xpose.msra.mxu0 0
        %2783 = vmatprep.subr.bf16.mxu0 0
        %2784 = vmatpush1.bf16.xpose.msra.mxu0 0
        %2785 = vmatprep.subr.bf16.mxu0 0
        %2786 = vmatpush1.bf16.xpose.msra.mxu0 0
        %2787 = vmatprep.subr.bf16.mxu0 0
        %2788 = vmatpush1.bf16.xpose.msra.mxu0 0
        %2789 = vmatprep.subr.bf16.mxu0 0
        %2790 = vmatpush1.bf16.xpose.msra.mxu0 0
        %2791 = vmatprep.subr.bf16.mxu0 0
        %2792 = vmatpush1.bf16.xpose.msra.mxu0 0
        %2793 = vmatprep.subr.bf16.mxu0 0
        %2794 = vmatpush1.bf16.xpose.msra.mxu0 %v2777
        %2795 = vmatprep.subr.bf16.mxu0 0
        %2796 = vmatpush2.bf16.xpose.msra.mxu0 0
        %2797 = vmatprep.subr.bf16.mxu0 0
        %2798 = vmatpush2.bf16.xpose.msra.mxu0 0
        %2799 = vmatprep.subr.bf16.mxu0 0
        %2800 = vmatpush2.bf16.xpose.msra.mxu0 0
        %2801 = vmatprep.subr.bf16.mxu0 0
        %2802 = vmatpush2.bf16.xpose.msra.mxu0 0
        %2803 = vmatprep.subr.bf16.mxu0 0
        %2804 = vmatpush2.bf16.xpose.msra.mxu0 0
        %2805 = vmatprep.subr.bf16.mxu0 0
        %2806 = vmatpush2.bf16.xpose.msra.mxu0 0
        %2807 = vmatprep.subr.bf16.mxu0 0
        %2808 = vmatpush2.bf16.xpose.msra.mxu0 0
        %2809 = vmatprep.subr.bf16.mxu0 0
        %2810 = vmatpush2.bf16.xpose.msra.mxu0 0
        %2811 = vmatprep.mubr.bf16.mxu0 0
        %2812 = vmatmul.mubr.bf16.gmra.mxu0 %v2074
        %v2813 = vpop.f32.mrf.mxu0
        %v2814 = vadd.f32 0.0, %v2813
        %v2815 = vpop.f32.mrf.mxu0
        %v2816 = vpop.f32.mrf.mxu0
        %v2817 = vpop.f32.mrf.mxu0
        %2818 = vdwg.mxu0
        %v2819 = vsel %vm2117, %v2814, -inf
        %2820 = vmax.xlane.f32.xlu0 %v2819
        %v2821 = vpop.xlane.xlu0 %2820
        %v2822 = vsub.f32 %v2814, %v2821
        %v2823 = vmul.f32 %v2822, 1.442695
        %v2824 = vpow.pop %v2823
        %v2825 = vsel %vm2117, %v2824, 0.0
        %2826 = vadd.xlane.f32.xlu0 %v2825
        %v2827 = vpop.xlane.xlu0 %2826
        %v2828 = vrcp.pop %v2827
        %v2829 = vpack.c.bf16 %v2824, %v2824
        %v2831 = vsel %vm2117, %v2829, 0
        %v2834 = vsel %vm2132, %v2778, 0
        %2836 = vmatprep.subr.bf16.mxu0 0
        %2837 = vmatpush1.bf16.msra.mxu0 0
        %2838 = vmatprep.subr.bf16.mxu0 0
        %2839 = vmatpush1.bf16.msra.mxu0 0
        %2840 = vmatprep.subr.bf16.mxu0 0
        %2841 = vmatpush1.bf16.msra.mxu0 0
        %2842 = vmatprep.subr.bf16.mxu0 0
        %2843 = vmatpush1.bf16.msra.mxu0 0
        %2844 = vmatprep.subr.bf16.mxu0 0
        %2845 = vmatpush1.bf16.msra.mxu0 0
        %2846 = vmatprep.subr.bf16.mxu0 0
        %2847 = vmatpush1.bf16.msra.mxu0 0
        %2848 = vmatprep.subr.bf16.mxu0 0
        %2849 = vmatpush1.bf16.msra.mxu0 0
        %2850 = vmatprep.subr.bf16.mxu0 0
        %2851 = vmatpush1.bf16.msra.mxu0 %v2834
        %2852 = vmatprep.subr.bf16.mxu0 0
        %2853 = vmatpush2.bf16.msra.mxu0 0
        %2854 = vmatprep.subr.bf16.mxu0 0
        %2855 = vmatpush2.bf16.msra.mxu0 0
        %2856 = vmatprep.subr.bf16.mxu0 0
        %2857 = vmatpush2.bf16.msra.mxu0 0
        %2858 = vmatprep.subr.bf16.mxu0 0
        %2859 = vmatpush2.bf16.msra.mxu0 0
        %2860 = vmatprep.subr.bf16.mxu0 0
        %2861 = vmatpush2.bf16.msra.mxu0 0
        %2862 = vmatprep.subr.bf16.mxu0 0
        %2863 = vmatpush2.bf16.msra.mxu0 0
        %2864 = vmatprep.subr.bf16.mxu0 0
        %2865 = vmatpush2.bf16.msra.mxu0 0
        %2866 = vmatprep.subr.bf16.mxu0 0
        %2867 = vmatpush2.bf16.msra.mxu0 0
        %2868 = vmatprep.mubr.bf16.mxu0 0
        %2869 = vmatmul.mubr.bf16.gmra.mxu0 %v2831
        %v2870 = vpop.f32.mrf.mxu0
        %v2871 = vadd.f32 0.0, %v2870
        %v2872 = vpop.f32.mrf.mxu0
        %v2873 = vpop.f32.mrf.mxu0
        %v2874 = vpop.f32.mrf.mxu0
        %2875 = vdwg.mxu0
        %v2876 = vmul.f32 %v2871, %v2828
        %v2877 = vpack.c.bf16 %v2176, %v2176
        %v2878 = vpack.c.bf16 %v2276, %v2276
        %v2879 = vpack.c.bf16 %v2376, %v2376
        %v2880 = vpack.c.bf16 %v2476, %v2476
        %v2881 = vpack.c.bf16 %v2576, %v2576
        %v2882 = vpack.c.bf16 %v2676, %v2676
        %v2883 = vpack.c.bf16 %v2776, %v2776
        %v2884 = vpack.c.bf16 %v2876, %v2876
        %v2885 = vld [vmem:[#allocation12] sm:$0xf]
        %v2886 = vld [vmem:[#allocation12 + $0x4] sm:$0xf]
        %v2887 = vld [vmem:[#allocation12 + $0x8] sm:$0xf]
        %v2888 = vld [vmem:[#allocation12 + $0xc] sm:$0xf]
        %v2889 = vld [vmem:[#allocation12 + $0x10] sm:$0xf]
        %v2890 = vld [vmem:[#allocation12 + $0x14] sm:$0xf]
        %v2891 = vld [vmem:[#allocation12 + $0x18] sm:$0xf]
        %v2892 = vld [vmem:[#allocation12 + $0x1c] sm:$0xf]
        %v2893 = vld [vmem:[#allocation12 + $0x20] sm:$0xf]
        %v2894 = vld [vmem:[#allocation12 + $0x24] sm:$0xf]
        %v2895 = vld [vmem:[#allocation12 + $0x28] sm:$0xf]
        %v2896 = vld [vmem:[#allocation12 + $0x2c] sm:$0xf]
        %v2897 = vld [vmem:[#allocation12 + $0x30] sm:$0xf]
        %v2898 = vld [vmem:[#allocation12 + $0x34] sm:$0xf]
        %v2899 = vld [vmem:[#allocation12 + $0x38] sm:$0xf]
        %v2900 = vld [vmem:[#allocation12 + $0x3c] sm:$0xf]
        %v2901 = vld [vmem:[#allocation12 + $0x40] sm:$0xf]
        %v2902 = vld [vmem:[#allocation12 + $0x44] sm:$0xf]
        %v2903 = vld [vmem:[#allocation12 + $0x48] sm:$0xf]
        %v2904 = vld [vmem:[#allocation12 + $0x4c] sm:$0xf]
        %v2905 = vld [vmem:[#allocation12 + $0x50] sm:$0xf]
        %v2906 = vld [vmem:[#allocation12 + $0x54] sm:$0xf]
        %v2907 = vld [vmem:[#allocation12 + $0x58] sm:$0xf]
        %v2908 = vld [vmem:[#allocation12 + $0x5c] sm:$0xf]
        %v2909 = vld [vmem:[#allocation12 + $0x60] sm:$0xf]
        %v2910 = vld [vmem:[#allocation12 + $0x64] sm:$0xf]
        %v2911 = vld [vmem:[#allocation12 + $0x68] sm:$0xf]
        %v2912 = vld [vmem:[#allocation12 + $0x6c] sm:$0xf]
        %v2913 = vld [vmem:[#allocation12 + $0x70] sm:$0xf]
        %v2914 = vld [vmem:[#allocation12 + $0x74] sm:$0xf]
        %v2915 = vld [vmem:[#allocation12 + $0x78] sm:$0xf]
        %v2916 = vld [vmem:[#allocation12 + $0x7c] sm:$0xf]
        %v2917 = vld [vmem:[#allocation12 + $0x80] sm:$0xf]
        %v2918 = vld [vmem:[#allocation12 + $0x84] sm:$0xf]
        %v2919 = vld [vmem:[#allocation12 + $0x88] sm:$0xf]
        %v2920 = vld [vmem:[#allocation12 + $0x8c] sm:$0xf]
        %v2921 = vld [vmem:[#allocation12 + $0x90] sm:$0xf]
        %v2922 = vld [vmem:[#allocation12 + $0x94] sm:$0xf]
        %v2923 = vld [vmem:[#allocation12 + $0x98] sm:$0xf]
        %v2924 = vld [vmem:[#allocation12 + $0x9c] sm:$0xf]
        %v2925 = vld [vmem:[#allocation12 + $0xa0] sm:$0xf]
        %v2926 = vld [vmem:[#allocation12 + $0xa4] sm:$0xf]
        %v2927 = vld [vmem:[#allocation12 + $0xa8] sm:$0xf]
        %v2928 = vld [vmem:[#allocation12 + $0xac] sm:$0xf]
        %v2929 = vld [vmem:[#allocation12 + $0xb0] sm:$0xf]
        %v2930 = vld [vmem:[#allocation12 + $0xb4] sm:$0xf]
        %v2931 = vld [vmem:[#allocation12 + $0xb8] sm:$0xf]
        %v2932 = vld [vmem:[#allocation12 + $0xbc] sm:$0xf]
        %v2933 = vld [vmem:[#allocation12 + $0xc0] sm:$0xf]
        %v2934 = vld [vmem:[#allocation12 + $0xc4] sm:$0xf]
        %v2935 = vld [vmem:[#allocation12 + $0xc8] sm:$0xf]
        %v2936 = vld [vmem:[#allocation12 + $0xcc] sm:$0xf]
        %v2937 = vld [vmem:[#allocation12 + $0xd0] sm:$0xf]
        %v2938 = vld [vmem:[#allocation12 + $0xd4] sm:$0xf]
        %v2939 = vld [vmem:[#allocation12 + $0xd8] sm:$0xf]
        %v2940 = vld [vmem:[#allocation12 + $0xdc] sm:$0xf]
        %v2941 = vld [vmem:[#allocation12 + $0xe0] sm:$0xf]
        %v2942 = vld [vmem:[#allocation12 + $0xe4] sm:$0xf]
        %v2943 = vld [vmem:[#allocation12 + $0xe8] sm:$0xf]
        %v2944 = vld [vmem:[#allocation12 + $0xec] sm:$0xf]
        %v2945 = vld [vmem:[#allocation12 + $0xf0] sm:$0xf]
        %v2946 = vld [vmem:[#allocation12 + $0xf4] sm:$0xf]
        %v2947 = vld [vmem:[#allocation12 + $0xf8] sm:$0xf]
        %v2948 = vld [vmem:[#allocation12 + $0xfc] sm:$0xf]
        %v2949 = vld [vmem:[#allocation12 + $0x100] sm:$0xf]
        %v2950 = vld [vmem:[#allocation12 + $0x104] sm:$0xf]
        %v2951 = vld [vmem:[#allocation12 + $0x108] sm:$0xf]
        %v2952 = vld [vmem:[#allocation12 + $0x10c] sm:$0xf]
        %v2953 = vld [vmem:[#allocation12 + $0x110] sm:$0xf]
        %v2954 = vld [vmem:[#allocation12 + $0x114] sm:$0xf]
        %v2955 = vld [vmem:[#allocation12 + $0x118] sm:$0xf]
        %v2956 = vld [vmem:[#allocation12 + $0x11c] sm:$0xf]
        %v2957 = vld [vmem:[#allocation12 + $0x120] sm:$0xf]
        %v2958 = vld [vmem:[#allocation12 + $0x124] sm:$0xf]
        %v2959 = vld [vmem:[#allocation12 + $0x128] sm:$0xf]
        %v2960 = vld [vmem:[#allocation12 + $0x12c] sm:$0xf]
        %v2961 = vld [vmem:[#allocation12 + $0x130] sm:$0xf]
        %v2962 = vld [vmem:[#allocation12 + $0x134] sm:$0xf]
        %v2963 = vld [vmem:[#allocation12 + $0x138] sm:$0xf]
        %v2964 = vld [vmem:[#allocation12 + $0x13c] sm:$0xf]
        %v2965 = vld [vmem:[#allocation12 + $0x140] sm:$0xf]
        %v2966 = vld [vmem:[#allocation12 + $0x144] sm:$0xf]
        %v2967 = vld [vmem:[#allocation12 + $0x148] sm:$0xf]
        %v2968 = vld [vmem:[#allocation12 + $0x14c] sm:$0xf]
        %v2969 = vld [vmem:[#allocation12 + $0x150] sm:$0xf]
        %v2970 = vld [vmem:[#allocation12 + $0x154] sm:$0xf]
        %v2971 = vld [vmem:[#allocation12 + $0x158] sm:$0xf]
        %v2972 = vld [vmem:[#allocation12 + $0x15c] sm:$0xf]
        %v2973 = vld [vmem:[#allocation12 + $0x160] sm:$0xf]
        %v2974 = vld [vmem:[#allocation12 + $0x164] sm:$0xf]
        %v2975 = vld [vmem:[#allocation12 + $0x168] sm:$0xf]
        %v2976 = vld [vmem:[#allocation12 + $0x16c] sm:$0xf]
        %v2977 = vld [vmem:[#allocation12 + $0x170] sm:$0xf]
        %v2978 = vld [vmem:[#allocation12 + $0x174] sm:$0xf]
        %v2979 = vld [vmem:[#allocation12 + $0x178] sm:$0xf]
        %v2980 = vld [vmem:[#allocation12 + $0x17c] sm:$0xf]
        %v2981 = vld [vmem:[#allocation12 + $0x180] sm:$0xf]
        %v2982 = vld [vmem:[#allocation12 + $0x184] sm:$0xf]
        %v2983 = vld [vmem:[#allocation12 + $0x188] sm:$0xf]
        %v2984 = vld [vmem:[#allocation12 + $0x18c] sm:$0xf]
        %v2985 = vld [vmem:[#allocation12 + $0x190] sm:$0xf]
        %v2986 = vld [vmem:[#allocation12 + $0x194] sm:$0xf]
        %v2987 = vld [vmem:[#allocation12 + $0x198] sm:$0xf]
        %v2988 = vld [vmem:[#allocation12 + $0x19c] sm:$0xf]
        %v2989 = vld [vmem:[#allocation12 + $0x1a0] sm:$0xf]
        %v2990 = vld [vmem:[#allocation12 + $0x1a4] sm:$0xf]
        %v2991 = vld [vmem:[#allocation12 + $0x1a8] sm:$0xf]
        %v2992 = vld [vmem:[#allocation12 + $0x1ac] sm:$0xf]
        %v2993 = vld [vmem:[#allocation12 + $0x1b0] sm:$0xf]
        %v2994 = vld [vmem:[#allocation12 + $0x1b4] sm:$0xf]
        %v2995 = vld [vmem:[#allocation12 + $0x1b8] sm:$0xf]
        %v2996 = vld [vmem:[#allocation12 + $0x1bc] sm:$0xf]
        %v2997 = vld [vmem:[#allocation12 + $0x1c0] sm:$0xf]
        %v2998 = vld [vmem:[#allocation12 + $0x1c4] sm:$0xf]
        %v2999 = vld [vmem:[#allocation12 + $0x1c8] sm:$0xf]
        %v3000 = vld [vmem:[#allocation12 + $0x1cc] sm:$0xf]
        %v3001 = vld [vmem:[#allocation12 + $0x1d0] sm:$0xf]
        %v3002 = vld [vmem:[#allocation12 + $0x1d4] sm:$0xf]
        %v3003 = vld [vmem:[#allocation12 + $0x1d8] sm:$0xf]
        %v3004 = vld [vmem:[#allocation12 + $0x1dc] sm:$0xf]
        %v3005 = vld [vmem:[#allocation12 + $0x1e0] sm:$0xf]
        %v3006 = vld [vmem:[#allocation12 + $0x1e4] sm:$0xf]
        %v3007 = vld [vmem:[#allocation12 + $0x1e8] sm:$0xf]
        %v3008 = vld [vmem:[#allocation12 + $0x1ec] sm:$0xf]
        %v3009 = vld [vmem:[#allocation12 + $0x1f0] sm:$0xf]
        %v3010 = vld [vmem:[#allocation12 + $0x1f4] sm:$0xf]
        %v3011 = vld [vmem:[#allocation12 + $0x1f8] sm:$0xf]
        %v3012 = vld [vmem:[#allocation12 + $0x1fc] sm:$0xf]
        %v3013 = vld [vmem:[%s5] sm:$0x1]
        %v3015 = vlaneseq
        %v3016 = vshrl.u32 %v3015, 7
        %v3017 = vsub.s32 0, %v3016
        %v3018 = vrot.slane %v3013, %v3017
        %v3148 = vunpack.c.l.b16 %v2885
        %v3149 = vunpack.c.l.b16 %v2886
        %v3150 = vunpack.c.l.b16 %v2887
        %v3151 = vunpack.c.l.b16 %v2888
        %v3152 = vunpack.c.l.b16 %v2889
        %v3153 = vunpack.c.l.b16 %v2890
        %v3154 = vunpack.c.l.b16 %v2891
        %v3155 = vunpack.c.l.b16 %v2892
        %v3156 = vunpack.c.l.b16 %v2893
        %v3157 = vunpack.c.l.b16 %v2894
        %v3158 = vunpack.c.l.b16 %v2895
        %v3159 = vunpack.c.l.b16 %v2896
        %v3160 = vunpack.c.l.b16 %v2897
        %v3161 = vunpack.c.l.b16 %v2898
        %v3162 = vunpack.c.l.b16 %v2899
        %v3163 = vunpack.c.l.b16 %v2900
        %v3164 = vunpack.c.l.b16 %v2901
        %v3165 = vunpack.c.l.b16 %v2902
        %v3166 = vunpack.c.l.b16 %v2903
        %v3167 = vunpack.c.l.b16 %v2904
        %v3168 = vunpack.c.l.b16 %v2905
        %v3169 = vunpack.c.l.b16 %v2906
        %v3170 = vunpack.c.l.b16 %v2907
        %v3171 = vunpack.c.l.b16 %v2908
        %v3172 = vunpack.c.l.b16 %v2909
        %v3173 = vunpack.c.l.b16 %v2910
        %v3174 = vunpack.c.l.b16 %v2911
        %v3175 = vunpack.c.l.b16 %v2912
        %v3176 = vunpack.c.l.b16 %v2913
        %v3177 = vunpack.c.l.b16 %v2914
        %v3178 = vunpack.c.l.b16 %v2915
        %v3179 = vunpack.c.l.b16 %v2916
        %v3180 = vunpack.c.l.b16 %v2917
        %v3181 = vunpack.c.l.b16 %v2918
        %v3182 = vunpack.c.l.b16 %v2919
        %v3183 = vunpack.c.l.b16 %v2920
        %v3184 = vunpack.c.l.b16 %v2921
        %v3185 = vunpack.c.l.b16 %v2922
        %v3186 = vunpack.c.l.b16 %v2923
        %v3187 = vunpack.c.l.b16 %v2924
        %v3188 = vunpack.c.l.b16 %v2925
        %v3189 = vunpack.c.l.b16 %v2926
        %v3190 = vunpack.c.l.b16 %v2927
        %v3191 = vunpack.c.l.b16 %v2928
        %v3192 = vunpack.c.l.b16 %v2929
        %v3193 = vunpack.c.l.b16 %v2930
        %v3194 = vunpack.c.l.b16 %v2931
        %v3195 = vunpack.c.l.b16 %v2932
        %v3196 = vunpack.c.l.b16 %v2933
        %v3197 = vunpack.c.l.b16 %v2934
        %v3198 = vunpack.c.l.b16 %v2935
        %v3199 = vunpack.c.l.b16 %v2936
        %v3200 = vunpack.c.l.b16 %v2937
        %v3201 = vunpack.c.l.b16 %v2938
        %v3202 = vunpack.c.l.b16 %v2939
        %v3203 = vunpack.c.l.b16 %v2940
        %v3204 = vunpack.c.l.b16 %v2941
        %v3205 = vunpack.c.l.b16 %v2942
        %v3206 = vunpack.c.l.b16 %v2943
        %v3207 = vunpack.c.l.b16 %v2944
        %v3208 = vunpack.c.l.b16 %v2945
        %v3209 = vunpack.c.l.b16 %v2946
        %v3210 = vunpack.c.l.b16 %v2947
        %v3211 = vunpack.c.l.b16 %v2948
        %v3212 = vunpack.c.l.b16 %v2949
        %v3213 = vunpack.c.l.b16 %v2950
        %v3214 = vunpack.c.l.b16 %v2951
        %v3215 = vunpack.c.l.b16 %v2952
        %v3216 = vunpack.c.l.b16 %v2953
        %v3217 = vunpack.c.l.b16 %v2954
        %v3218 = vunpack.c.l.b16 %v2955
        %v3219 = vunpack.c.l.b16 %v2956
        %v3220 = vunpack.c.l.b16 %v2957
        %v3221 = vunpack.c.l.b16 %v2958
        %v3222 = vunpack.c.l.b16 %v2959
        %v3223 = vunpack.c.l.b16 %v2960
        %v3224 = vunpack.c.l.b16 %v2961
        %v3225 = vunpack.c.l.b16 %v2962
        %v3226 = vunpack.c.l.b16 %v2963
        %v3227 = vunpack.c.l.b16 %v2964
        %v3228 = vunpack.c.l.b16 %v2965
        %v3229 = vunpack.c.l.b16 %v2966
        %v3230 = vunpack.c.l.b16 %v2967
        %v3231 = vunpack.c.l.b16 %v2968
        %v3232 = vunpack.c.l.b16 %v2969
        %v3233 = vunpack.c.l.b16 %v2970
        %v3234 = vunpack.c.l.b16 %v2971
        %v3235 = vunpack.c.l.b16 %v2972
        %v3236 = vunpack.c.l.b16 %v2973
        %v3237 = vunpack.c.l.b16 %v2974
        %v3238 = vunpack.c.l.b16 %v2975
        %v3239 = vunpack.c.l.b16 %v2976
        %v3240 = vunpack.c.l.b16 %v2977
        %v3241 = vunpack.c.l.b16 %v2978
        %v3242 = vunpack.c.l.b16 %v2979
        %v3243 = vunpack.c.l.b16 %v2980
        %v3244 = vunpack.c.l.b16 %v2981
        %v3245 = vunpack.c.l.b16 %v2982
        %v3246 = vunpack.c.l.b16 %v2983
        %v3247 = vunpack.c.l.b16 %v2984
        %v3248 = vunpack.c.l.b16 %v2985
        %v3249 = vunpack.c.l.b16 %v2986
        %v3250 = vunpack.c.l.b16 %v2987
        %v3251 = vunpack.c.l.b16 %v2988
        %v3252 = vunpack.c.l.b16 %v2989
        %v3253 = vunpack.c.l.b16 %v2990
        %v3254 = vunpack.c.l.b16 %v2991
        %v3255 = vunpack.c.l.b16 %v2992
        %v3256 = vunpack.c.l.b16 %v2993
        %v3257 = vunpack.c.l.b16 %v2994
        %v3258 = vunpack.c.l.b16 %v2995
        %v3259 = vunpack.c.l.b16 %v2996
        %v3260 = vunpack.c.l.b16 %v2997
        %v3261 = vunpack.c.l.b16 %v2998
        %v3262 = vunpack.c.l.b16 %v2999
        %v3263 = vunpack.c.l.b16 %v3000
        %v3264 = vunpack.c.l.b16 %v3001
        %v3265 = vunpack.c.l.b16 %v3002
        %v3266 = vunpack.c.l.b16 %v3003
        %v3267 = vunpack.c.l.b16 %v3004
        %v3268 = vunpack.c.l.b16 %v3005
        %v3269 = vunpack.c.l.b16 %v3006
        %v3270 = vunpack.c.l.b16 %v3007
        %v3271 = vunpack.c.l.b16 %v3008
        %v3272 = vunpack.c.l.b16 %v3009
        %v3273 = vunpack.c.l.b16 %v3010
        %v3274 = vunpack.c.l.b16 %v3011
        %v3275 = vunpack.c.l.b16 %v3012
        %v3276 = vpack.c.b16 %v3149, %v3148
        %v3277 = vpack.c.b16 %v3151, %v3150
        %v3278 = vpack.c.b16 %v3153, %v3152
        %v3279 = vpack.c.b16 %v3155, %v3154
        %v3280 = vpack.c.b16 %v3157, %v3156
        %v3281 = vpack.c.b16 %v3159, %v3158
        %v3282 = vpack.c.b16 %v3161, %v3160
        %v3283 = vpack.c.b16 %v3163, %v3162
        %v3284 = vpack.c.b16 %v3165, %v3164
        %v3285 = vpack.c.b16 %v3167, %v3166
        %v3286 = vpack.c.b16 %v3169, %v3168
        %v3287 = vpack.c.b16 %v3171, %v3170
        %v3288 = vpack.c.b16 %v3173, %v3172
        %v3289 = vpack.c.b16 %v3175, %v3174
        %v3290 = vpack.c.b16 %v3177, %v3176
        %v3291 = vpack.c.b16 %v3179, %v3178
        %v3292 = vpack.c.b16 %v3181, %v3180
        %v3293 = vpack.c.b16 %v3183, %v3182
        %v3294 = vpack.c.b16 %v3185, %v3184
        %v3295 = vpack.c.b16 %v3187, %v3186
        %v3296 = vpack.c.b16 %v3189, %v3188
        %v3297 = vpack.c.b16 %v3191, %v3190
        %v3298 = vpack.c.b16 %v3193, %v3192
        %v3299 = vpack.c.b16 %v3195, %v3194
        %v3300 = vpack.c.b16 %v3197, %v3196
        %v3301 = vpack.c.b16 %v3199, %v3198
        %v3302 = vpack.c.b16 %v3201, %v3200
        %v3303 = vpack.c.b16 %v3203, %v3202
        %v3304 = vpack.c.b16 %v3205, %v3204
        %v3305 = vpack.c.b16 %v3207, %v3206
        %v3306 = vpack.c.b16 %v3209, %v3208
        %v3307 = vpack.c.b16 %v3211, %v3210
        %v3308 = vpack.c.b16 %v3213, %v3212
        %v3309 = vpack.c.b16 %v3215, %v3214
        %v3310 = vpack.c.b16 %v3217, %v3216
        %v3311 = vpack.c.b16 %v3219, %v3218
        %v3312 = vpack.c.b16 %v3221, %v3220
        %v3313 = vpack.c.b16 %v3223, %v3222
        %v3314 = vpack.c.b16 %v3225, %v3224
        %v3315 = vpack.c.b16 %v3227, %v3226
        %v3316 = vpack.c.b16 %v3229, %v3228
        %v3317 = vpack.c.b16 %v3231, %v3230
        %v3318 = vpack.c.b16 %v3233, %v3232
        %v3319 = vpack.c.b16 %v3235, %v3234
        %v3320 = vpack.c.b16 %v3237, %v3236
        %v3321 = vpack.c.b16 %v3239, %v3238
        %v3322 = vpack.c.b16 %v3241, %v3240
        %v3323 = vpack.c.b16 %v3243, %v3242
        %v3324 = vpack.c.b16 %v3245, %v3244
        %v3325 = vpack.c.b16 %v3247, %v3246
        %v3326 = vpack.c.b16 %v3249, %v3248
        %v3327 = vpack.c.b16 %v3251, %v3250
        %v3328 = vpack.c.b16 %v3253, %v3252
        %v3329 = vpack.c.b16 %v3255, %v3254
        %v3330 = vpack.c.b16 %v3257, %v3256
        %v3331 = vpack.c.b16 %v3259, %v3258
        %v3332 = vpack.c.b16 %v3261, %v3260
        %v3333 = vpack.c.b16 %v3263, %v3262
        %v3334 = vpack.c.b16 %v3265, %v3264
        %v3335 = vpack.c.b16 %v3267, %v3266
        %v3336 = vpack.c.b16 %v3269, %v3268
        %v3337 = vpack.c.b16 %v3271, %v3270
        %v3338 = vpack.c.b16 %v3273, %v3272
        %v3339 = vpack.c.b16 %v3275, %v3274
        %3404 = vmatprep.subr.bf16.mxu0 0
        %3405 = vmatpush1.bf16.msra.mxu0 %v3283
        %3406 = vmatprep.subr.bf16.mxu0 0
        %3407 = vmatpush1.bf16.msra.mxu0 %v3282
        %3408 = vmatprep.subr.bf16.mxu0 0
        %3409 = vmatpush1.bf16.msra.mxu0 %v3281
        %3410 = vmatprep.subr.bf16.mxu0 0
        %3411 = vmatpush1.bf16.msra.mxu0 %v3280
        %3412 = vmatprep.subr.bf16.mxu0 0
        %3413 = vmatpush1.bf16.msra.mxu0 %v3279
        %3414 = vmatprep.subr.bf16.mxu0 0
        %3415 = vmatpush1.bf16.msra.mxu0 %v3278
        %3416 = vmatprep.subr.bf16.mxu0 0
        %3417 = vmatpush1.bf16.msra.mxu0 %v3277
        %3418 = vmatprep.subr.bf16.mxu0 0
        %3419 = vmatpush1.bf16.msra.mxu0 %v3276
        %3420 = vmatprep.subr.bf16.mxu0 0
        %3421 = vmatpush2.bf16.msra.mxu0 %v3291
        %3422 = vmatprep.subr.bf16.mxu0 0
        %3423 = vmatpush2.bf16.msra.mxu0 %v3290
        %3424 = vmatprep.subr.bf16.mxu0 0
        %3425 = vmatpush2.bf16.msra.mxu0 %v3289
        %3426 = vmatprep.subr.bf16.mxu0 0
        %3427 = vmatpush2.bf16.msra.mxu0 %v3288
        %3428 = vmatprep.subr.bf16.mxu0 0
        %3429 = vmatpush2.bf16.msra.mxu0 %v3287
        %3430 = vmatprep.subr.bf16.mxu0 0
        %3431 = vmatpush2.bf16.msra.mxu0 %v3286
        %3432 = vmatprep.subr.bf16.mxu0 0
        %3433 = vmatpush2.bf16.msra.mxu0 %v3285
        %3434 = vmatprep.subr.bf16.mxu0 0
        %3435 = vmatpush2.bf16.msra.mxu0 %v3284
        %3436 = vmatprep.mubr.bf16.mxu0 %v2878
        %3437 = vmatmul.mubr.bf16.gmra.mxu0 %v2877
        %v3438 = vpop.f32.mrf.mxu0
        %v3439 = vadd.f32 %v3018, %v3438
        %v3440 = vpop.f32.mrf.mxu0
        %v3441 = vpop.f32.mrf.mxu0
        %v3442 = vpop.f32.mrf.mxu0
        %3443 = vdwg.mxu0
        %3444 = vmatprep.subr.bf16.mxu0 0
        %3445 = vmatpush1.bf16.msra.mxu0 %v3299
        %3446 = vmatprep.subr.bf16.mxu0 0
        %3447 = vmatpush1.bf16.msra.mxu0 %v3298
        %3448 = vmatprep.subr.bf16.mxu0 0
        %3449 = vmatpush1.bf16.msra.mxu0 %v3297
        %3450 = vmatprep.subr.bf16.mxu0 0
        %3451 = vmatpush1.bf16.msra.mxu0 %v3296
        %3452 = vmatprep.subr.bf16.mxu0 0
        %3453 = vmatpush1.bf16.msra.mxu0 %v3295
        %3454 = vmatprep.subr.bf16.mxu0 0
        %3455 = vmatpush1.bf16.msra.mxu0 %v3294
        %3456 = vmatprep.subr.bf16.mxu0 0
        %3457 = vmatpush1.bf16.msra.mxu0 %v3293
        %3458 = vmatprep.subr.bf16.mxu0 0
        %3459 = vmatpush1.bf16.msra.mxu0 %v3292
        %3460 = vmatprep.subr.bf16.mxu0 0
        %3461 = vmatpush2.bf16.msra.mxu0 %v3307
        %3462 = vmatprep.subr.bf16.mxu0 0
        %3463 = vmatpush2.bf16.msra.mxu0 %v3306
        %3464 = vmatprep.subr.bf16.mxu0 0
        %3465 = vmatpush2.bf16.msra.mxu0 %v3305
        %3466 = vmatprep.subr.bf16.mxu0 0
        %3467 = vmatpush2.bf16.msra.mxu0 %v3304
        %3468 = vmatprep.subr.bf16.mxu0 0
        %3469 = vmatpush2.bf16.msra.mxu0 %v3303
        %3470 = vmatprep.subr.bf16.mxu0 0
        %3471 = vmatpush2.bf16.msra.mxu0 %v3302
        %3472 = vmatprep.subr.bf16.mxu0 0
        %3473 = vmatpush2.bf16.msra.mxu0 %v3301
        %3474 = vmatprep.subr.bf16.mxu0 0
        %3475 = vmatpush2.bf16.msra.mxu0 %v3300
        %3476 = vmatprep.mubr.bf16.mxu0 %v2880
        %3477 = vmatmul.mubr.bf16.gmra.mxu0 %v2879
        %v3478 = vpop.f32.mrf.mxu0
        %v3479 = vadd.f32 %v3439, %v3478
        %v3480 = vpop.f32.mrf.mxu0
        %v3481 = vpop.f32.mrf.mxu0
        %v3482 = vpop.f32.mrf.mxu0
        %3483 = vdwg.mxu0
        %3484 = vmatprep.subr.bf16.mxu0 0
        %3485 = vmatpush1.bf16.msra.mxu0 %v3315
        %3486 = vmatprep.subr.bf16.mxu0 0
        %3487 = vmatpush1.bf16.msra.mxu0 %v3314
        %3488 = vmatprep.subr.bf16.mxu0 0
        %3489 = vmatpush1.bf16.msra.mxu0 %v3313
        %3490 = vmatprep.subr.bf16.mxu0 0
        %3491 = vmatpush1.bf16.msra.mxu0 %v3312
        %3492 = vmatprep.subr.bf16.mxu0 0
        %3493 = vmatpush1.bf16.msra.mxu0 %v3311
        %3494 = vmatprep.subr.bf16.mxu0 0
        %3495 = vmatpush1.bf16.msra.mxu0 %v3310
        %3496 = vmatprep.subr.bf16.mxu0 0
        %3497 = vmatpush1.bf16.msra.mxu0 %v3309
        %3498 = vmatprep.subr.bf16.mxu0 0
        %3499 = vmatpush1.bf16.msra.mxu0 %v3308
        %3500 = vmatprep.subr.bf16.mxu0 0
        %3501 = vmatpush2.bf16.msra.mxu0 %v3323
        %3502 = vmatprep.subr.bf16.mxu0 0
        %3503 = vmatpush2.bf16.msra.mxu0 %v3322
        %3504 = vmatprep.subr.bf16.mxu0 0
        %3505 = vmatpush2.bf16.msra.mxu0 %v3321
        %3506 = vmatprep.subr.bf16.mxu0 0
        %3507 = vmatpush2.bf16.msra.mxu0 %v3320
        %3508 = vmatprep.subr.bf16.mxu0 0
        %3509 = vmatpush2.bf16.msra.mxu0 %v3319
        %3510 = vmatprep.subr.bf16.mxu0 0
        %3511 = vmatpush2.bf16.msra.mxu0 %v3318
        %3512 = vmatprep.subr.bf16.mxu0 0
        %3513 = vmatpush2.bf16.msra.mxu0 %v3317
        %3514 = vmatprep.subr.bf16.mxu0 0
        %3515 = vmatpush2.bf16.msra.mxu0 %v3316
        %3516 = vmatprep.mubr.bf16.mxu0 %v2882
        %3517 = vmatmul.mubr.bf16.gmra.mxu0 %v2881
        %v3518 = vpop.f32.mrf.mxu0
        %v3519 = vadd.f32 %v3479, %v3518
        %v3520 = vpop.f32.mrf.mxu0
        %v3521 = vpop.f32.mrf.mxu0
        %v3522 = vpop.f32.mrf.mxu0
        %3523 = vdwg.mxu0
        %3524 = vmatprep.subr.bf16.mxu0 0
        %3525 = vmatpush1.bf16.msra.mxu0 %v3331
        %3526 = vmatprep.subr.bf16.mxu0 0
        %3527 = vmatpush1.bf16.msra.mxu0 %v3330
        %3528 = vmatprep.subr.bf16.mxu0 0
        %3529 = vmatpush1.bf16.msra.mxu0 %v3329
        %3530 = vmatprep.subr.bf16.mxu0 0
        %3531 = vmatpush1.bf16.msra.mxu0 %v3328
        %3532 = vmatprep.subr.bf16.mxu0 0
        %3533 = vmatpush1.bf16.msra.mxu0 %v3327
        %3534 = vmatprep.subr.bf16.mxu0 0
        %3535 = vmatpush1.bf16.msra.mxu0 %v3326
        %3536 = vmatprep.subr.bf16.mxu0 0
        %3537 = vmatpush1.bf16.msra.mxu0 %v3325
        %3538 = vmatprep.subr.bf16.mxu0 0
        %3539 = vmatpush1.bf16.msra.mxu0 %v3324
        %3540 = vmatprep.subr.bf16.mxu0 0
        %3541 = vmatpush2.bf16.msra.mxu0 %v3339
        %3542 = vmatprep.subr.bf16.mxu0 0
        %3543 = vmatpush2.bf16.msra.mxu0 %v3338
        %3544 = vmatprep.subr.bf16.mxu0 0
        %3545 = vmatpush2.bf16.msra.mxu0 %v3337
        %3546 = vmatprep.subr.bf16.mxu0 0
        %3547 = vmatpush2.bf16.msra.mxu0 %v3336
        %3548 = vmatprep.subr.bf16.mxu0 0
        %3549 = vmatpush2.bf16.msra.mxu0 %v3335
        %3550 = vmatprep.subr.bf16.mxu0 0
        %3551 = vmatpush2.bf16.msra.mxu0 %v3334
        %3552 = vmatprep.subr.bf16.mxu0 0
        %3553 = vmatpush2.bf16.msra.mxu0 %v3333
        %3554 = vmatprep.subr.bf16.mxu0 0
        %3555 = vmatpush2.bf16.msra.mxu0 %v3332
        %3556 = vmatprep.mubr.bf16.mxu0 %v2884
        %3557 = vmatmul.mubr.bf16.gmra.mxu0 %v2883
        %v3558 = vpop.f32.mrf.mxu0
        %v3559 = vadd.f32 %v3519, %v3558
        %v3560 = vpop.f32.mrf.mxu0
        %v3561 = vpop.f32.mrf.mxu0
        %v3562 = vpop.f32.mrf.mxu0
        %3563 = vdwg.mxu0
        %3564 = vst [vmem:[%s338] sm:$0xff] %v3559
        %s3565 = sand.u32 %s178, 1
        %s3566 = scalar_lea.sflag [#allocation6], %s3565
        %s3567 = sand.u32 %s178, 1
        %s3568 = smul.addr %s3567, 8
        %s3569 = scalar_lea.vmem [#allocation13], %s3568
        // Predicated region
        $region69: #{tpu_custom_call.1} parent=43 // pred_check
          %p3570 = pneg %p188
        $region70: #{tpu_custom_call.1} parent=43 // pred_check_branch
          %3572 = sbr.rel (%p3570) target = $region72
        $region71: #{tpu_custom_call.1} parent=43 // pred_region
          %s3574 = ssub.s32 128, 128
          %3575 = vsyncadd %s3566, %s3574
          %s3576 = sadd.s32 %s30, %s29
          %s3577 = smul.addr %s3576, 128
          %s3578 = scalar_lea.hbm %s6, %s3577
          %s3580 = sshll.u32 %s3569, 4
          %s3581 = int_to_ptr.vmem [resolvable:$true] %s3580
          %3583 = dma.vmem_to_hbm [thread:$0]  %s3581, 128, %s3578, %s3566
        $region72: #{tpu_custom_call.1} parent=43 // pred_fallthru
          _
      $region44: #{tpu_custom_call.1} parent=5 // pred_fallthru
        _
      %p3584 = scmp.le.s32.totalorder 2, %s20
      // Predicated region
      $region73: #{tpu_custom_call.1} parent=5 // pred_check
        %p3585 = pneg %p3584
      $region74: #{tpu_custom_call.1} parent=5 // pred_check_branch
        %3587 = sbr.rel (%p3585) target = $region76
      $region75: #{tpu_custom_call.1} parent=5 // pred_region
        %s3588 = ssub.s32 %s20, 2
        // Predicated region
        $region77: #{tpu_custom_call.1} parent=75 // pred_check
          %p3589 = pneg %p194
        $region78: #{tpu_custom_call.1} parent=75 // pred_check_branch
          %3591 = sbr.rel (%p3589) target = $region80
        $region79: #{tpu_custom_call.1} parent=75 // pred_region
          %s3592 = sand.u32 %s179, 1
          %s3593 = scalar_lea.sflag [#allocation6], %s3592
          %s3594 = sand.u32 %s179, 1
          %s3595 = smul.addr %s3594, 8
          %s3596 = scalar_lea.vmem [#allocation13], %s3595
          %3597 = dma.done %s3593, 128
        $region80: #{tpu_custom_call.1} parent=75 // pred_fallthru
          _
      $region76: #{tpu_custom_call.1} parent=5 // pred_fallthru
        _
    $region6: #{tpu_custom_call.1} parent=1 // loop_footer
      %s24 = sadd.s32 1, %s20
    $region7: #{tpu_custom_call.1} parent=1 // loop_footer_branch
      %19 = sbr.rel target = $region3
    $region8: #{tpu_custom_call.1} parent=1 // loop_exit
      _
    %3598 = vsyncpa [#allocation5], 1
    %s3599 = scalar_lea.sflag [#allocation5], 1
    %3600 = vsyncpa %s3599, 1
    %3601 = vsyncpa [#allocation8], 1
    %3602 = vsyncpa [#allocation11], 1
    %3603 = vsyncpa [#allocation6], 1
    %s3604 = scalar_lea.sflag [#allocation6], 1
    %3605 = vsyncpa %s3604, 1

</llo_original>
